<compile_context>
chip_gen: v6e
topology: v6e:2x2x1
jax: 0.10.0
libtpu: 0.0.40
codegen_flags: <defaults>
</compile_context>

<pallas_src>
import jax
import jax.numpy as jnp
from jax.experimental import pallas as pl
from jax.experimental.pallas import tpu as pltpu

LATENT_DIM = 20
HIDDEN_DIMS = (20, 64, 128, 256, 512)      # Linear outputs that get BN + ReLU
OUTPUT_DIM = 28 * 28                       # 784, final Linear (no BN / ReLU)
ALL_DIMS = HIDDEN_DIMS + (OUTPUT_DIM,)
GB_PAD = max(HIDDEN_DIMS)                  # 512: lane padding for packed gamma/beta
BN_EPS = 1e-5


def decoder_kernel(x_ref, w0_ref, w1_ref, w2_ref, w3_ref, w4_ref, w5_ref,
                   b_out_ref, gb_ref, out_ref):
    """Whole forward pass for one resident batch block.

    Inputs:
      x_ref     : (B, 20) f32 activations
      w*_ref    : 6 bf16 weight matrices, (d_in, d_out)
      b_out_ref : (1, 784) f32 bias of the final Linear
      gb_ref    : (10, 512) f32 packed BN affine params; row 2*l = gamma_l, 2*l+1 = beta_l
    """
    w_refs = (w0_ref, w1_ref, w2_ref, w3_ref, w4_ref, w5_ref)
    gb = gb_ref[...]                         # (10, 512) f32, tiny
    h = x_ref[...]                           # (B, 20) f32

    for li, d_out in enumerate(HIDDEN_DIMS):
        w = w_refs[li][...]                  # (d_in, d_out) bf16
        # Linear on the MXU (bf16 operands, f32 accumulation).
        # Hidden bias omitted: it cancels exactly in the BN mean subtraction below.
        h = jnp.dot(h.astype(jnp.bfloat16), w, preferred_element_type=jnp.float32)

        # BatchNorm1d (training mode: batch mean, biased variance) fused with ReLU.
        g = gb[2 * li:2 * li + 1, :d_out]        # (1, d_out) gamma
        beta = gb[2 * li + 1:2 * li + 2, :d_out]  # (1, d_out) beta
        mean = jnp.mean(h, axis=0, keepdims=True)
        c = h - mean
        var = jnp.mean(c * c, axis=0, keepdims=True)
        scale = g * jax.lax.rsqrt(var + BN_EPS)   # (1, d_out); rsqrt -> EUP
        h = jnp.maximum(c * scale + beta, 0.0)    # single FMA + max pass

    # Final Linear (keeps its bias; no BN / ReLU).
    w_out = w_refs[-1][...]                  # (512, 784) bf16
    out_ref[...] = (
        jnp.dot(h.astype(jnp.bfloat16), w_out, preferred_element_type=jnp.float32)
        + b_out_ref[...]
    )


@jax.jit
def decoder_forward(x, params):
    """x: (B, LATENT_DIM) f32.

    params: dict with
      'w'     : list of 6 bf16 weight matrices (d_in, d_out)
      'b_out' : (1, OUTPUT_DIM) f32 final-layer bias
      'gb'    : (2*len(HIDDEN_DIMS), GB_PAD) f32 packed gamma/beta
    """
    b = x.shape[0]
    args = [x] + list(params['w']) + [params['b_out'], params['gb']]

    def full_block_spec(shape):
        nd = len(shape)
        return pl.BlockSpec(shape, lambda i, _nd=nd: (0,) * _nd)

    in_specs = [full_block_spec(a.shape) for a in args]
    out_spec = pl.BlockSpec((b, OUTPUT_DIM), lambda i: (0, 0))

    flops = 2 * b * sum(di * do for di, do in zip((LATENT_DIM,) + HIDDEN_DIMS, ALL_DIMS))
    bytes_accessed = (sum(int(a.size) * a.dtype.itemsize for a in args)
                      + b * OUTPUT_DIM * 4)

    return pl.pallas_call(
        decoder_kernel,
        out_shape=jax.ShapeDtypeStruct((b, OUTPUT_DIM), jnp.float32),
        grid=(1,),
        in_specs=in_specs,
        out_specs=out_spec,
        compiler_params=pltpu.CompilerParams(
            dimension_semantics=("arbitrary",),
        ),
        cost_estimate=pl.CostEstimate(
            flops=flops,
            transcendentals=sum(HIDDEN_DIMS),     # one rsqrt per BN feature
            bytes_accessed=bytes_accessed,
        ),
    )(*args)


def make_params(key):
    """Deterministic synthetic parameters matching the PyTorch module shapes.

    Returns (params, ref_params):
      params     -- what the kernel consumes (bf16 weights, packed gamma/beta, no
                    hidden biases: they cancel under training-mode BatchNorm).
      ref_params -- unpacked view (including the redundant hidden biases) used by
                    the pure-JAX reference.
    """
    n_hidden = len(HIDDEN_DIMS)
    d_ins = (LATENT_DIM,) + HIDDEN_DIMS
    ws, bs, gammas, betas = [], [], [], []
    for d_in, d_out in zip(d_ins, ALL_DIMS):
        key, kw, kb = jax.random.split(key, 3)
        bound = 1.0 / float(d_in) ** 0.5
        w = jax.random.uniform(kw, (d_in, d_out), jnp.float32, -bound, bound)
        b = jax.random.uniform(kb, (1, d_out), jnp.float32, -bound, bound)
        ws.append(w.astype(jnp.bfloat16))
        bs.append(b)
        if d_out != OUTPUT_DIM:
            key, kg, kbe = jax.random.split(key, 3)
            # PyTorch init is gamma=1, beta=0; randomize to actually exercise the
            # affine path in the correctness check (same values fed to the reference).
            gammas.append(jax.random.uniform(kg, (1, d_out), jnp.float32, 0.5, 1.5))
            betas.append(jax.random.normal(kbe, (1, d_out), jnp.float32) * 0.1)

    gb = jnp.zeros((2 * n_hidden, GB_PAD), jnp.float32)
    for li, d_out in enumerate(HIDDEN_DIMS):
        gb = gb.at[2 * li, :d_out].set(gammas[li][0])
        gb = gb.at[2 * li + 1, :d_out].set(betas[li][0])

    params = {'w': ws, 'b_out': bs[-1], 'gb': gb}
    ref_params = {'w': ws, 'b': bs, 'gamma': gammas, 'beta': betas}
    return params, ref_params


def decoder_reference(x, ref_params):
    """Pure-JAX reference with the exact PyTorch forward semantics (Linear biases
    everywhere, unfused training-mode BatchNorm1d), at the same mixed precision as
    the kernel (bf16 matmul operands, f32 accumulation / BN arithmetic)."""
    h = x
    for li in range(len(HIDDEN_DIMS)):
        w, b = ref_params['w'][li], ref_params['b'][li]
        h = jnp.dot(h.astype(jnp.bfloat16), w, preferred_element_type=jnp.float32) + b
        mean = jnp.mean(h, axis=0, keepdims=True)
        var = jnp.mean((h - mean) ** 2, axis=0, keepdims=True)
        h = (h - mean) / jnp.sqrt(var + BN_EPS)
        h = h * ref_params['gamma'][li] + ref_params['beta'][li]
        h = jnp.maximum(h, 0.0)
    return (jnp.dot(h.astype(jnp.bfloat16), ref_params['w'][-1],
                    preferred_element_type=jnp.float32) + ref_params['b'][-1])


if __name__ == "__main__":
    key = jax.random.PRNGKey(0)
    key, kx, kp = jax.random.split(key, 3)

    # Batch 128 fills the MXU M dimension while the problem stays tiny overall.
    B = 128
    x = jax.random.normal(kx, (B, LATENT_DIM), jnp.float32)
    params, ref_params = make_params(kp)

    out = jax.block_until_ready(decoder_forward(x, params))
    assert out.shape == (B, OUTPUT_DIM), out.shape

    ref = decoder_reference(x, ref_params)
    # bf16 weights/activations => bf16-appropriate tolerance.  The dropped hidden
    # biases and the fused BN are mathematically exact rewrites (reference keeps the
    # biases and the unfused form, so this also validates the cancellation).
    max_err = float(jnp.max(jnp.abs(out - ref)))
    assert jnp.allclose(out, ref, atol=1e-2, rtol=1e-2), max_err

    print("KERNEL_OK")
</pallas_src>

<mosaic_0001>
module attributes {stable_mosaic.version = 11 : i64} {
  func.func @decoder_kernel(%arg0: i32, %arg1: memref<128x20xf32, #tpu.memory_space<vmem>>, %arg2: memref<20x20xbf16, #tpu.memory_space<vmem>>, %arg3: memref<20x64xbf16, #tpu.memory_space<vmem>>, %arg4: memref<64x128xbf16, #tpu.memory_space<vmem>>, %arg5: memref<128x256xbf16, #tpu.memory_space<vmem>>, %arg6: memref<256x512xbf16, #tpu.memory_space<vmem>>, %arg7: memref<512x784xbf16, #tpu.memory_space<vmem>>, %arg8: memref<1x784xf32, #tpu.memory_space<vmem>>, %arg9: memref<10x512xf32, #tpu.memory_space<vmem>>, %arg10: memref<128x784xf32, #tpu.memory_space<vmem>>) attributes {dimension_semantics = [#tpu.dimension_semantics<arbitrary>], iteration_bounds = array<i64: 1>, scalar_prefetch = 0 : i64, scratch_operands = 0 : i64, tpu.core_type = #tpu.core_type<tc>, window_params = [{pipeline_mode = #tpu.pipeline_mode<synchronous>, transform_indices = @transform_0, window_bounds = array<i64: 128, 20>}, {pipeline_mode = #tpu.pipeline_mode<synchronous>, transform_indices = @transform_1, window_bounds = array<i64: 20, 20>}, {pipeline_mode = #tpu.pipeline_mode<synchronous>, transform_indices = @transform_2, window_bounds = array<i64: 20, 64>}, {pipeline_mode = #tpu.pipeline_mode<synchronous>, transform_indices = @transform_3, window_bounds = array<i64: 64, 128>}, {pipeline_mode = #tpu.pipeline_mode<synchronous>, transform_indices = @transform_4, window_bounds = array<i64: 128, 256>}, {pipeline_mode = #tpu.pipeline_mode<synchronous>, transform_indices = @transform_5, window_bounds = array<i64: 256, 512>}, {pipeline_mode = #tpu.pipeline_mode<synchronous>, transform_indices = @transform_6, window_bounds = array<i64: 512, 784>}, {pipeline_mode = #tpu.pipeline_mode<synchronous>, transform_indices = @transform_7, window_bounds = array<i64: 1, 784>}, {pipeline_mode = #tpu.pipeline_mode<synchronous>, transform_indices = @transform_8, window_bounds = array<i64: 10, 512>}, {pipeline_mode = #tpu.pipeline_mode<synchronous>, transform_indices = @transform_9, window_bounds = array<i64: 128, 784>}]} {
    %c0 = arith.constant 0 : index
    %c0_0 = arith.constant 0 : index
    %0 = vector.load %arg9[%c0, %c0_0] : memref<10x512xf32, #tpu.memory_space<vmem>>, vector<10x512xf32>
    %c0_1 = arith.constant 0 : index
    %c0_2 = arith.constant 0 : index
    %1 = vector.load %arg1[%c0_1, %c0_2] : memref<128x20xf32, #tpu.memory_space<vmem>>, vector<128x20xf32>
    %c0_3 = arith.constant 0 : index
    %c0_4 = arith.constant 0 : index
    %2 = vector.load %arg2[%c0_3, %c0_4] : memref<20x20xbf16, #tpu.memory_space<vmem>>, vector<20x20xbf16>
    %3 = arith.truncf %1 : vector<128x20xf32> to vector<128x20xbf16>
    %cst = arith.constant dense<0.000000e+00> : vector<128x20xf32>
    %4 = tpu.matmul %3, %2, %cst {dimension_numbers = #tpu.dot_dimension_numbers<[1], [0], [0], [1], [0, 0, 1, 1], [], []>} : vector<128x20xbf16>, vector<20x20xbf16>, vector<128x20xf32> -> vector<128x20xf32>
    %5 = vector.extract_strided_slice %0 {offsets = [0, 0], sizes = [1, 20], strides = [1, 1]} : vector<10x512xf32> to vector<1x20xf32>
    %6 = vector.extract_strided_slice %0 {offsets = [1, 0], sizes = [1, 20], strides = [1, 1]} : vector<10x512xf32> to vector<1x20xf32>
    %cst_5 = arith.constant dense<0.000000e+00> : vector<20xf32>
    %7 = vector.multi_reduction <add>, %4, %cst_5 [0] : vector<128x20xf32> to vector<20xf32>
    %8 = vector.shape_cast %7 : vector<20xf32> to vector<1x20xf32>
    %cst_6 = arith.constant 1.280000e+02 : f32
    %9 = vector.broadcast %cst_6 : f32 to vector<1x20xf32>
    %10 = arith.divf %8, %9 : vector<1x20xf32>
    %11 = vector.broadcast %10 : vector<1x20xf32> to vector<128x20xf32>
    %12 = arith.subf %4, %11 : vector<128x20xf32>
    %13 = arith.mulf %12, %12 : vector<128x20xf32>
    %cst_7 = arith.constant dense<0.000000e+00> : vector<20xf32>
    %14 = vector.multi_reduction <add>, %13, %cst_7 [0] : vector<128x20xf32> to vector<20xf32>
    %15 = vector.shape_cast %14 : vector<20xf32> to vector<1x20xf32>
    %cst_8 = arith.constant 1.280000e+02 : f32
    %16 = vector.broadcast %cst_8 : f32 to vector<1x20xf32>
    %17 = arith.divf %15, %16 : vector<1x20xf32>
    %cst_9 = arith.constant 9.99999974E-6 : f32
    %18 = vector.broadcast %cst_9 : f32 to vector<1x20xf32>
    %19 = arith.addf %17, %18 : vector<1x20xf32>
    %20 = math.rsqrt %19 : vector<1x20xf32>
    %21 = arith.mulf %5, %20 : vector<1x20xf32>
    %22 = vector.broadcast %21 : vector<1x20xf32> to vector<128x20xf32>
    %23 = arith.mulf %12, %22 : vector<128x20xf32>
    %24 = vector.broadcast %6 : vector<1x20xf32> to vector<128x20xf32>
    %25 = arith.addf %23, %24 : vector<128x20xf32>
    %cst_10 = arith.constant 0.000000e+00 : f32
    %26 = vector.broadcast %cst_10 : f32 to vector<128x20xf32>
    %27 = arith.maximumf %25, %26 : vector<128x20xf32>
    %c0_11 = arith.constant 0 : index
    %c0_12 = arith.constant 0 : index
    %28 = vector.load %arg3[%c0_11, %c0_12] : memref<20x64xbf16, #tpu.memory_space<vmem>>, vector<20x64xbf16>
    %29 = arith.truncf %27 : vector<128x20xf32> to vector<128x20xbf16>
    %cst_13 = arith.constant dense<0.000000e+00> : vector<128x64xf32>
    %30 = tpu.matmul %29, %28, %cst_13 {dimension_numbers = #tpu.dot_dimension_numbers<[1], [0], [0], [1], [0, 0, 1, 1], [], []>} : vector<128x20xbf16>, vector<20x64xbf16>, vector<128x64xf32> -> vector<128x64xf32>
    %31 = vector.extract_strided_slice %0 {offsets = [2, 0], sizes = [1, 64], strides = [1, 1]} : vector<10x512xf32> to vector<1x64xf32>
    %32 = vector.extract_strided_slice %0 {offsets = [3, 0], sizes = [1, 64], strides = [1, 1]} : vector<10x512xf32> to vector<1x64xf32>
    %cst_14 = arith.constant dense<0.000000e+00> : vector<64xf32>
    %33 = vector.multi_reduction <add>, %30, %cst_14 [0] : vector<128x64xf32> to vector<64xf32>
    %34 = vector.shape_cast %33 : vector<64xf32> to vector<1x64xf32>
    %cst_15 = arith.constant 1.280000e+02 : f32
    %35 = vector.broadcast %cst_15 : f32 to vector<1x64xf32>
    %36 = arith.divf %34, %35 : vector<1x64xf32>
    %37 = vector.broadcast %36 : vector<1x64xf32> to vector<128x64xf32>
    %38 = arith.subf %30, %37 : vector<128x64xf32>
    %39 = arith.mulf %38, %38 : vector<128x64xf32>
    %cst_16 = arith.constant dense<0.000000e+00> : vector<64xf32>
    %40 = vector.multi_reduction <add>, %39, %cst_16 [0] : vector<128x64xf32> to vector<64xf32>
    %41 = vector.shape_cast %40 : vector<64xf32> to vector<1x64xf32>
    %cst_17 = arith.constant 1.280000e+02 : f32
    %42 = vector.broadcast %cst_17 : f32 to vector<1x64xf32>
    %43 = arith.divf %41, %42 : vector<1x64xf32>
    %cst_18 = arith.constant 9.99999974E-6 : f32
    %44 = vector.broadcast %cst_18 : f32 to vector<1x64xf32>
    %45 = arith.addf %43, %44 : vector<1x64xf32>
    %46 = math.rsqrt %45 : vector<1x64xf32>
    %47 = arith.mulf %31, %46 : vector<1x64xf32>
    %48 = vector.broadcast %47 : vector<1x64xf32> to vector<128x64xf32>
    %49 = arith.mulf %38, %48 : vector<128x64xf32>
    %50 = vector.broadcast %32 : vector<1x64xf32> to vector<128x64xf32>
    %51 = arith.addf %49, %50 : vector<128x64xf32>
    %cst_19 = arith.constant 0.000000e+00 : f32
    %52 = vector.broadcast %cst_19 : f32 to vector<128x64xf32>
    %53 = arith.maximumf %51, %52 : vector<128x64xf32>
    %c0_20 = arith.constant 0 : index
    %c0_21 = arith.constant 0 : index
    %54 = vector.load %arg4[%c0_20, %c0_21] : memref<64x128xbf16, #tpu.memory_space<vmem>>, vector<64x128xbf16>
    %55 = arith.truncf %53 : vector<128x64xf32> to vector<128x64xbf16>
    %cst_22 = arith.constant dense<0.000000e+00> : vector<128x128xf32>
    %56 = tpu.matmul %55, %54, %cst_22 {dimension_numbers = #tpu.dot_dimension_numbers<[1], [0], [0], [1], [0, 0, 1, 1], [], []>} : vector<128x64xbf16>, vector<64x128xbf16>, vector<128x128xf32> -> vector<128x128xf32>
    %57 = vector.extract_strided_slice %0 {offsets = [4, 0], sizes = [1, 128], strides = [1, 1]} : vector<10x512xf32> to vector<1x128xf32>
    %58 = vector.extract_strided_slice %0 {offsets = [5, 0], sizes = [1, 128], strides = [1, 1]} : vector<10x512xf32> to vector<1x128xf32>
    %cst_23 = arith.constant dense<0.000000e+00> : vector<128xf32>
    %59 = vector.multi_reduction <add>, %56, %cst_23 [0] : vector<128x128xf32> to vector<128xf32>
    %60 = vector.shape_cast %59 : vector<128xf32> to vector<1x128xf32>
    %cst_24 = arith.constant 1.280000e+02 : f32
    %61 = vector.broadcast %cst_24 : f32 to vector<1x128xf32>
    %62 = arith.divf %60, %61 : vector<1x128xf32>
    %63 = vector.broadcast %62 : vector<1x128xf32> to vector<128x128xf32>
    %64 = arith.subf %56, %63 : vector<128x128xf32>
    %65 = arith.mulf %64, %64 : vector<128x128xf32>
    %cst_25 = arith.constant dense<0.000000e+00> : vector<128xf32>
    %66 = vector.multi_reduction <add>, %65, %cst_25 [0] : vector<128x128xf32> to vector<128xf32>
    %67 = vector.shape_cast %66 : vector<128xf32> to vector<1x128xf32>
    %cst_26 = arith.constant 1.280000e+02 : f32
    %68 = vector.broadcast %cst_26 : f32 to vector<1x128xf32>
    %69 = arith.divf %67, %68 : vector<1x128xf32>
    %cst_27 = arith.constant 9.99999974E-6 : f32
    %70 = vector.broadcast %cst_27 : f32 to vector<1x128xf32>
    %71 = arith.addf %69, %70 : vector<1x128xf32>
    %72 = math.rsqrt %71 : vector<1x128xf32>
    %73 = arith.mulf %57, %72 : vector<1x128xf32>
    %74 = vector.broadcast %73 : vector<1x128xf32> to vector<128x128xf32>
    %75 = arith.mulf %64, %74 : vector<128x128xf32>
    %76 = vector.broadcast %58 : vector<1x128xf32> to vector<128x128xf32>
    %77 = arith.addf %75, %76 : vector<128x128xf32>
    %cst_28 = arith.constant 0.000000e+00 : f32
    %78 = vector.broadcast %cst_28 : f32 to vector<128x128xf32>
    %79 = arith.maximumf %77, %78 : vector<128x128xf32>
    %c0_29 = arith.constant 0 : index
    %c0_30 = arith.constant 0 : index
    %80 = vector.load %arg5[%c0_29, %c0_30] : memref<128x256xbf16, #tpu.memory_space<vmem>>, vector<128x256xbf16>
    %81 = arith.truncf %79 : vector<128x128xf32> to vector<128x128xbf16>
    %cst_31 = arith.constant dense<0.000000e+00> : vector<128x256xf32>
    %82 = tpu.matmul %81, %80, %cst_31 {dimension_numbers = #tpu.dot_dimension_numbers<[1], [0], [0], [1], [0, 0, 1, 1], [], []>} : vector<128x128xbf16>, vector<128x256xbf16>, vector<128x256xf32> -> vector<128x256xf32>
    %83 = vector.extract_strided_slice %0 {offsets = [6, 0], sizes = [1, 256], strides = [1, 1]} : vector<10x512xf32> to vector<1x256xf32>
    %84 = vector.extract_strided_slice %0 {offsets = [7, 0], sizes = [1, 256], strides = [1, 1]} : vector<10x512xf32> to vector<1x256xf32>
    %cst_32 = arith.constant dense<0.000000e+00> : vector<256xf32>
    %85 = vector.multi_reduction <add>, %82, %cst_32 [0] : vector<128x256xf32> to vector<256xf32>
    %86 = vector.shape_cast %85 : vector<256xf32> to vector<1x256xf32>
    %cst_33 = arith.constant 1.280000e+02 : f32
    %87 = vector.broadcast %cst_33 : f32 to vector<1x256xf32>
    %88 = arith.divf %86, %87 : vector<1x256xf32>
    %89 = vector.broadcast %88 : vector<1x256xf32> to vector<128x256xf32>
    %90 = arith.subf %82, %89 : vector<128x256xf32>
    %91 = arith.mulf %90, %90 : vector<128x256xf32>
    %cst_34 = arith.constant dense<0.000000e+00> : vector<256xf32>
    %92 = vector.multi_reduction <add>, %91, %cst_34 [0] : vector<128x256xf32> to vector<256xf32>
    %93 = vector.shape_cast %92 : vector<256xf32> to vector<1x256xf32>
    %cst_35 = arith.constant 1.280000e+02 : f32
    %94 = vector.broadcast %cst_35 : f32 to vector<1x256xf32>
    %95 = arith.divf %93, %94 : vector<1x256xf32>
    %cst_36 = arith.constant 9.99999974E-6 : f32
    %96 = vector.broadcast %cst_36 : f32 to vector<1x256xf32>
    %97 = arith.addf %95, %96 : vector<1x256xf32>
    %98 = math.rsqrt %97 : vector<1x256xf32>
    %99 = arith.mulf %83, %98 : vector<1x256xf32>
    %100 = vector.broadcast %99 : vector<1x256xf32> to vector<128x256xf32>
    %101 = arith.mulf %90, %100 : vector<128x256xf32>
    %102 = vector.broadcast %84 : vector<1x256xf32> to vector<128x256xf32>
    %103 = arith.addf %101, %102 : vector<128x256xf32>
    %cst_37 = arith.constant 0.000000e+00 : f32
    %104 = vector.broadcast %cst_37 : f32 to vector<128x256xf32>
    %105 = arith.maximumf %103, %104 : vector<128x256xf32>
    %c0_38 = arith.constant 0 : index
    %c0_39 = arith.constant 0 : index
    %106 = vector.load %arg6[%c0_38, %c0_39] : memref<256x512xbf16, #tpu.memory_space<vmem>>, vector<256x512xbf16>
    %107 = arith.truncf %105 : vector<128x256xf32> to vector<128x256xbf16>
    %cst_40 = arith.constant dense<0.000000e+00> : vector<128x512xf32>
    %108 = tpu.matmul %107, %106, %cst_40 {dimension_numbers = #tpu.dot_dimension_numbers<[1], [0], [0], [1], [0, 0, 1, 1], [], []>} : vector<128x256xbf16>, vector<256x512xbf16>, vector<128x512xf32> -> vector<128x512xf32>
    %109 = vector.extract_strided_slice %0 {offsets = [8, 0], sizes = [1, 512], strides = [1, 1]} : vector<10x512xf32> to vector<1x512xf32>
    %110 = vector.extract_strided_slice %0 {offsets = [9, 0], sizes = [1, 512], strides = [1, 1]} : vector<10x512xf32> to vector<1x512xf32>
    %cst_41 = arith.constant dense<0.000000e+00> : vector<512xf32>
    %111 = vector.multi_reduction <add>, %108, %cst_41 [0] : vector<128x512xf32> to vector<512xf32>
    %112 = vector.shape_cast %111 : vector<512xf32> to vector<1x512xf32>
    %cst_42 = arith.constant 1.280000e+02 : f32
    %113 = vector.broadcast %cst_42 : f32 to vector<1x512xf32>
    %114 = arith.divf %112, %113 : vector<1x512xf32>
    %115 = vector.broadcast %114 : vector<1x512xf32> to vector<128x512xf32>
    %116 = arith.subf %108, %115 : vector<128x512xf32>
    %117 = arith.mulf %116, %116 : vector<128x512xf32>
    %cst_43 = arith.constant dense<0.000000e+00> : vector<512xf32>
    %118 = vector.multi_reduction <add>, %117, %cst_43 [0] : vector<128x512xf32> to vector<512xf32>
    %119 = vector.shape_cast %118 : vector<512xf32> to vector<1x512xf32>
    %cst_44 = arith.constant 1.280000e+02 : f32
    %120 = vector.broadcast %cst_44 : f32 to vector<1x512xf32>
    %121 = arith.divf %119, %120 : vector<1x512xf32>
    %cst_45 = arith.constant 9.99999974E-6 : f32
    %122 = vector.broadcast %cst_45 : f32 to vector<1x512xf32>
    %123 = arith.addf %121, %122 : vector<1x512xf32>
    %124 = math.rsqrt %123 : vector<1x512xf32>
    %125 = arith.mulf %109, %124 : vector<1x512xf32>
    %126 = vector.broadcast %125 : vector<1x512xf32> to vector<128x512xf32>
    %127 = arith.mulf %116, %126 : vector<128x512xf32>
    %128 = vector.broadcast %110 : vector<1x512xf32> to vector<128x512xf32>
    %129 = arith.addf %127, %128 : vector<128x512xf32>
    %cst_46 = arith.constant 0.000000e+00 : f32
    %130 = vector.broadcast %cst_46 : f32 to vector<128x512xf32>
    %131 = arith.maximumf %129, %130 : vector<128x512xf32>
    %c0_47 = arith.constant 0 : index
    %c0_48 = arith.constant 0 : index
    %132 = vector.load %arg7[%c0_47, %c0_48] : memref<512x784xbf16, #tpu.memory_space<vmem>>, vector<512x784xbf16>
    %133 = arith.truncf %131 : vector<128x512xf32> to vector<128x512xbf16>
    %cst_49 = arith.constant dense<0.000000e+00> : vector<128x784xf32>
    %134 = tpu.matmul %133, %132, %cst_49 {dimension_numbers = #tpu.dot_dimension_numbers<[1], [0], [0], [1], [0, 0, 1, 1], [], []>} : vector<128x512xbf16>, vector<512x784xbf16>, vector<128x784xf32> -> vector<128x784xf32>
    %c0_50 = arith.constant 0 : index
    %c0_51 = arith.constant 0 : index
    %135 = vector.load %arg8[%c0_50, %c0_51] : memref<1x784xf32, #tpu.memory_space<vmem>>, vector<1x784xf32>
    %136 = vector.broadcast %135 : vector<1x784xf32> to vector<128x784xf32>
    %137 = arith.addf %134, %136 : vector<128x784xf32>
    %c0_52 = arith.constant 0 : index
    %c0_53 = arith.constant 0 : index
    %138 = vector.load %arg10[%c0_52, %c0_53] : memref<128x784xf32, #tpu.memory_space<vmem>>, vector<128x784xf32>
    tpu.vector_store %arg10[%c0_52, %c0_53], %137 {strides = array<i32>} : memref<128x784xf32, #tpu.memory_space<vmem>>, vector<128x784xf32>,
    return
  }
  func.func @transform_0(%arg0: i32) -> (i32, i32) {
    %c0_i32 = arith.constant 0 : i32
    %c0_i32_0 = arith.constant 0 : i32
    %c0_i32_1 = arith.constant 0 : i32
    return %c0_i32, %c0_i32_0 : i32, i32
  }
  func.func @transform_1(%arg0: i32) -> (i32, i32) {
    %c0_i32 = arith.constant 0 : i32
    %c0_i32_0 = arith.constant 0 : i32
    %c0_i32_1 = arith.constant 0 : i32
    return %c0_i32, %c0_i32_0 : i32, i32
  }
  func.func @transform_2(%arg0: i32) -> (i32, i32) {
    %c0_i32 = arith.constant 0 : i32
    %c0_i32_0 = arith.constant 0 : i32
    %c0_i32_1 = arith.constant 0 : i32
    return %c0_i32, %c0_i32_0 : i32, i32
  }
  func.func @transform_3(%arg0: i32) -> (i32, i32) {
    %c0_i32 = arith.constant 0 : i32
    %c0_i32_0 = arith.constant 0 : i32
    %c0_i32_1 = arith.constant 0 : i32
    return %c0_i32, %c0_i32_0 : i32, i32
  }
  func.func @transform_4(%arg0: i32) -> (i32, i32) {
    %c0_i32 = arith.constant 0 : i32
    %c0_i32_0 = arith.constant 0 : i32
    %c0_i32_1 = arith.constant 0 : i32
    return %c0_i32, %c0_i32_0 : i32, i32
  }
  func.func @transform_5(%arg0: i32) -> (i32, i32) {
    %c0_i32 = arith.constant 0 : i32
    %c0_i32_0 = arith.constant 0 : i32
    %c0_i32_1 = arith.constant 0 : i32
    return %c0_i32, %c0_i32_0 : i32, i32
  }
  func.func @transform_6(%arg0: i32) -> (i32, i32) {
    %c0_i32 = arith.constant 0 : i32
    %c0_i32_0 = arith.constant 0 : i32
    %c0_i32_1 = arith.constant 0 : i32
    return %c0_i32, %c0_i32_0 : i32, i32
  }
  func.func @transform_7(%arg0: i32) -> (i32, i32) {
    %c0_i32 = arith.constant 0 : i32
    %c0_i32_0 = arith.constant 0 : i32
    %c0_i32_1 = arith.constant 0 : i32
    return %c0_i32, %c0_i32_0 : i32, i32
  }
  func.func @transform_8(%arg0: i32) -> (i32, i32) {
    %c0_i32 = arith.constant 0 : i32
    %c0_i32_0 = arith.constant 0 : i32
    %c0_i32_1 = arith.constant 0 : i32
    return %c0_i32, %c0_i32_0 : i32, i32
  }
  func.func @transform_9(%arg0: i32) -> (i32, i32) {
    %c0_i32 = arith.constant 0 : i32
    %c0_i32_0 = arith.constant 0 : i32
    %c0_i32_1 = arith.constant 0 : i32
    return %c0_i32, %c0_i32_0 : i32, i32
  }
}

</mosaic_0001>

<llo_original>
// kernel: decoder_forward.1
$region0: #{decoder_forward.1}
  #allocation0 [shape = 'u32[]', space=smem, size = 0x4, offset = 0x4, fixed_abs, tag = 'smem constant byte address 0x4 - core index']
  #allocation1 [shape = 'u32[144,128]{1,0:T(1,128)}', space=vmem, size = 0x12000, scoped, tag = 'internal scratch']
  %s0 = inlined_call_operand.vmem [shape: f32[128,20], index: 0, kind: input, shape index: {}]
  %s1 = inlined_call_operand.vmem [shape: bf16[20,20], index: 1, kind: input, shape index: {}]
  %s2 = inlined_call_operand.vmem [shape: bf16[20,64], index: 2, kind: input, shape index: {}]
  %s3 = inlined_call_operand.vmem [shape: bf16[64,128], index: 3, kind: input, shape index: {}]
  %s4 = inlined_call_operand.vmem [shape: bf16[128,256], index: 4, kind: input, shape index: {}]
  %s5 = inlined_call_operand.vmem [shape: bf16[256,512], index: 5, kind: input, shape index: {}]
  %s6 = inlined_call_operand.vmem [shape: bf16[512,784], index: 6, kind: input, shape index: {}]
  %s7 = inlined_call_operand.vmem [shape: f32[1,784], index: 7, kind: input, shape index: {}]
  %s8 = inlined_call_operand.vmem [shape: f32[10,512], index: 8, kind: input, shape index: {}]
  %s9 = inlined_call_operand.vmem [shape: f32[128,784], index: 9, kind: output, shape index: {}]
  %s10 = sld [smem:[#allocation0]]
  $region46: #{decoder_forward.1} parent=0
    _
  %s12 = ssub.s32 1, %s10
  %s13 = scalar_select 0, %s12, %s10
  // Predicated region
  $region2: #{decoder_forward.1} parent=0 // pred_check
    _
  $region3: #{decoder_forward.1} parent=0 // pred_check_branch
    %15 = sbr.rel (0) target = $region5
  $region4: #{decoder_forward.1} parent=0 // pred_region
    _
  $region5: #{decoder_forward.1} parent=0 // pred_fallthru
    _
  // Predicated region
  $region6: #{decoder_forward.1} parent=0 // pred_check
    _
  $region7: #{decoder_forward.1} parent=0 // pred_check_branch
    %17 = sbr.rel (0) target = $region9
  $region8: #{decoder_forward.1} parent=0 // pred_region
    _
  $region9: #{decoder_forward.1} parent=0 // pred_fallthru
    _
  // Predicated region
  $region10: #{decoder_forward.1} parent=0 // pred_check
    _
  $region11: #{decoder_forward.1} parent=0 // pred_check_branch
    %19 = sbr.rel (0) target = $region13
  $region12: #{decoder_forward.1} parent=0 // pred_region
    _
  $region13: #{decoder_forward.1} parent=0 // pred_fallthru
    _
  // Predicated region
  $region14: #{decoder_forward.1} parent=0 // pred_check
    _
  $region15: #{decoder_forward.1} parent=0 // pred_check_branch
    %21 = sbr.rel (0) target = $region17
  $region16: #{decoder_forward.1} parent=0 // pred_region
    _
  $region17: #{decoder_forward.1} parent=0 // pred_fallthru
    _
  // Predicated region
  $region18: #{decoder_forward.1} parent=0 // pred_check
    _
  $region19: #{decoder_forward.1} parent=0 // pred_check_branch
    %23 = sbr.rel (0) target = $region21
  $region20: #{decoder_forward.1} parent=0 // pred_region
    _
  $region21: #{decoder_forward.1} parent=0 // pred_fallthru
    _
  // Predicated region
  $region22: #{decoder_forward.1} parent=0 // pred_check
    _
  $region23: #{decoder_forward.1} parent=0 // pred_check_branch
    %25 = sbr.rel (0) target = $region25
  $region24: #{decoder_forward.1} parent=0 // pred_region
    _
  $region25: #{decoder_forward.1} parent=0 // pred_fallthru
    _
  // Predicated region
  $region26: #{decoder_forward.1} parent=0 // pred_check
    _
  $region27: #{decoder_forward.1} parent=0 // pred_check_branch
    %27 = sbr.rel (0) target = $region29
  $region28: #{decoder_forward.1} parent=0 // pred_region
    _
  $region29: #{decoder_forward.1} parent=0 // pred_fallthru
    _
  // Predicated region
  $region30: #{decoder_forward.1} parent=0 // pred_check
    _
  $region31: #{decoder_forward.1} parent=0 // pred_check_branch
    %29 = sbr.rel (0) target = $region33
  $region32: #{decoder_forward.1} parent=0 // pred_region
    _
  $region33: #{decoder_forward.1} parent=0 // pred_fallthru
    _
  // Predicated region
  $region34: #{decoder_forward.1} parent=0 // pred_check
    _
  $region35: #{decoder_forward.1} parent=0 // pred_check_branch
    %31 = sbr.rel (0) target = $region37
  $region36: #{decoder_forward.1} parent=0 // pred_region
    _
  $region37: #{decoder_forward.1} parent=0 // pred_fallthru
    _
  %v33 = vld [vmem:[%s8] sm:$0xff]
  %v34 = vld [vmem:[%s8 + $0x8] sm:$0xff]
  %v35 = vld [vmem:[%s8 + $0x20] sm:$0x3]
  %v36 = vld [vmem:[%s8 + $0x28] sm:$0x3]
  %v37 = vld [vmem:[%s8 + $0x30] sm:$0x3]
  %v38 = vld [vmem:[%s8 + $0x38] sm:$0x3]
  %v39 = vld [vmem:[%s0] sm:$0xff]
  %v40 = vld [vmem:[%s0 + $0x8] sm:$0xff]
  %v41 = vld [vmem:[%s0 + $0x10] sm:$0xff]
  %v42 = vld [vmem:[%s0 + $0x18] sm:$0xff]
  %v43 = vld [vmem:[%s0 + $0x20] sm:$0xff]
  %v44 = vld [vmem:[%s0 + $0x28] sm:$0xff]
  %v45 = vld [vmem:[%s0 + $0x30] sm:$0xff]
  %v46 = vld [vmem:[%s0 + $0x38] sm:$0xff]
  %v47 = vld [vmem:[%s0 + $0x40] sm:$0xff]
  %v48 = vld [vmem:[%s0 + $0x48] sm:$0xff]
  %v49 = vld [vmem:[%s0 + $0x50] sm:$0xff]
  %v50 = vld [vmem:[%s0 + $0x58] sm:$0xff]
  %v51 = vld [vmem:[%s0 + $0x60] sm:$0xff]
  %v52 = vld [vmem:[%s0 + $0x68] sm:$0xff]
  %v53 = vld [vmem:[%s0 + $0x70] sm:$0xff]
  %v54 = vld [vmem:[%s0 + $0x78] sm:$0xff]
  %v55 = vld [vmem:[%s1] sm:$0xf]
  %v56 = vld [vmem:[%s1 + $0x4] sm:$0xf]
  %v57 = vld [vmem:[%s1 + $0x8] sm:$0x3]
  %v58 = vpack.c.bf16 %v40, %v39
  %v59 = vpack.c.bf16 %v42, %v41
  %v60 = vpack.c.bf16 %v44, %v43
  %v61 = vpack.c.bf16 %v46, %v45
  %v62 = vpack.c.bf16 %v48, %v47
  %v63 = vpack.c.bf16 %v50, %v49
  %v64 = vpack.c.bf16 %v52, %v51
  %v65 = vpack.c.bf16 %v54, %v53
  %v69 = vunpack.c.l.b16 %v55
  %v70 = vunpack.c.l.b16 %v56
  %v71 = vunpack.c.l.b16 %v57
  %v72 = vpack.c.b16 %v70, %v69
  %v73 = vpack.c.b16 %v71, %v71
  %vm75 = vcmask 162816
  %v77 = vsel %vm75, %v58, 0
  %v80 = vsel %vm75, %v59, 0
  %v83 = vsel %vm75, %v60, 0
  %v86 = vsel %vm75, %v61, 0
  %v89 = vsel %vm75, %v62, 0
  %v92 = vsel %vm75, %v63, 0
  %v95 = vsel %vm75, %v64, 0
  %v98 = vsel %vm75, %v65, 0
  %vm100 = vcmask 1041408
  %v102 = vsel %vm100, %v73, 0
  %104 = vmatprep.subr.bf16.mxu0 0
  %105 = vmatpush1.bf16.msra.mxu0 0
  %106 = vmatprep.subr.bf16.mxu0 0
  %107 = vmatpush1.bf16.msra.mxu0 0
  %108 = vmatprep.subr.bf16.mxu0 0
  %109 = vmatpush1.bf16.msra.mxu0 0
  %110 = vmatprep.subr.bf16.mxu0 0
  %111 = vmatpush1.bf16.msra.mxu0 0
  %112 = vmatprep.subr.bf16.mxu0 0
  %113 = vmatpush1.bf16.msra.mxu0 0
  %114 = vmatprep.subr.bf16.mxu0 0
  %115 = vmatpush1.bf16.msra.mxu0 0
  %116 = vmatprep.subr.bf16.mxu0 0
  %117 = vmatpush1.bf16.msra.mxu0 %v102
  %118 = vmatprep.subr.bf16.mxu0 0
  %119 = vmatpush1.bf16.msra.mxu0 %v72
  %120 = vmatprep.subr.bf16.mxu0 0
  %121 = vmatpush2.bf16.msra.mxu0 0
  %122 = vmatprep.subr.bf16.mxu0 0
  %123 = vmatpush2.bf16.msra.mxu0 0
  %124 = vmatprep.subr.bf16.mxu0 0
  %125 = vmatpush2.bf16.msra.mxu0 0
  %126 = vmatprep.subr.bf16.mxu0 0
  %127 = vmatpush2.bf16.msra.mxu0 0
  %128 = vmatprep.subr.bf16.mxu0 0
  %129 = vmatpush2.bf16.msra.mxu0 0
  %130 = vmatprep.subr.bf16.mxu0 0
  %131 = vmatpush2.bf16.msra.mxu0 0
  %132 = vmatprep.subr.bf16.mxu0 0
  %133 = vmatpush2.bf16.msra.mxu0 0
  %134 = vmatprep.subr.bf16.mxu0 0
  %135 = vmatpush2.bf16.msra.mxu0 0
  %136 = vmatprep.mubr.bf16.mxu0 0
  %137 = vmatmul.mubr.bf16.gmra.mxu0 %v77
  %v138 = vpop.f32.mrf.mxu0
  %v139 = vadd.f32 0.0, %v138
  %v140 = vpop.f32.mrf.mxu0
  %v141 = vpop.f32.mrf.mxu0
  %v142 = vadd.f32 0.0, %v141
  %v143 = vpop.f32.mrf.mxu0
  %144 = vmatprep.mubr.bf16.mxu0 0
  %145 = vmatmul.mubr.bf16.gmra.mxu0 %v80
  %v146 = vpop.f32.mrf.mxu0
  %v147 = vadd.f32 0.0, %v146
  %v148 = vpop.f32.mrf.mxu0
  %v149 = vpop.f32.mrf.mxu0
  %v150 = vadd.f32 0.0, %v149
  %v151 = vpop.f32.mrf.mxu0
  %152 = vmatprep.mubr.bf16.mxu0 0
  %153 = vmatmul.mubr.bf16.gmra.mxu0 %v83
  %v154 = vpop.f32.mrf.mxu0
  %v155 = vadd.f32 0.0, %v154
  %v156 = vpop.f32.mrf.mxu0
  %v157 = vpop.f32.mrf.mxu0
  %v158 = vadd.f32 0.0, %v157
  %v159 = vpop.f32.mrf.mxu0
  %160 = vmatprep.mubr.bf16.mxu0 0
  %161 = vmatmul.mubr.bf16.gmra.mxu0 %v86
  %v162 = vpop.f32.mrf.mxu0
  %v163 = vadd.f32 0.0, %v162
  %v164 = vpop.f32.mrf.mxu0
  %v165 = vpop.f32.mrf.mxu0
  %v166 = vadd.f32 0.0, %v165
  %v167 = vpop.f32.mrf.mxu0
  %168 = vmatprep.mubr.bf16.mxu0 0
  %169 = vmatmul.mubr.bf16.gmra.mxu0 %v89
  %v170 = vpop.f32.mrf.mxu0
  %v171 = vadd.f32 0.0, %v170
  %v172 = vpop.f32.mrf.mxu0
  %v173 = vpop.f32.mrf.mxu0
  %v174 = vadd.f32 0.0, %v173
  %v175 = vpop.f32.mrf.mxu0
  %176 = vmatprep.mubr.bf16.mxu0 0
  %177 = vmatmul.mubr.bf16.gmra.mxu0 %v92
  %v178 = vpop.f32.mrf.mxu0
  %v179 = vadd.f32 0.0, %v178
  %v180 = vpop.f32.mrf.mxu0
  %v181 = vpop.f32.mrf.mxu0
  %v182 = vadd.f32 0.0, %v181
  %v183 = vpop.f32.mrf.mxu0
  %184 = vmatprep.mubr.bf16.mxu0 0
  %185 = vmatmul.mubr.bf16.gmra.mxu0 %v95
  %v186 = vpop.f32.mrf.mxu0
  %v187 = vadd.f32 0.0, %v186
  %v188 = vpop.f32.mrf.mxu0
  %v189 = vpop.f32.mrf.mxu0
  %v190 = vadd.f32 0.0, %v189
  %v191 = vpop.f32.mrf.mxu0
  %192 = vmatprep.mubr.bf16.mxu0 0
  %193 = vmatmul.mubr.bf16.gmra.mxu0 %v98
  %v194 = vpop.f32.mrf.mxu0
  %v195 = vadd.f32 0.0, %v194
  %v196 = vpop.f32.mrf.mxu0
  %v197 = vpop.f32.mrf.mxu0
  %v198 = vadd.f32 0.0, %v197
  %v199 = vpop.f32.mrf.mxu0
  %200 = vdwg.mxu0
  %v201 = vsel %vm75, %v139, 0.0
  %v202 = vsel %vm75, %v142, 0.0
  %v203 = vadd.f32 %v201, %v202
  %v204 = vsel %vm75, %v147, 0.0
  %v205 = vadd.f32 %v203, %v204
  %v206 = vsel %vm75, %v150, 0.0
  %v207 = vadd.f32 %v205, %v206
  %v208 = vsel %vm75, %v155, 0.0
  %v209 = vadd.f32 %v207, %v208
  %v210 = vsel %vm75, %v158, 0.0
  %v211 = vadd.f32 %v209, %v210
  %v212 = vsel %vm75, %v163, 0.0
  %v213 = vadd.f32 %v211, %v212
  %v214 = vsel %vm75, %v166, 0.0
  %v215 = vadd.f32 %v213, %v214
  %v216 = vsel %vm75, %v171, 0.0
  %v217 = vadd.f32 %v215, %v216
  %v218 = vsel %vm75, %v174, 0.0
  %v219 = vadd.f32 %v217, %v218
  %v220 = vsel %vm75, %v179, 0.0
  %v221 = vadd.f32 %v219, %v220
  %v222 = vsel %vm75, %v182, 0.0
  %v223 = vadd.f32 %v221, %v222
  %v224 = vsel %vm75, %v187, 0.0
  %v225 = vadd.f32 %v223, %v224
  %v226 = vsel %vm75, %v190, 0.0
  %v227 = vadd.f32 %v225, %v226
  %v228 = vsel %vm75, %v195, 0.0
  %v229 = vadd.f32 %v227, %v228
  %v230 = vsel %vm75, %v198, 0.0
  %v231 = vadd.f32 %v229, %v230
  %v232 = vrot.slane %v231, 4
  %v233 = vadd.f32 %v231, %v232
  %v234 = vrot.slane %v233, 2
  %v235 = vadd.f32 %v233, %v234
  %v236 = vrot.slane %v235, 1
  %v237 = vadd.f32 %v235, %v236
  %v238 = vrcp.pop 128.0
  %v239 = vmul.f32 %v237, %v238
  %v240 = vsub.f32 %v139, %v239
  %v241 = vsub.f32 %v142, %v239
  %v242 = vsub.f32 %v147, %v239
  %v243 = vsub.f32 %v150, %v239
  %v244 = vsub.f32 %v155, %v239
  %v245 = vsub.f32 %v158, %v239
  %v246 = vsub.f32 %v163, %v239
  %v247 = vsub.f32 %v166, %v239
  %v248 = vsub.f32 %v171, %v239
  %v249 = vsub.f32 %v174, %v239
  %v250 = vsub.f32 %v179, %v239
  %v251 = vsub.f32 %v182, %v239
  %v252 = vsub.f32 %v187, %v239
  %v253 = vsub.f32 %v190, %v239
  %v254 = vsub.f32 %v195, %v239
  %v255 = vsub.f32 %v198, %v239
  %v256 = vmul.f32 %v240, %v240
  %v257 = vmul.f32 %v241, %v241
  %v258 = vmul.f32 %v242, %v242
  %v259 = vmul.f32 %v243, %v243
  %v260 = vmul.f32 %v244, %v244
  %v261 = vmul.f32 %v245, %v245
  %v262 = vmul.f32 %v246, %v246
  %v263 = vmul.f32 %v247, %v247
  %v264 = vmul.f32 %v248, %v248
  %v265 = vmul.f32 %v249, %v249
  %v266 = vmul.f32 %v250, %v250
  %v267 = vmul.f32 %v251, %v251
  %v268 = vmul.f32 %v252, %v252
  %v269 = vmul.f32 %v253, %v253
  %v270 = vmul.f32 %v254, %v254
  %v271 = vmul.f32 %v255, %v255
  %v272 = vsel %vm75, %v256, 0.0
  %v273 = vsel %vm75, %v257, 0.0
  %v274 = vadd.f32 %v272, %v273
  %v275 = vsel %vm75, %v258, 0.0
  %v276 = vadd.f32 %v274, %v275
  %v277 = vsel %vm75, %v259, 0.0
  %v278 = vadd.f32 %v276, %v277
  %v279 = vsel %vm75, %v260, 0.0
  %v280 = vadd.f32 %v278, %v279
  %v281 = vsel %vm75, %v261, 0.0
  %v282 = vadd.f32 %v280, %v281
  %v283 = vsel %vm75, %v262, 0.0
  %v284 = vadd.f32 %v282, %v283
  %v285 = vsel %vm75, %v263, 0.0
  %v286 = vadd.f32 %v284, %v285
  %v287 = vsel %vm75, %v264, 0.0
  %v288 = vadd.f32 %v286, %v287
  %v289 = vsel %vm75, %v265, 0.0
  %v290 = vadd.f32 %v288, %v289
  %v291 = vsel %vm75, %v266, 0.0
  %v292 = vadd.f32 %v290, %v291
  %v293 = vsel %vm75, %v267, 0.0
  %v294 = vadd.f32 %v292, %v293
  %v295 = vsel %vm75, %v268, 0.0
  %v296 = vadd.f32 %v294, %v295
  %v297 = vsel %vm75, %v269, 0.0
  %v298 = vadd.f32 %v296, %v297
  %v299 = vsel %vm75, %v270, 0.0
  %v300 = vadd.f32 %v298, %v299
  %v301 = vsel %vm75, %v271, 0.0
  %v302 = vadd.f32 %v300, %v301
  %v303 = vrot.slane %v302, 4
  %v304 = vadd.f32 %v302, %v303
  %v305 = vrot.slane %v304, 2
  %v306 = vadd.f32 %v304, %v305
  %v307 = vrot.slane %v306, 1
  %v308 = vadd.f32 %v306, %v307
  %v309 = vmul.f32 %v308, %v238
  %v310 = vadd.f32 %v309, 1e-05
  %v311 = vrsqrt.pop %v310
  %v312 = vmul.f32 %v33, %v311
  %v313 = vlaneseq
  %v314 = vshrl.u32 %v313, 7
  %v315 = vsub.s32 0, %v314
  %v316 = vrot.slane %v312, %v315
  %v317 = vmul.f32 %v240, %v316
  %v318 = vmul.f32 %v241, %v316
  %v319 = vmul.f32 %v242, %v316
  %v320 = vmul.f32 %v243, %v316
  %v321 = vmul.f32 %v244, %v316
  %v322 = vmul.f32 %v245, %v316
  %v323 = vmul.f32 %v246, %v316
  %v324 = vmul.f32 %v247, %v316
  %v325 = vmul.f32 %v248, %v316
  %v326 = vmul.f32 %v249, %v316
  %v327 = vmul.f32 %v250, %v316
  %v328 = vmul.f32 %v251, %v316
  %v329 = vmul.f32 %v252, %v316
  %v330 = vmul.f32 %v253, %v316
  %v331 = vmul.f32 %v254, %v316
  %v332 = vmul.f32 %v255, %v316
  %v333 = vlaneseq
  %v334 = vshrl.u32 %v333, 7
  %v335 = vsub.s32 1, %v334
  %v336 = vrot.slane %v33, %v335
  %v337 = vadd.f32 %v317, %v336
  %v338 = vadd.f32 %v318, %v336
  %v339 = vadd.f32 %v319, %v336
  %v340 = vadd.f32 %v320, %v336
  %v341 = vadd.f32 %v321, %v336
  %v342 = vadd.f32 %v322, %v336
  %v343 = vadd.f32 %v323, %v336
  %v344 = vadd.f32 %v324, %v336
  %v345 = vadd.f32 %v325, %v336
  %v346 = vadd.f32 %v326, %v336
  %v347 = vadd.f32 %v327, %v336
  %v348 = vadd.f32 %v328, %v336
  %v349 = vadd.f32 %v329, %v336
  %v350 = vadd.f32 %v330, %v336
  %v351 = vadd.f32 %v331, %v336
  %v352 = vadd.f32 %v332, %v336
  %v353 = vmax.f32 %v337, 0.0
  %v354 = vmax.f32 %v338, 0.0
  %v355 = vmax.f32 %v339, 0.0
  %v356 = vmax.f32 %v340, 0.0
  %v357 = vmax.f32 %v341, 0.0
  %v358 = vmax.f32 %v342, 0.0
  %v359 = vmax.f32 %v343, 0.0
  %v360 = vmax.f32 %v344, 0.0
  %v361 = vmax.f32 %v345, 0.0
  %v362 = vmax.f32 %v346, 0.0
  %v363 = vmax.f32 %v347, 0.0
  %v364 = vmax.f32 %v348, 0.0
  %v365 = vmax.f32 %v349, 0.0
  %v366 = vmax.f32 %v350, 0.0
  %v367 = vmax.f32 %v351, 0.0
  %v368 = vmax.f32 %v352, 0.0
  %v369 = vld [vmem:[%s2] sm:$0xf]
  %v370 = vld [vmem:[%s2 + $0x4] sm:$0xf]
  %v371 = vld [vmem:[%s2 + $0x8] sm:$0x3]
  %v372 = vpack.c.bf16 %v354, %v353
  %v373 = vpack.c.bf16 %v356, %v355
  %v374 = vpack.c.bf16 %v358, %v357
  %v375 = vpack.c.bf16 %v360, %v359
  %v376 = vpack.c.bf16 %v362, %v361
  %v377 = vpack.c.bf16 %v364, %v363
  %v378 = vpack.c.bf16 %v366, %v365
  %v379 = vpack.c.bf16 %v368, %v367
  %v383 = vunpack.c.l.b16 %v369
  %v384 = vunpack.c.l.b16 %v370
  %v385 = vunpack.c.l.b16 %v371
  %v386 = vpack.c.b16 %v384, %v383
  %v387 = vpack.c.b16 %v385, %v385
  %v390 = vsel %vm75, %v372, 0
  %v393 = vsel %vm75, %v373, 0
  %v396 = vsel %vm75, %v374, 0
  %v399 = vsel %vm75, %v375, 0
  %v402 = vsel %vm75, %v376, 0
  %v405 = vsel %vm75, %v377, 0
  %v408 = vsel %vm75, %v378, 0
  %v411 = vsel %vm75, %v379, 0
  %v414 = vsel %vm100, %v387, 0
  %416 = vmatprep.subr.bf16.mxu0 0
  %417 = vmatpush1.bf16.msra.mxu0 0
  %418 = vmatprep.subr.bf16.mxu0 0
  %419 = vmatpush1.bf16.msra.mxu0 0
  %420 = vmatprep.subr.bf16.mxu0 0
  %421 = vmatpush1.bf16.msra.mxu0 0
  %422 = vmatprep.subr.bf16.mxu0 0
  %423 = vmatpush1.bf16.msra.mxu0 0
  %424 = vmatprep.subr.bf16.mxu0 0
  %425 = vmatpush1.bf16.msra.mxu0 0
  %426 = vmatprep.subr.bf16.mxu0 0
  %427 = vmatpush1.bf16.msra.mxu0 0
  %428 = vmatprep.subr.bf16.mxu0 0
  %429 = vmatpush1.bf16.msra.mxu0 %v414
  %430 = vmatprep.subr.bf16.mxu0 0
  %431 = vmatpush1.bf16.msra.mxu0 %v386
  %432 = vmatprep.subr.bf16.mxu0 0
  %433 = vmatpush2.bf16.msra.mxu0 0
  %434 = vmatprep.subr.bf16.mxu0 0
  %435 = vmatpush2.bf16.msra.mxu0 0
  %436 = vmatprep.subr.bf16.mxu0 0
  %437 = vmatpush2.bf16.msra.mxu0 0
  %438 = vmatprep.subr.bf16.mxu0 0
  %439 = vmatpush2.bf16.msra.mxu0 0
  %440 = vmatprep.subr.bf16.mxu0 0
  %441 = vmatpush2.bf16.msra.mxu0 0
  %442 = vmatprep.subr.bf16.mxu0 0
  %443 = vmatpush2.bf16.msra.mxu0 0
  %444 = vmatprep.subr.bf16.mxu0 0
  %445 = vmatpush2.bf16.msra.mxu0 0
  %446 = vmatprep.subr.bf16.mxu0 0
  %447 = vmatpush2.bf16.msra.mxu0 0
  %448 = vmatprep.mubr.bf16.mxu0 0
  %449 = vmatmul.mubr.bf16.gmra.mxu0 %v390
  %v450 = vpop.f32.mrf.mxu0
  %v451 = vadd.f32 0.0, %v450
  %v452 = vpop.f32.mrf.mxu0
  %v453 = vpop.f32.mrf.mxu0
  %v454 = vadd.f32 0.0, %v453
  %v455 = vpop.f32.mrf.mxu0
  %456 = vmatprep.mubr.bf16.mxu0 0
  %457 = vmatmul.mubr.bf16.gmra.mxu0 %v393
  %v458 = vpop.f32.mrf.mxu0
  %v459 = vadd.f32 0.0, %v458
  %v460 = vpop.f32.mrf.mxu0
  %v461 = vpop.f32.mrf.mxu0
  %v462 = vadd.f32 0.0, %v461
  %v463 = vpop.f32.mrf.mxu0
  %464 = vmatprep.mubr.bf16.mxu0 0
  %465 = vmatmul.mubr.bf16.gmra.mxu0 %v396
  %v466 = vpop.f32.mrf.mxu0
  %v467 = vadd.f32 0.0, %v466
  %v468 = vpop.f32.mrf.mxu0
  %v469 = vpop.f32.mrf.mxu0
  %v470 = vadd.f32 0.0, %v469
  %v471 = vpop.f32.mrf.mxu0
  %472 = vmatprep.mubr.bf16.mxu0 0
  %473 = vmatmul.mubr.bf16.gmra.mxu0 %v399
  %v474 = vpop.f32.mrf.mxu0
  %v475 = vadd.f32 0.0, %v474
  %v476 = vpop.f32.mrf.mxu0
  %v477 = vpop.f32.mrf.mxu0
  %v478 = vadd.f32 0.0, %v477
  %v479 = vpop.f32.mrf.mxu0
  %480 = vmatprep.mubr.bf16.mxu0 0
  %481 = vmatmul.mubr.bf16.gmra.mxu0 %v402
  %v482 = vpop.f32.mrf.mxu0
  %v483 = vadd.f32 0.0, %v482
  %v484 = vpop.f32.mrf.mxu0
  %v485 = vpop.f32.mrf.mxu0
  %v486 = vadd.f32 0.0, %v485
  %v487 = vpop.f32.mrf.mxu0
  %488 = vmatprep.mubr.bf16.mxu0 0
  %489 = vmatmul.mubr.bf16.gmra.mxu0 %v405
  %v490 = vpop.f32.mrf.mxu0
  %v491 = vadd.f32 0.0, %v490
  %v492 = vpop.f32.mrf.mxu0
  %v493 = vpop.f32.mrf.mxu0
  %v494 = vadd.f32 0.0, %v493
  %v495 = vpop.f32.mrf.mxu0
  %496 = vmatprep.mubr.bf16.mxu0 0
  %497 = vmatmul.mubr.bf16.gmra.mxu0 %v408
  %v498 = vpop.f32.mrf.mxu0
  %v499 = vadd.f32 0.0, %v498
  %v500 = vpop.f32.mrf.mxu0
  %v501 = vpop.f32.mrf.mxu0
  %v502 = vadd.f32 0.0, %v501
  %v503 = vpop.f32.mrf.mxu0
  %504 = vmatprep.mubr.bf16.mxu0 0
  %505 = vmatmul.mubr.bf16.gmra.mxu0 %v411
  %v506 = vpop.f32.mrf.mxu0
  %v507 = vadd.f32 0.0, %v506
  %v508 = vpop.f32.mrf.mxu0
  %v509 = vpop.f32.mrf.mxu0
  %v510 = vadd.f32 0.0, %v509
  %v511 = vpop.f32.mrf.mxu0
  %512 = vdwg.mxu0
  %vm513 = vcmask 523264
  %v514 = vsel %vm513, %v451, 0.0
  %v515 = vsel %vm513, %v454, 0.0
  %v516 = vadd.f32 %v514, %v515
  %v517 = vsel %vm513, %v459, 0.0
  %v518 = vadd.f32 %v516, %v517
  %v519 = vsel %vm513, %v462, 0.0
  %v520 = vadd.f32 %v518, %v519
  %v521 = vsel %vm513, %v467, 0.0
  %v522 = vadd.f32 %v520, %v521
  %v523 = vsel %vm513, %v470, 0.0
  %v524 = vadd.f32 %v522, %v523
  %v525 = vsel %vm513, %v475, 0.0
  %v526 = vadd.f32 %v524, %v525
  %v527 = vsel %vm513, %v478, 0.0
  %v528 = vadd.f32 %v526, %v527
  %v529 = vsel %vm513, %v483, 0.0
  %v530 = vadd.f32 %v528, %v529
  %v531 = vsel %vm513, %v486, 0.0
  %v532 = vadd.f32 %v530, %v531
  %v533 = vsel %vm513, %v491, 0.0
  %v534 = vadd.f32 %v532, %v533
  %v535 = vsel %vm513, %v494, 0.0
  %v536 = vadd.f32 %v534, %v535
  %v537 = vsel %vm513, %v499, 0.0
  %v538 = vadd.f32 %v536, %v537
  %v539 = vsel %vm513, %v502, 0.0
  %v540 = vadd.f32 %v538, %v539
  %v541 = vsel %vm513, %v507, 0.0
  %v542 = vadd.f32 %v540, %v541
  %v543 = vsel %vm513, %v510, 0.0
  %v544 = vadd.f32 %v542, %v543
  %v545 = vrot.slane %v544, 4
  %v546 = vadd.f32 %v544, %v545
  %v547 = vrot.slane %v546, 2
  %v548 = vadd.f32 %v546, %v547
  %v549 = vrot.slane %v548, 1
  %v550 = vadd.f32 %v548, %v549
  %v551 = vmul.f32 %v550, %v238
  %v552 = vsub.f32 %v451, %v551
  %v553 = vsub.f32 %v454, %v551
  %v554 = vsub.f32 %v459, %v551
  %v555 = vsub.f32 %v462, %v551
  %v556 = vsub.f32 %v467, %v551
  %v557 = vsub.f32 %v470, %v551
  %v558 = vsub.f32 %v475, %v551
  %v559 = vsub.f32 %v478, %v551
  %v560 = vsub.f32 %v483, %v551
  %v561 = vsub.f32 %v486, %v551
  %v562 = vsub.f32 %v491, %v551
  %v563 = vsub.f32 %v494, %v551
  %v564 = vsub.f32 %v499, %v551
  %v565 = vsub.f32 %v502, %v551
  %v566 = vsub.f32 %v507, %v551
  %v567 = vsub.f32 %v510, %v551
  %v568 = vmul.f32 %v552, %v552
  %v569 = vmul.f32 %v553, %v553
  %v570 = vmul.f32 %v554, %v554
  %v571 = vmul.f32 %v555, %v555
  %v572 = vmul.f32 %v556, %v556
  %v573 = vmul.f32 %v557, %v557
  %v574 = vmul.f32 %v558, %v558
  %v575 = vmul.f32 %v559, %v559
  %v576 = vmul.f32 %v560, %v560
  %v577 = vmul.f32 %v561, %v561
  %v578 = vmul.f32 %v562, %v562
  %v579 = vmul.f32 %v563, %v563
  %v580 = vmul.f32 %v564, %v564
  %v581 = vmul.f32 %v565, %v565
  %v582 = vmul.f32 %v566, %v566
  %v583 = vmul.f32 %v567, %v567
  %v584 = vsel %vm513, %v568, 0.0
  %v585 = vsel %vm513, %v569, 0.0
  %v586 = vadd.f32 %v584, %v585
  %v587 = vsel %vm513, %v570, 0.0
  %v588 = vadd.f32 %v586, %v587
  %v589 = vsel %vm513, %v571, 0.0
  %v590 = vadd.f32 %v588, %v589
  %v591 = vsel %vm513, %v572, 0.0
  %v592 = vadd.f32 %v590, %v591
  %v593 = vsel %vm513, %v573, 0.0
  %v594 = vadd.f32 %v592, %v593
  %v595 = vsel %vm513, %v574, 0.0
  %v596 = vadd.f32 %v594, %v595
  %v597 = vsel %vm513, %v575, 0.0
  %v598 = vadd.f32 %v596, %v597
  %v599 = vsel %vm513, %v576, 0.0
  %v600 = vadd.f32 %v598, %v599
  %v601 = vsel %vm513, %v577, 0.0
  %v602 = vadd.f32 %v600, %v601
  %v603 = vsel %vm513, %v578, 0.0
  %v604 = vadd.f32 %v602, %v603
  %v605 = vsel %vm513, %v579, 0.0
  %v606 = vadd.f32 %v604, %v605
  %v607 = vsel %vm513, %v580, 0.0
  %v608 = vadd.f32 %v606, %v607
  %v609 = vsel %vm513, %v581, 0.0
  %v610 = vadd.f32 %v608, %v609
  %v611 = vsel %vm513, %v582, 0.0
  %v612 = vadd.f32 %v610, %v611
  %v613 = vsel %vm513, %v583, 0.0
  %v614 = vadd.f32 %v612, %v613
  %v615 = vrot.slane %v614, 4
  %v616 = vadd.f32 %v614, %v615
  %v617 = vrot.slane %v616, 2
  %v618 = vadd.f32 %v616, %v617
  %v619 = vrot.slane %v618, 1
  %v620 = vadd.f32 %v618, %v619
  %v621 = vmul.f32 %v620, %v238
  %v622 = vadd.f32 %v621, 1e-05
  %v623 = vrsqrt.pop %v622
  %v624 = vmul.f32 %v33, %v623
  %v625 = vlaneseq
  %v626 = vshrl.u32 %v625, 7
  %v627 = vsub.s32 2, %v626
  %v628 = vrot.slane %v624, %v627
  %v629 = vmul.f32 %v552, %v628
  %v630 = vmul.f32 %v553, %v628
  %v631 = vmul.f32 %v554, %v628
  %v632 = vmul.f32 %v555, %v628
  %v633 = vmul.f32 %v556, %v628
  %v634 = vmul.f32 %v557, %v628
  %v635 = vmul.f32 %v558, %v628
  %v636 = vmul.f32 %v559, %v628
  %v637 = vmul.f32 %v560, %v628
  %v638 = vmul.f32 %v561, %v628
  %v639 = vmul.f32 %v562, %v628
  %v640 = vmul.f32 %v563, %v628
  %v641 = vmul.f32 %v564, %v628
  %v642 = vmul.f32 %v565, %v628
  %v643 = vmul.f32 %v566, %v628
  %v644 = vmul.f32 %v567, %v628
  %v645 = vlaneseq
  %v646 = vshrl.u32 %v645, 7
  %v647 = vsub.s32 3, %v646
  %v648 = vrot.slane %v33, %v647
  %v649 = vadd.f32 %v629, %v648
  %v650 = vadd.f32 %v630, %v648
  %v651 = vadd.f32 %v631, %v648
  %v652 = vadd.f32 %v632, %v648
  %v653 = vadd.f32 %v633, %v648
  %v654 = vadd.f32 %v634, %v648
  %v655 = vadd.f32 %v635, %v648
  %v656 = vadd.f32 %v636, %v648
  %v657 = vadd.f32 %v637, %v648
  %v658 = vadd.f32 %v638, %v648
  %v659 = vadd.f32 %v639, %v648
  %v660 = vadd.f32 %v640, %v648
  %v661 = vadd.f32 %v641, %v648
  %v662 = vadd.f32 %v642, %v648
  %v663 = vadd.f32 %v643, %v648
  %v664 = vadd.f32 %v644, %v648
  %v665 = vmax.f32 %v649, 0.0
  %v666 = vmax.f32 %v650, 0.0
  %v667 = vmax.f32 %v651, 0.0
  %v668 = vmax.f32 %v652, 0.0
  %v669 = vmax.f32 %v653, 0.0
  %v670 = vmax.f32 %v654, 0.0
  %v671 = vmax.f32 %v655, 0.0
  %v672 = vmax.f32 %v656, 0.0
  %v673 = vmax.f32 %v657, 0.0
  %v674 = vmax.f32 %v658, 0.0
  %v675 = vmax.f32 %v659, 0.0
  %v676 = vmax.f32 %v660, 0.0
  %v677 = vmax.f32 %v661, 0.0
  %v678 = vmax.f32 %v662, 0.0
  %v679 = vmax.f32 %v663, 0.0
  %v680 = vmax.f32 %v664, 0.0
  %v681 = vld [vmem:[%s3] sm:$0xf]
  %v682 = vld [vmem:[%s3 + $0x4] sm:$0xf]
  %v683 = vld [vmem:[%s3 + $0x8] sm:$0xf]
  %v684 = vld [vmem:[%s3 + $0xc] sm:$0xf]
  %v685 = vld [vmem:[%s3 + $0x10] sm:$0xf]
  %v686 = vld [vmem:[%s3 + $0x14] sm:$0xf]
  %v687 = vld [vmem:[%s3 + $0x18] sm:$0xf]
  %v688 = vld [vmem:[%s3 + $0x1c] sm:$0xf]
  %v689 = vpack.c.bf16 %v666, %v665
  %v690 = vpack.c.bf16 %v668, %v667
  %v691 = vpack.c.bf16 %v670, %v669
  %v692 = vpack.c.bf16 %v672, %v671
  %v693 = vpack.c.bf16 %v674, %v673
  %v694 = vpack.c.bf16 %v676, %v675
  %v695 = vpack.c.bf16 %v678, %v677
  %v696 = vpack.c.bf16 %v680, %v679
  %v705 = vunpack.c.l.b16 %v681
  %v706 = vunpack.c.l.b16 %v682
  %v707 = vunpack.c.l.b16 %v683
  %v708 = vunpack.c.l.b16 %v684
  %v709 = vunpack.c.l.b16 %v685
  %v710 = vunpack.c.l.b16 %v686
  %v711 = vunpack.c.l.b16 %v687
  %v712 = vunpack.c.l.b16 %v688
  %v713 = vpack.c.b16 %v706, %v705
  %v714 = vpack.c.b16 %v708, %v707
  %v715 = vpack.c.b16 %v710, %v709
  %v716 = vpack.c.b16 %v712, %v711
  %v722 = vsel %vm513, %v689, 0
  %v725 = vsel %vm513, %v690, 0
  %v728 = vsel %vm513, %v691, 0
  %v731 = vsel %vm513, %v692, 0
  %v734 = vsel %vm513, %v693, 0
  %v737 = vsel %vm513, %v694, 0
  %v740 = vsel %vm513, %v695, 0
  %v743 = vsel %vm513, %v696, 0
  %745 = vmatprep.subr.bf16.mxu0 0
  %746 = vmatpush1.bf16.msra.mxu0 0
  %747 = vmatprep.subr.bf16.mxu0 0
  %748 = vmatpush1.bf16.msra.mxu0 0
  %749 = vmatprep.subr.bf16.mxu0 0
  %750 = vmatpush1.bf16.msra.mxu0 0
  %751 = vmatprep.subr.bf16.mxu0 0
  %752 = vmatpush1.bf16.msra.mxu0 0
  %753 = vmatprep.subr.bf16.mxu0 0
  %754 = vmatpush1.bf16.msra.mxu0 %v716
  %755 = vmatprep.subr.bf16.mxu0 0
  %756 = vmatpush1.bf16.msra.mxu0 %v715
  %757 = vmatprep.subr.bf16.mxu0 0
  %758 = vmatpush1.bf16.msra.mxu0 %v714
  %759 = vmatprep.subr.bf16.mxu0 0
  %760 = vmatpush1.bf16.msra.mxu0 %v713
  %761 = vmatprep.subr.bf16.mxu0 0
  %762 = vmatpush2.bf16.msra.mxu0 0
  %763 = vmatprep.subr.bf16.mxu0 0
  %764 = vmatpush2.bf16.msra.mxu0 0
  %765 = vmatprep.subr.bf16.mxu0 0
  %766 = vmatpush2.bf16.msra.mxu0 0
  %767 = vmatprep.subr.bf16.mxu0 0
  %768 = vmatpush2.bf16.msra.mxu0 0
  %769 = vmatprep.subr.bf16.mxu0 0
  %770 = vmatpush2.bf16.msra.mxu0 0
  %771 = vmatprep.subr.bf16.mxu0 0
  %772 = vmatpush2.bf16.msra.mxu0 0
  %773 = vmatprep.subr.bf16.mxu0 0
  %774 = vmatpush2.bf16.msra.mxu0 0
  %775 = vmatprep.subr.bf16.mxu0 0
  %776 = vmatpush2.bf16.msra.mxu0 0
  %777 = vmatprep.mubr.bf16.mxu0 0
  %778 = vmatmul.mubr.bf16.gmra.mxu0 %v722
  %v779 = vpop.f32.mrf.mxu0
  %v780 = vadd.f32 0.0, %v779
  %v781 = vpop.f32.mrf.mxu0
  %v782 = vpop.f32.mrf.mxu0
  %v783 = vadd.f32 0.0, %v782
  %v784 = vpop.f32.mrf.mxu0
  %785 = vmatprep.mubr.bf16.mxu0 0
  %786 = vmatmul.mubr.bf16.gmra.mxu0 %v725
  %v787 = vpop.f32.mrf.mxu0
  %v788 = vadd.f32 0.0, %v787
  %v789 = vpop.f32.mrf.mxu0
  %v790 = vpop.f32.mrf.mxu0
  %v791 = vadd.f32 0.0, %v790
  %v792 = vpop.f32.mrf.mxu0
  %793 = vmatprep.mubr.bf16.mxu0 0
  %794 = vmatmul.mubr.bf16.gmra.mxu0 %v728
  %v795 = vpop.f32.mrf.mxu0
  %v796 = vadd.f32 0.0, %v795
  %v797 = vpop.f32.mrf.mxu0
  %v798 = vpop.f32.mrf.mxu0
  %v799 = vadd.f32 0.0, %v798
  %v800 = vpop.f32.mrf.mxu0
  %801 = vmatprep.mubr.bf16.mxu0 0
  %802 = vmatmul.mubr.bf16.gmra.mxu0 %v731
  %v803 = vpop.f32.mrf.mxu0
  %v804 = vadd.f32 0.0, %v803
  %v805 = vpop.f32.mrf.mxu0
  %v806 = vpop.f32.mrf.mxu0
  %v807 = vadd.f32 0.0, %v806
  %v808 = vpop.f32.mrf.mxu0
  %809 = vmatprep.mubr.bf16.mxu0 0
  %810 = vmatmul.mubr.bf16.gmra.mxu0 %v734
  %v811 = vpop.f32.mrf.mxu0
  %v812 = vadd.f32 0.0, %v811
  %v813 = vpop.f32.mrf.mxu0
  %v814 = vpop.f32.mrf.mxu0
  %v815 = vadd.f32 0.0, %v814
  %v816 = vpop.f32.mrf.mxu0
  %817 = vmatprep.mubr.bf16.mxu0 0
  %818 = vmatmul.mubr.bf16.gmra.mxu0 %v737
  %v819 = vpop.f32.mrf.mxu0
  %v820 = vadd.f32 0.0, %v819
  %v821 = vpop.f32.mrf.mxu0
  %v822 = vpop.f32.mrf.mxu0
  %v823 = vadd.f32 0.0, %v822
  %v824 = vpop.f32.mrf.mxu0
  %825 = vmatprep.mubr.bf16.mxu0 0
  %826 = vmatmul.mubr.bf16.gmra.mxu0 %v740
  %v827 = vpop.f32.mrf.mxu0
  %v828 = vadd.f32 0.0, %v827
  %v829 = vpop.f32.mrf.mxu0
  %v830 = vpop.f32.mrf.mxu0
  %v831 = vadd.f32 0.0, %v830
  %v832 = vpop.f32.mrf.mxu0
  %833 = vmatprep.mubr.bf16.mxu0 0
  %834 = vmatmul.mubr.bf16.gmra.mxu0 %v743
  %v835 = vpop.f32.mrf.mxu0
  %v836 = vadd.f32 0.0, %v835
  %v837 = vpop.f32.mrf.mxu0
  %v838 = vpop.f32.mrf.mxu0
  %v839 = vadd.f32 0.0, %v838
  %v840 = vpop.f32.mrf.mxu0
  %841 = vdwg.mxu0
  %v842 = vadd.f32 %v780, %v783
  %v843 = vadd.f32 %v842, %v788
  %v844 = vadd.f32 %v843, %v791
  %v845 = vadd.f32 %v844, %v796
  %v846 = vadd.f32 %v845, %v799
  %v847 = vadd.f32 %v846, %v804
  %v848 = vadd.f32 %v847, %v807
  %v849 = vadd.f32 %v848, %v812
  %v850 = vadd.f32 %v849, %v815
  %v851 = vadd.f32 %v850, %v820
  %v852 = vadd.f32 %v851, %v823
  %v853 = vadd.f32 %v852, %v828
  %v854 = vadd.f32 %v853, %v831
  %v855 = vadd.f32 %v854, %v836
  %v856 = vadd.f32 %v855, %v839
  %v857 = vrot.slane %v856, 4
  %v858 = vadd.f32 %v856, %v857
  %v859 = vrot.slane %v858, 2
  %v860 = vadd.f32 %v858, %v859
  %v861 = vrot.slane %v860, 1
  %v862 = vadd.f32 %v860, %v861
  %v863 = vmul.f32 %v862, %v238
  %v864 = vsub.f32 %v780, %v863
  %v865 = vsub.f32 %v783, %v863
  %v866 = vsub.f32 %v788, %v863
  %v867 = vsub.f32 %v791, %v863
  %v868 = vsub.f32 %v796, %v863
  %v869 = vsub.f32 %v799, %v863
  %v870 = vsub.f32 %v804, %v863
  %v871 = vsub.f32 %v807, %v863
  %v872 = vsub.f32 %v812, %v863
  %v873 = vsub.f32 %v815, %v863
  %v874 = vsub.f32 %v820, %v863
  %v875 = vsub.f32 %v823, %v863
  %v876 = vsub.f32 %v828, %v863
  %v877 = vsub.f32 %v831, %v863
  %v878 = vsub.f32 %v836, %v863
  %v879 = vsub.f32 %v839, %v863
  %v880 = vmul.f32 %v864, %v864
  %v881 = vmul.f32 %v865, %v865
  %v882 = vmul.f32 %v866, %v866
  %v883 = vmul.f32 %v867, %v867
  %v884 = vmul.f32 %v868, %v868
  %v885 = vmul.f32 %v869, %v869
  %v886 = vmul.f32 %v870, %v870
  %v887 = vmul.f32 %v871, %v871
  %v888 = vmul.f32 %v872, %v872
  %v889 = vmul.f32 %v873, %v873
  %v890 = vmul.f32 %v874, %v874
  %v891 = vmul.f32 %v875, %v875
  %v892 = vmul.f32 %v876, %v876
  %v893 = vmul.f32 %v877, %v877
  %v894 = vmul.f32 %v878, %v878
  %v895 = vmul.f32 %v879, %v879
  %v896 = vadd.f32 %v880, %v881
  %v897 = vadd.f32 %v896, %v882
  %v898 = vadd.f32 %v897, %v883
  %v899 = vadd.f32 %v898, %v884
  %v900 = vadd.f32 %v899, %v885
  %v901 = vadd.f32 %v900, %v886
  %v902 = vadd.f32 %v901, %v887
  %v903 = vadd.f32 %v902, %v888
  %v904 = vadd.f32 %v903, %v889
  %v905 = vadd.f32 %v904, %v890
  %v906 = vadd.f32 %v905, %v891
  %v907 = vadd.f32 %v906, %v892
  %v908 = vadd.f32 %v907, %v893
  %v909 = vadd.f32 %v908, %v894
  %v910 = vadd.f32 %v909, %v895
  %v911 = vrot.slane %v910, 4
  %v912 = vadd.f32 %v910, %v911
  %v913 = vrot.slane %v912, 2
  %v914 = vadd.f32 %v912, %v913
  %v915 = vrot.slane %v914, 1
  %v916 = vadd.f32 %v914, %v915
  %v917 = vmul.f32 %v916, %v238
  %v918 = vadd.f32 %v917, 1e-05
  %v919 = vrsqrt.pop %v918
  %v920 = vmul.f32 %v33, %v919
  %v921 = vlaneseq
  %v922 = vshrl.u32 %v921, 7
  %v923 = vsub.s32 4, %v922
  %v924 = vrot.slane %v920, %v923
  %v925 = vmul.f32 %v864, %v924
  %v926 = vmul.f32 %v865, %v924
  %v927 = vmul.f32 %v866, %v924
  %v928 = vmul.f32 %v867, %v924
  %v929 = vmul.f32 %v868, %v924
  %v930 = vmul.f32 %v869, %v924
  %v931 = vmul.f32 %v870, %v924
  %v932 = vmul.f32 %v871, %v924
  %v933 = vmul.f32 %v872, %v924
  %v934 = vmul.f32 %v873, %v924
  %v935 = vmul.f32 %v874, %v924
  %v936 = vmul.f32 %v875, %v924
  %v937 = vmul.f32 %v876, %v924
  %v938 = vmul.f32 %v877, %v924
  %v939 = vmul.f32 %v878, %v924
  %v940 = vmul.f32 %v879, %v924
  %v941 = vlaneseq
  %v942 = vshrl.u32 %v941, 7
  %v943 = vsub.s32 5, %v942
  %v944 = vrot.slane %v33, %v943
  %v945 = vadd.f32 %v925, %v944
  %v946 = vadd.f32 %v926, %v944
  %v947 = vadd.f32 %v927, %v944
  %v948 = vadd.f32 %v928, %v944
  %v949 = vadd.f32 %v929, %v944
  %v950 = vadd.f32 %v930, %v944
  %v951 = vadd.f32 %v931, %v944
  %v952 = vadd.f32 %v932, %v944
  %v953 = vadd.f32 %v933, %v944
  %v954 = vadd.f32 %v934, %v944
  %v955 = vadd.f32 %v935, %v944
  %v956 = vadd.f32 %v936, %v944
  %v957 = vadd.f32 %v937, %v944
  %v958 = vadd.f32 %v938, %v944
  %v959 = vadd.f32 %v939, %v944
  %v960 = vadd.f32 %v940, %v944
  %v961 = vmax.f32 %v945, 0.0
  %v962 = vmax.f32 %v946, 0.0
  %v963 = vmax.f32 %v947, 0.0
  %v964 = vmax.f32 %v948, 0.0
  %v965 = vmax.f32 %v949, 0.0
  %v966 = vmax.f32 %v950, 0.0
  %v967 = vmax.f32 %v951, 0.0
  %v968 = vmax.f32 %v952, 0.0
  %v969 = vmax.f32 %v953, 0.0
  %v970 = vmax.f32 %v954, 0.0
  %v971 = vmax.f32 %v955, 0.0
  %v972 = vmax.f32 %v956, 0.0
  %v973 = vmax.f32 %v957, 0.0
  %v974 = vmax.f32 %v958, 0.0
  %v975 = vmax.f32 %v959, 0.0
  %v976 = vmax.f32 %v960, 0.0
  %v977 = vld [vmem:[%s4] sm:$0xff]
  %v978 = vld [vmem:[%s4 + $0x8] sm:$0xff]
  %v979 = vld [vmem:[%s4 + $0x10] sm:$0xff]
  %v980 = vld [vmem:[%s4 + $0x18] sm:$0xff]
  %v981 = vld [vmem:[%s4 + $0x20] sm:$0xff]
  %v982 = vld [vmem:[%s4 + $0x28] sm:$0xff]
  %v983 = vld [vmem:[%s4 + $0x30] sm:$0xff]
  %v984 = vld [vmem:[%s4 + $0x38] sm:$0xff]
  %v985 = vld [vmem:[%s4 + $0x40] sm:$0xff]
  %v986 = vld [vmem:[%s4 + $0x48] sm:$0xff]
  %v987 = vld [vmem:[%s4 + $0x50] sm:$0xff]
  %v988 = vld [vmem:[%s4 + $0x58] sm:$0xff]
  %v989 = vld [vmem:[%s4 + $0x60] sm:$0xff]
  %v990 = vld [vmem:[%s4 + $0x68] sm:$0xff]
  %v991 = vld [vmem:[%s4 + $0x70] sm:$0xff]
  %v992 = vld [vmem:[%s4 + $0x78] sm:$0xff]
  %v993 = vpack.c.bf16 %v962, %v961
  %v994 = vpack.c.bf16 %v964, %v963
  %v995 = vpack.c.bf16 %v966, %v965
  %v996 = vpack.c.bf16 %v968, %v967
  %v997 = vpack.c.bf16 %v970, %v969
  %v998 = vpack.c.bf16 %v972, %v971
  %v999 = vpack.c.bf16 %v974, %v973
  %v1000 = vpack.c.bf16 %v976, %v975
  %v1017 = vunpack.c.l.b16 %v977
  %v1018 = vunpack.c.h.b16 %v977
  %v1019 = vunpack.c.l.b16 %v978
  %v1020 = vunpack.c.h.b16 %v978
  %v1021 = vunpack.c.l.b16 %v979
  %v1022 = vunpack.c.h.b16 %v979
  %v1023 = vunpack.c.l.b16 %v980
  %v1024 = vunpack.c.h.b16 %v980
  %v1025 = vunpack.c.l.b16 %v981
  %v1026 = vunpack.c.h.b16 %v981
  %v1027 = vunpack.c.l.b16 %v982
  %v1028 = vunpack.c.h.b16 %v982
  %v1029 = vunpack.c.l.b16 %v983
  %v1030 = vunpack.c.h.b16 %v983
  %v1031 = vunpack.c.l.b16 %v984
  %v1032 = vunpack.c.h.b16 %v984
  %v1033 = vunpack.c.l.b16 %v985
  %v1034 = vunpack.c.h.b16 %v985
  %v1035 = vunpack.c.l.b16 %v986
  %v1036 = vunpack.c.h.b16 %v986
  %v1037 = vunpack.c.l.b16 %v987
  %v1038 = vunpack.c.h.b16 %v987
  %v1039 = vunpack.c.l.b16 %v988
  %v1040 = vunpack.c.h.b16 %v988
  %v1041 = vunpack.c.l.b16 %v989
  %v1042 = vunpack.c.h.b16 %v989
  %v1043 = vunpack.c.l.b16 %v990
  %v1044 = vunpack.c.h.b16 %v990
  %v1045 = vunpack.c.l.b16 %v991
  %v1046 = vunpack.c.h.b16 %v991
  %v1047 = vunpack.c.l.b16 %v992
  %v1048 = vunpack.c.h.b16 %v992
  %v1049 = vpack.c.b16 %v1019, %v1017
  %v1050 = vpack.c.b16 %v1020, %v1018
  %v1051 = vpack.c.b16 %v1023, %v1021
  %v1052 = vpack.c.b16 %v1024, %v1022
  %v1053 = vpack.c.b16 %v1027, %v1025
  %v1054 = vpack.c.b16 %v1028, %v1026
  %v1055 = vpack.c.b16 %v1031, %v1029
  %v1056 = vpack.c.b16 %v1032, %v1030
  %v1057 = vpack.c.b16 %v1035, %v1033
  %v1058 = vpack.c.b16 %v1036, %v1034
  %v1059 = vpack.c.b16 %v1039, %v1037
  %v1060 = vpack.c.b16 %v1040, %v1038
  %v1061 = vpack.c.b16 %v1043, %v1041
  %v1062 = vpack.c.b16 %v1044, %v1042
  %v1063 = vpack.c.b16 %v1047, %v1045
  %v1064 = vpack.c.b16 %v1048, %v1046
  %1081 = vmatprep.subr.bf16.mxu0 %v1064
  %1082 = vmatpush1.bf16.msra.mxu0 %v1063
  %1083 = vmatprep.subr.bf16.mxu0 %v1062
  %1084 = vmatpush1.bf16.msra.mxu0 %v1061
  %1085 = vmatprep.subr.bf16.mxu0 %v1060
  %1086 = vmatpush1.bf16.msra.mxu0 %v1059
  %1087 = vmatprep.subr.bf16.mxu0 %v1058
  %1088 = vmatpush1.bf16.msra.mxu0 %v1057
  %1089 = vmatprep.subr.bf16.mxu0 %v1056
  %1090 = vmatpush1.bf16.msra.mxu0 %v1055
  %1091 = vmatprep.subr.bf16.mxu0 %v1054
  %1092 = vmatpush1.bf16.msra.mxu0 %v1053
  %1093 = vmatprep.subr.bf16.mxu0 %v1052
  %1094 = vmatpush1.bf16.msra.mxu0 %v1051
  %1095 = vmatprep.subr.bf16.mxu0 %v1050
  %1096 = vmatpush1.bf16.msra.mxu0 %v1049
  %1097 = vmatprep.subr.bf16.mxu0 0
  %1098 = vmatpush2.bf16.msra.mxu0 0
  %1099 = vmatprep.subr.bf16.mxu0 0
  %1100 = vmatpush2.bf16.msra.mxu0 0
  %1101 = vmatprep.subr.bf16.mxu0 0
  %1102 = vmatpush2.bf16.msra.mxu0 0
  %1103 = vmatprep.subr.bf16.mxu0 0
  %1104 = vmatpush2.bf16.msra.mxu0 0
  %1105 = vmatprep.subr.bf16.mxu0 0
  %1106 = vmatpush2.bf16.msra.mxu0 0
  %1107 = vmatprep.subr.bf16.mxu0 0
  %1108 = vmatpush2.bf16.msra.mxu0 0
  %1109 = vmatprep.subr.bf16.mxu0 0
  %1110 = vmatpush2.bf16.msra.mxu0 0
  %1111 = vmatprep.subr.bf16.mxu0 0
  %1112 = vmatpush2.bf16.msra.mxu0 0
  %1113 = vmatprep.mubr.bf16.mxu0 0
  %1114 = vmatmul.mubr.bf16.gmra.mxu0 %v993
  %v1115 = vpop.f32.mrf.mxu0
  %v1116 = vadd.f32 0.0, %v1115
  %v1117 = vpop.f32.mrf.mxu0
  %v1118 = vadd.f32 0.0, %v1117
  %v1119 = vpop.f32.mrf.mxu0
  %v1120 = vadd.f32 0.0, %v1119
  %v1121 = vpop.f32.mrf.mxu0
  %v1122 = vadd.f32 0.0, %v1121
  %1123 = vmatprep.mubr.bf16.mxu0 0
  %1124 = vmatmul.mubr.bf16.gmra.mxu0 %v994
  %v1125 = vpop.f32.mrf.mxu0
  %v1126 = vadd.f32 0.0, %v1125
  %v1127 = vpop.f32.mrf.mxu0
  %v1128 = vadd.f32 0.0, %v1127
  %v1129 = vpop.f32.mrf.mxu0
  %v1130 = vadd.f32 0.0, %v1129
  %v1131 = vpop.f32.mrf.mxu0
  %v1132 = vadd.f32 0.0, %v1131
  %1133 = vmatprep.mubr.bf16.mxu0 0
  %1134 = vmatmul.mubr.bf16.gmra.mxu0 %v995
  %v1135 = vpop.f32.mrf.mxu0
  %v1136 = vadd.f32 0.0, %v1135
  %v1137 = vpop.f32.mrf.mxu0
  %v1138 = vadd.f32 0.0, %v1137
  %v1139 = vpop.f32.mrf.mxu0
  %v1140 = vadd.f32 0.0, %v1139
  %v1141 = vpop.f32.mrf.mxu0
  %v1142 = vadd.f32 0.0, %v1141
  %1143 = vmatprep.mubr.bf16.mxu0 0
  %1144 = vmatmul.mubr.bf16.gmra.mxu0 %v996
  %v1145 = vpop.f32.mrf.mxu0
  %v1146 = vadd.f32 0.0, %v1145
  %v1147 = vpop.f32.mrf.mxu0
  %v1148 = vadd.f32 0.0, %v1147
  %v1149 = vpop.f32.mrf.mxu0
  %v1150 = vadd.f32 0.0, %v1149
  %v1151 = vpop.f32.mrf.mxu0
  %v1152 = vadd.f32 0.0, %v1151
  %1153 = vmatprep.mubr.bf16.mxu0 0
  %1154 = vmatmul.mubr.bf16.gmra.mxu0 %v997
  %v1155 = vpop.f32.mrf.mxu0
  %v1156 = vadd.f32 0.0, %v1155
  %v1157 = vpop.f32.mrf.mxu0
  %v1158 = vadd.f32 0.0, %v1157
  %v1159 = vpop.f32.mrf.mxu0
  %v1160 = vadd.f32 0.0, %v1159
  %v1161 = vpop.f32.mrf.mxu0
  %v1162 = vadd.f32 0.0, %v1161
  %1163 = vmatprep.mubr.bf16.mxu0 0
  %1164 = vmatmul.mubr.bf16.gmra.mxu0 %v998
  %v1165 = vpop.f32.mrf.mxu0
  %v1166 = vadd.f32 0.0, %v1165
  %v1167 = vpop.f32.mrf.mxu0
  %v1168 = vadd.f32 0.0, %v1167
  %v1169 = vpop.f32.mrf.mxu0
  %v1170 = vadd.f32 0.0, %v1169
  %v1171 = vpop.f32.mrf.mxu0
  %v1172 = vadd.f32 0.0, %v1171
  %1173 = vmatprep.mubr.bf16.mxu0 0
  %1174 = vmatmul.mubr.bf16.gmra.mxu0 %v999
  %v1175 = vpop.f32.mrf.mxu0
  %v1176 = vadd.f32 0.0, %v1175
  %v1177 = vpop.f32.mrf.mxu0
  %v1178 = vadd.f32 0.0, %v1177
  %v1179 = vpop.f32.mrf.mxu0
  %v1180 = vadd.f32 0.0, %v1179
  %v1181 = vpop.f32.mrf.mxu0
  %v1182 = vadd.f32 0.0, %v1181
  %1183 = vmatprep.mubr.bf16.mxu0 0
  %1184 = vmatmul.mubr.bf16.gmra.mxu0 %v1000
  %v1185 = vpop.f32.mrf.mxu0
  %v1186 = vadd.f32 0.0, %v1185
  %v1187 = vpop.f32.mrf.mxu0
  %v1188 = vadd.f32 0.0, %v1187
  %v1189 = vpop.f32.mrf.mxu0
  %v1190 = vadd.f32 0.0, %v1189
  %v1191 = vpop.f32.mrf.mxu0
  %v1192 = vadd.f32 0.0, %v1191
  %1193 = vdwg.mxu0
  %v1194 = vadd.f32 %v1116, %v1120
  %v1195 = vadd.f32 %v1194, %v1126
  %v1196 = vadd.f32 %v1195, %v1130
  %v1197 = vadd.f32 %v1196, %v1136
  %v1198 = vadd.f32 %v1197, %v1140
  %v1199 = vadd.f32 %v1198, %v1146
  %v1200 = vadd.f32 %v1199, %v1150
  %v1201 = vadd.f32 %v1200, %v1156
  %v1202 = vadd.f32 %v1201, %v1160
  %v1203 = vadd.f32 %v1202, %v1166
  %v1204 = vadd.f32 %v1203, %v1170
  %v1205 = vadd.f32 %v1204, %v1176
  %v1206 = vadd.f32 %v1205, %v1180
  %v1207 = vadd.f32 %v1206, %v1186
  %v1208 = vadd.f32 %v1207, %v1190
  %v1209 = vrot.slane %v1208, 4
  %v1210 = vadd.f32 %v1208, %v1209
  %v1211 = vrot.slane %v1210, 2
  %v1212 = vadd.f32 %v1210, %v1211
  %v1213 = vrot.slane %v1212, 1
  %v1214 = vadd.f32 %v1212, %v1213
  %v1215 = vadd.f32 %v1118, %v1122
  %v1216 = vadd.f32 %v1215, %v1128
  %v1217 = vadd.f32 %v1216, %v1132
  %v1218 = vadd.f32 %v1217, %v1138
  %v1219 = vadd.f32 %v1218, %v1142
  %v1220 = vadd.f32 %v1219, %v1148
  %v1221 = vadd.f32 %v1220, %v1152
  %v1222 = vadd.f32 %v1221, %v1158
  %v1223 = vadd.f32 %v1222, %v1162
  %v1224 = vadd.f32 %v1223, %v1168
  %v1225 = vadd.f32 %v1224, %v1172
  %v1226 = vadd.f32 %v1225, %v1178
  %v1227 = vadd.f32 %v1226, %v1182
  %v1228 = vadd.f32 %v1227, %v1188
  %v1229 = vadd.f32 %v1228, %v1192
  %v1230 = vrot.slane %v1229, 4
  %v1231 = vadd.f32 %v1229, %v1230
  %v1232 = vrot.slane %v1231, 2
  %v1233 = vadd.f32 %v1231, %v1232
  %v1234 = vrot.slane %v1233, 1
  %v1235 = vadd.f32 %v1233, %v1234
  %v1236 = vmul.f32 %v1214, %v238
  %v1237 = vmul.f32 %v1235, %v238
  %v1238 = vsub.f32 %v1116, %v1236
  %v1239 = vsub.f32 %v1118, %v1237
  %v1240 = vsub.f32 %v1120, %v1236
  %v1241 = vsub.f32 %v1122, %v1237
  %v1242 = vsub.f32 %v1126, %v1236
  %v1243 = vsub.f32 %v1128, %v1237
  %v1244 = vsub.f32 %v1130, %v1236
  %v1245 = vsub.f32 %v1132, %v1237
  %v1246 = vsub.f32 %v1136, %v1236
  %v1247 = vsub.f32 %v1138, %v1237
  %v1248 = vsub.f32 %v1140, %v1236
  %v1249 = vsub.f32 %v1142, %v1237
  %v1250 = vsub.f32 %v1146, %v1236
  %v1251 = vsub.f32 %v1148, %v1237
  %v1252 = vsub.f32 %v1150, %v1236
  %v1253 = vsub.f32 %v1152, %v1237
  %v1254 = vsub.f32 %v1156, %v1236
  %v1255 = vsub.f32 %v1158, %v1237
  %v1256 = vsub.f32 %v1160, %v1236
  %v1257 = vsub.f32 %v1162, %v1237
  %v1258 = vsub.f32 %v1166, %v1236
  %v1259 = vsub.f32 %v1168, %v1237
  %v1260 = vsub.f32 %v1170, %v1236
  %v1261 = vsub.f32 %v1172, %v1237
  %v1262 = vsub.f32 %v1176, %v1236
  %v1263 = vsub.f32 %v1178, %v1237
  %v1264 = vsub.f32 %v1180, %v1236
  %v1265 = vsub.f32 %v1182, %v1237
  %v1266 = vsub.f32 %v1186, %v1236
  %v1267 = vsub.f32 %v1188, %v1237
  %v1268 = vsub.f32 %v1190, %v1236
  %v1269 = vsub.f32 %v1192, %v1237
  %v1270 = vmul.f32 %v1238, %v1238
  %v1271 = vmul.f32 %v1239, %v1239
  %v1272 = vmul.f32 %v1240, %v1240
  %v1273 = vmul.f32 %v1241, %v1241
  %v1274 = vmul.f32 %v1242, %v1242
  %v1275 = vmul.f32 %v1243, %v1243
  %v1276 = vmul.f32 %v1244, %v1244
  %v1277 = vmul.f32 %v1245, %v1245
  %v1278 = vmul.f32 %v1246, %v1246
  %v1279 = vmul.f32 %v1247, %v1247
  %v1280 = vmul.f32 %v1248, %v1248
  %v1281 = vmul.f32 %v1249, %v1249
  %v1282 = vmul.f32 %v1250, %v1250
  %v1283 = vmul.f32 %v1251, %v1251
  %v1284 = vmul.f32 %v1252, %v1252
  %v1285 = vmul.f32 %v1253, %v1253
  %v1286 = vmul.f32 %v1254, %v1254
  %v1287 = vmul.f32 %v1255, %v1255
  %v1288 = vmul.f32 %v1256, %v1256
  %v1289 = vmul.f32 %v1257, %v1257
  %v1290 = vmul.f32 %v1258, %v1258
  %v1291 = vmul.f32 %v1259, %v1259
  %v1292 = vmul.f32 %v1260, %v1260
  %v1293 = vmul.f32 %v1261, %v1261
  %v1294 = vmul.f32 %v1262, %v1262
  %v1295 = vmul.f32 %v1263, %v1263
  %v1296 = vmul.f32 %v1264, %v1264
  %v1297 = vmul.f32 %v1265, %v1265
  %v1298 = vmul.f32 %v1266, %v1266
  %v1299 = vmul.f32 %v1267, %v1267
  %v1300 = vmul.f32 %v1268, %v1268
  %v1301 = vmul.f32 %v1269, %v1269
  %v1302 = vadd.f32 %v1270, %v1272
  %v1303 = vadd.f32 %v1302, %v1274
  %v1304 = vadd.f32 %v1303, %v1276
  %v1305 = vadd.f32 %v1304, %v1278
  %v1306 = vadd.f32 %v1305, %v1280
  %v1307 = vadd.f32 %v1306, %v1282
  %v1308 = vadd.f32 %v1307, %v1284
  %v1309 = vadd.f32 %v1308, %v1286
  %v1310 = vadd.f32 %v1309, %v1288
  %v1311 = vadd.f32 %v1310, %v1290
  %v1312 = vadd.f32 %v1311, %v1292
  %v1313 = vadd.f32 %v1312, %v1294
  %v1314 = vadd.f32 %v1313, %v1296
  %v1315 = vadd.f32 %v1314, %v1298
  %v1316 = vadd.f32 %v1315, %v1300
  %v1317 = vrot.slane %v1316, 4
  %v1318 = vadd.f32 %v1316, %v1317
  %v1319 = vrot.slane %v1318, 2
  %v1320 = vadd.f32 %v1318, %v1319
  %v1321 = vrot.slane %v1320, 1
  %v1322 = vadd.f32 %v1320, %v1321
  %v1323 = vadd.f32 %v1271, %v1273
  %v1324 = vadd.f32 %v1323, %v1275
  %v1325 = vadd.f32 %v1324, %v1277
  %v1326 = vadd.f32 %v1325, %v1279
  %v1327 = vadd.f32 %v1326, %v1281
  %v1328 = vadd.f32 %v1327, %v1283
  %v1329 = vadd.f32 %v1328, %v1285
  %v1330 = vadd.f32 %v1329, %v1287
  %v1331 = vadd.f32 %v1330, %v1289
  %v1332 = vadd.f32 %v1331, %v1291
  %v1333 = vadd.f32 %v1332, %v1293
  %v1334 = vadd.f32 %v1333, %v1295
  %v1335 = vadd.f32 %v1334, %v1297
  %v1336 = vadd.f32 %v1335, %v1299
  %v1337 = vadd.f32 %v1336, %v1301
  %v1338 = vrot.slane %v1337, 4
  %v1339 = vadd.f32 %v1337, %v1338
  %v1340 = vrot.slane %v1339, 2
  %v1341 = vadd.f32 %v1339, %v1340
  %v1342 = vrot.slane %v1341, 1
  %v1343 = vadd.f32 %v1341, %v1342
  %v1344 = vmul.f32 %v1322, %v238
  %v1345 = vmul.f32 %v1343, %v238
  %v1346 = vadd.f32 %v1344, 1e-05
  %v1347 = vadd.f32 %v1345, 1e-05
  %v1348 = vrsqrt.pop %v1346
  %v1349 = vrsqrt.pop %v1347
  %v1350 = vmul.f32 %v33, %v1348
  %v1351 = vmul.f32 %v34, %v1349
  %v1352 = vlaneseq
  %v1353 = vshrl.u32 %v1352, 7
  %v1354 = vsub.s32 6, %v1353
  %v1355 = vrot.slane %v1350, %v1354
  %v1356 = vlaneseq
  %v1357 = vshrl.u32 %v1356, 7
  %v1358 = vsub.s32 6, %v1357
  %v1359 = vrot.slane %v1351, %v1358
  %v1360 = vmul.f32 %v1238, %v1355
  %v1361 = vmul.f32 %v1239, %v1359
  %v1362 = vmul.f32 %v1240, %v1355
  %v1363 = vmul.f32 %v1241, %v1359
  %v1364 = vmul.f32 %v1242, %v1355
  %v1365 = vmul.f32 %v1243, %v1359
  %v1366 = vmul.f32 %v1244, %v1355
  %v1367 = vmul.f32 %v1245, %v1359
  %v1368 = vmul.f32 %v1246, %v1355
  %v1369 = vmul.f32 %v1247, %v1359
  %v1370 = vmul.f32 %v1248, %v1355
  %v1371 = vmul.f32 %v1249, %v1359
  %v1372 = vmul.f32 %v1250, %v1355
  %v1373 = vmul.f32 %v1251, %v1359
  %v1374 = vmul.f32 %v1252, %v1355
  %v1375 = vmul.f32 %v1253, %v1359
  %v1376 = vmul.f32 %v1254, %v1355
  %v1377 = vmul.f32 %v1255, %v1359
  %v1378 = vmul.f32 %v1256, %v1355
  %v1379 = vmul.f32 %v1257, %v1359
  %v1380 = vmul.f32 %v1258, %v1355
  %v1381 = vmul.f32 %v1259, %v1359
  %v1382 = vmul.f32 %v1260, %v1355
  %v1383 = vmul.f32 %v1261, %v1359
  %v1384 = vmul.f32 %v1262, %v1355
  %v1385 = vmul.f32 %v1263, %v1359
  %v1386 = vmul.f32 %v1264, %v1355
  %v1387 = vmul.f32 %v1265, %v1359
  %v1388 = vmul.f32 %v1266, %v1355
  %v1389 = vmul.f32 %v1267, %v1359
  %v1390 = vmul.f32 %v1268, %v1355
  %v1391 = vmul.f32 %v1269, %v1359
  %v1392 = vlaneseq
  %v1393 = vshrl.u32 %v1392, 7
  %v1394 = vsub.s32 7, %v1393
  %v1395 = vrot.slane %v33, %v1394
  %v1396 = vlaneseq
  %v1397 = vshrl.u32 %v1396, 7
  %v1398 = vsub.s32 7, %v1397
  %v1399 = vrot.slane %v34, %v1398
  %v1400 = vadd.f32 %v1360, %v1395
  %v1401 = vadd.f32 %v1361, %v1399
  %v1402 = vadd.f32 %v1362, %v1395
  %v1403 = vadd.f32 %v1363, %v1399
  %v1404 = vadd.f32 %v1364, %v1395
  %v1405 = vadd.f32 %v1365, %v1399
  %v1406 = vadd.f32 %v1366, %v1395
  %v1407 = vadd.f32 %v1367, %v1399
  %v1408 = vadd.f32 %v1368, %v1395
  %v1409 = vadd.f32 %v1369, %v1399
  %v1410 = vadd.f32 %v1370, %v1395
  %v1411 = vadd.f32 %v1371, %v1399
  %v1412 = vadd.f32 %v1372, %v1395
  %v1413 = vadd.f32 %v1373, %v1399
  %v1414 = vadd.f32 %v1374, %v1395
  %v1415 = vadd.f32 %v1375, %v1399
  %v1416 = vadd.f32 %v1376, %v1395
  %v1417 = vadd.f32 %v1377, %v1399
  %v1418 = vadd.f32 %v1378, %v1395
  %v1419 = vadd.f32 %v1379, %v1399
  %v1420 = vadd.f32 %v1380, %v1395
  %v1421 = vadd.f32 %v1381, %v1399
  %v1422 = vadd.f32 %v1382, %v1395
  %v1423 = vadd.f32 %v1383, %v1399
  %v1424 = vadd.f32 %v1384, %v1395
  %v1425 = vadd.f32 %v1385, %v1399
  %v1426 = vadd.f32 %v1386, %v1395
  %v1427 = vadd.f32 %v1387, %v1399
  %v1428 = vadd.f32 %v1388, %v1395
  %v1429 = vadd.f32 %v1389, %v1399
  %v1430 = vadd.f32 %v1390, %v1395
  %v1431 = vadd.f32 %v1391, %v1399
  %v1432 = vmax.f32 %v1400, 0.0
  %v1433 = vmax.f32 %v1401, 0.0
  %v1434 = vmax.f32 %v1402, 0.0
  %v1435 = vmax.f32 %v1403, 0.0
  %v1436 = vmax.f32 %v1404, 0.0
  %v1437 = vmax.f32 %v1405, 0.0
  %v1438 = vmax.f32 %v1406, 0.0
  %v1439 = vmax.f32 %v1407, 0.0
  %v1440 = vmax.f32 %v1408, 0.0
  %v1441 = vmax.f32 %v1409, 0.0
  %v1442 = vmax.f32 %v1410, 0.0
  %v1443 = vmax.f32 %v1411, 0.0
  %v1444 = vmax.f32 %v1412, 0.0
  %v1445 = vmax.f32 %v1413, 0.0
  %v1446 = vmax.f32 %v1414, 0.0
  %v1447 = vmax.f32 %v1415, 0.0
  %v1448 = vmax.f32 %v1416, 0.0
  %v1449 = vmax.f32 %v1417, 0.0
  %v1450 = vmax.f32 %v1418, 0.0
  %v1451 = vmax.f32 %v1419, 0.0
  %v1452 = vmax.f32 %v1420, 0.0
  %v1453 = vmax.f32 %v1421, 0.0
  %v1454 = vmax.f32 %v1422, 0.0
  %v1455 = vmax.f32 %v1423, 0.0
  %v1456 = vmax.f32 %v1424, 0.0
  %v1457 = vmax.f32 %v1425, 0.0
  %v1458 = vmax.f32 %v1426, 0.0
  %v1459 = vmax.f32 %v1427, 0.0
  %v1460 = vmax.f32 %v1428, 0.0
  %v1461 = vmax.f32 %v1429, 0.0
  %v1462 = vmax.f32 %v1430, 0.0
  %v1463 = vmax.f32 %v1431, 0.0
  %v1464 = vld [vmem:[%s5] sm:$0xff]
  %v1465 = vld [vmem:[%s5 + $0x8] sm:$0xff]
  %v1466 = vld [vmem:[%s5 + $0x10] sm:$0xff]
  %v1467 = vld [vmem:[%s5 + $0x18] sm:$0xff]
  %v1468 = vld [vmem:[%s5 + $0x20] sm:$0xff]
  %v1469 = vld [vmem:[%s5 + $0x28] sm:$0xff]
  %v1470 = vld [vmem:[%s5 + $0x30] sm:$0xff]
  %v1471 = vld [vmem:[%s5 + $0x38] sm:$0xff]
  %v1472 = vld [vmem:[%s5 + $0x40] sm:$0xff]
  %v1473 = vld [vmem:[%s5 + $0x48] sm:$0xff]
  %v1474 = vld [vmem:[%s5 + $0x50] sm:$0xff]
  %v1475 = vld [vmem:[%s5 + $0x58] sm:$0xff]
  %v1476 = vld [vmem:[%s5 + $0x60] sm:$0xff]
  %v1477 = vld [vmem:[%s5 + $0x68] sm:$0xff]
  %v1478 = vld [vmem:[%s5 + $0x70] sm:$0xff]
  %v1479 = vld [vmem:[%s5 + $0x78] sm:$0xff]
  %v1480 = vld [vmem:[%s5 + $0x80] sm:$0xff]
  %v1481 = vld [vmem:[%s5 + $0x88] sm:$0xff]
  %v1482 = vld [vmem:[%s5 + $0x90] sm:$0xff]
  %v1483 = vld [vmem:[%s5 + $0x98] sm:$0xff]
  %v1484 = vld [vmem:[%s5 + $0xa0] sm:$0xff]
  %v1485 = vld [vmem:[%s5 + $0xa8] sm:$0xff]
  %v1486 = vld [vmem:[%s5 + $0xb0] sm:$0xff]
  %v1487 = vld [vmem:[%s5 + $0xb8] sm:$0xff]
  %v1488 = vld [vmem:[%s5 + $0xc0] sm:$0xff]
  %v1489 = vld [vmem:[%s5 + $0xc8] sm:$0xff]
  %v1490 = vld [vmem:[%s5 + $0xd0] sm:$0xff]
  %v1491 = vld [vmem:[%s5 + $0xd8] sm:$0xff]
  %v1492 = vld [vmem:[%s5 + $0xe0] sm:$0xff]
  %v1493 = vld [vmem:[%s5 + $0xe8] sm:$0xff]
  %v1494 = vld [vmem:[%s5 + $0xf0] sm:$0xff]
  %v1495 = vld [vmem:[%s5 + $0xf8] sm:$0xff]
  %v1496 = vld [vmem:[%s5 + $0x100] sm:$0xff]
  %v1497 = vld [vmem:[%s5 + $0x108] sm:$0xff]
  %v1498 = vld [vmem:[%s5 + $0x110] sm:$0xff]
  %v1499 = vld [vmem:[%s5 + $0x118] sm:$0xff]
  %v1500 = vld [vmem:[%s5 + $0x120] sm:$0xff]
  %v1501 = vld [vmem:[%s5 + $0x128] sm:$0xff]
  %v1502 = vld [vmem:[%s5 + $0x130] sm:$0xff]
  %v1503 = vld [vmem:[%s5 + $0x138] sm:$0xff]
  %v1504 = vld [vmem:[%s5 + $0x140] sm:$0xff]
  %v1505 = vld [vmem:[%s5 + $0x148] sm:$0xff]
  %v1506 = vld [vmem:[%s5 + $0x150] sm:$0xff]
  %v1507 = vld [vmem:[%s5 + $0x158] sm:$0xff]
  %v1508 = vld [vmem:[%s5 + $0x160] sm:$0xff]
  %v1509 = vld [vmem:[%s5 + $0x168] sm:$0xff]
  %v1510 = vld [vmem:[%s5 + $0x170] sm:$0xff]
  %v1511 = vld [vmem:[%s5 + $0x178] sm:$0xff]
  %v1512 = vld [vmem:[%s5 + $0x180] sm:$0xff]
  %v1513 = vld [vmem:[%s5 + $0x188] sm:$0xff]
  %v1514 = vld [vmem:[%s5 + $0x190] sm:$0xff]
  %v1515 = vld [vmem:[%s5 + $0x198] sm:$0xff]
  %v1516 = vld [vmem:[%s5 + $0x1a0] sm:$0xff]
  %v1517 = vld [vmem:[%s5 + $0x1a8] sm:$0xff]
  %v1518 = vld [vmem:[%s5 + $0x1b0] sm:$0xff]
  %v1519 = vld [vmem:[%s5 + $0x1b8] sm:$0xff]
  %v1520 = vld [vmem:[%s5 + $0x1c0] sm:$0xff]
  %v1521 = vld [vmem:[%s5 + $0x1c8] sm:$0xff]
  %v1522 = vld [vmem:[%s5 + $0x1d0] sm:$0xff]
  %v1523 = vld [vmem:[%s5 + $0x1d8] sm:$0xff]
  %v1524 = vld [vmem:[%s5 + $0x1e0] sm:$0xff]
  %v1525 = vld [vmem:[%s5 + $0x1e8] sm:$0xff]
  %v1526 = vld [vmem:[%s5 + $0x1f0] sm:$0xff]
  %v1527 = vld [vmem:[%s5 + $0x1f8] sm:$0xff]
  %v1528 = vpack.c.bf16 %v1434, %v1432
  %v1529 = vpack.c.bf16 %v1435, %v1433
  %v1530 = vpack.c.bf16 %v1438, %v1436
  %v1531 = vpack.c.bf16 %v1439, %v1437
  %v1532 = vpack.c.bf16 %v1442, %v1440
  %v1533 = vpack.c.bf16 %v1443, %v1441
  %v1534 = vpack.c.bf16 %v1446, %v1444
  %v1535 = vpack.c.bf16 %v1447, %v1445
  %v1536 = vpack.c.bf16 %v1450, %v1448
  %v1537 = vpack.c.bf16 %v1451, %v1449
  %v1538 = vpack.c.bf16 %v1454, %v1452
  %v1539 = vpack.c.bf16 %v1455, %v1453
  %v1540 = vpack.c.bf16 %v1458, %v1456
  %v1541 = vpack.c.bf16 %v1459, %v1457
  %v1542 = vpack.c.bf16 %v1462, %v1460
  %v1543 = vpack.c.bf16 %v1463, %v1461
  %v1608 = vunpack.c.l.b16 %v1464
  %v1609 = vunpack.c.h.b16 %v1464
  %v1610 = vunpack.c.l.b16 %v1465
  %v1611 = vunpack.c.h.b16 %v1465
  %v1612 = vunpack.c.l.b16 %v1466
  %v1613 = vunpack.c.h.b16 %v1466
  %v1614 = vunpack.c.l.b16 %v1467
  %v1615 = vunpack.c.h.b16 %v1467
  %v1616 = vunpack.c.l.b16 %v1468
  %v1617 = vunpack.c.h.b16 %v1468
  %v1618 = vunpack.c.l.b16 %v1469
  %v1619 = vunpack.c.h.b16 %v1469
  %v1620 = vunpack.c.l.b16 %v1470
  %v1621 = vunpack.c.h.b16 %v1470
  %v1622 = vunpack.c.l.b16 %v1471
  %v1623 = vunpack.c.h.b16 %v1471
  %v1624 = vunpack.c.l.b16 %v1472
  %v1625 = vunpack.c.h.b16 %v1472
  %v1626 = vunpack.c.l.b16 %v1473
  %v1627 = vunpack.c.h.b16 %v1473
  %v1628 = vunpack.c.l.b16 %v1474
  %v1629 = vunpack.c.h.b16 %v1474
  %v1630 = vunpack.c.l.b16 %v1475
  %v1631 = vunpack.c.h.b16 %v1475
  %v1632 = vunpack.c.l.b16 %v1476
  %v1633 = vunpack.c.h.b16 %v1476
  %v1634 = vunpack.c.l.b16 %v1477
  %v1635 = vunpack.c.h.b16 %v1477
  %v1636 = vunpack.c.l.b16 %v1478
  %v1637 = vunpack.c.h.b16 %v1478
  %v1638 = vunpack.c.l.b16 %v1479
  %v1639 = vunpack.c.h.b16 %v1479
  %v1640 = vunpack.c.l.b16 %v1480
  %v1641 = vunpack.c.h.b16 %v1480
  %v1642 = vunpack.c.l.b16 %v1481
  %v1643 = vunpack.c.h.b16 %v1481
  %v1644 = vunpack.c.l.b16 %v1482
  %v1645 = vunpack.c.h.b16 %v1482
  %v1646 = vunpack.c.l.b16 %v1483
  %v1647 = vunpack.c.h.b16 %v1483
  %v1648 = vunpack.c.l.b16 %v1484
  %v1649 = vunpack.c.h.b16 %v1484
  %v1650 = vunpack.c.l.b16 %v1485
  %v1651 = vunpack.c.h.b16 %v1485
  %v1652 = vunpack.c.l.b16 %v1486
  %v1653 = vunpack.c.h.b16 %v1486
  %v1654 = vunpack.c.l.b16 %v1487
  %v1655 = vunpack.c.h.b16 %v1487
  %v1656 = vunpack.c.l.b16 %v1488
  %v1657 = vunpack.c.h.b16 %v1488
  %v1658 = vunpack.c.l.b16 %v1489
  %v1659 = vunpack.c.h.b16 %v1489
  %v1660 = vunpack.c.l.b16 %v1490
  %v1661 = vunpack.c.h.b16 %v1490
  %v1662 = vunpack.c.l.b16 %v1491
  %v1663 = vunpack.c.h.b16 %v1491
  %v1664 = vunpack.c.l.b16 %v1492
  %v1665 = vunpack.c.h.b16 %v1492
  %v1666 = vunpack.c.l.b16 %v1493
  %v1667 = vunpack.c.h.b16 %v1493
  %v1668 = vunpack.c.l.b16 %v1494
  %v1669 = vunpack.c.h.b16 %v1494
  %v1670 = vunpack.c.l.b16 %v1495
  %v1671 = vunpack.c.h.b16 %v1495
  %v1672 = vunpack.c.l.b16 %v1496
  %v1673 = vunpack.c.h.b16 %v1496
  %v1674 = vunpack.c.l.b16 %v1497
  %v1675 = vunpack.c.h.b16 %v1497
  %v1676 = vunpack.c.l.b16 %v1498
  %v1677 = vunpack.c.h.b16 %v1498
  %v1678 = vunpack.c.l.b16 %v1499
  %v1679 = vunpack.c.h.b16 %v1499
  %v1680 = vunpack.c.l.b16 %v1500
  %v1681 = vunpack.c.h.b16 %v1500
  %v1682 = vunpack.c.l.b16 %v1501
  %v1683 = vunpack.c.h.b16 %v1501
  %v1684 = vunpack.c.l.b16 %v1502
  %v1685 = vunpack.c.h.b16 %v1502
  %v1686 = vunpack.c.l.b16 %v1503
  %v1687 = vunpack.c.h.b16 %v1503
  %v1688 = vunpack.c.l.b16 %v1504
  %v1689 = vunpack.c.h.b16 %v1504
  %v1690 = vunpack.c.l.b16 %v1505
  %v1691 = vunpack.c.h.b16 %v1505
  %v1692 = vunpack.c.l.b16 %v1506
  %v1693 = vunpack.c.h.b16 %v1506
  %v1694 = vunpack.c.l.b16 %v1507
  %v1695 = vunpack.c.h.b16 %v1507
  %v1696 = vunpack.c.l.b16 %v1508
  %v1697 = vunpack.c.h.b16 %v1508
  %v1698 = vunpack.c.l.b16 %v1509
  %v1699 = vunpack.c.h.b16 %v1509
  %v1700 = vunpack.c.l.b16 %v1510
  %v1701 = vunpack.c.h.b16 %v1510
  %v1702 = vunpack.c.l.b16 %v1511
  %v1703 = vunpack.c.h.b16 %v1511
  %v1704 = vunpack.c.l.b16 %v1512
  %v1705 = vunpack.c.h.b16 %v1512
  %v1706 = vunpack.c.l.b16 %v1513
  %v1707 = vunpack.c.h.b16 %v1513
  %v1708 = vunpack.c.l.b16 %v1514
  %v1709 = vunpack.c.h.b16 %v1514
  %v1710 = vunpack.c.l.b16 %v1515
  %v1711 = vunpack.c.h.b16 %v1515
  %v1712 = vunpack.c.l.b16 %v1516
  %v1713 = vunpack.c.h.b16 %v1516
  %v1714 = vunpack.c.l.b16 %v1517
  %v1715 = vunpack.c.h.b16 %v1517
  %v1716 = vunpack.c.l.b16 %v1518
  %v1717 = vunpack.c.h.b16 %v1518
  %v1718 = vunpack.c.l.b16 %v1519
  %v1719 = vunpack.c.h.b16 %v1519
  %v1720 = vunpack.c.l.b16 %v1520
  %v1721 = vunpack.c.h.b16 %v1520
  %v1722 = vunpack.c.l.b16 %v1521
  %v1723 = vunpack.c.h.b16 %v1521
  %v1724 = vunpack.c.l.b16 %v1522
  %v1725 = vunpack.c.h.b16 %v1522
  %v1726 = vunpack.c.l.b16 %v1523
  %v1727 = vunpack.c.h.b16 %v1523
  %v1728 = vunpack.c.l.b16 %v1524
  %v1729 = vunpack.c.h.b16 %v1524
  %v1730 = vunpack.c.l.b16 %v1525
  %v1731 = vunpack.c.h.b16 %v1525
  %v1732 = vunpack.c.l.b16 %v1526
  %v1733 = vunpack.c.h.b16 %v1526
  %v1734 = vunpack.c.l.b16 %v1527
  %v1735 = vunpack.c.h.b16 %v1527
  %v1736 = vpack.c.b16 %v1612, %v1608
  %v1737 = vpack.c.b16 %v1613, %v1609
  %v1738 = vpack.c.b16 %v1614, %v1610
  %v1739 = vpack.c.b16 %v1615, %v1611
  %v1740 = vpack.c.b16 %v1620, %v1616
  %v1741 = vpack.c.b16 %v1621, %v1617
  %v1742 = vpack.c.b16 %v1622, %v1618
  %v1743 = vpack.c.b16 %v1623, %v1619
  %v1744 = vpack.c.b16 %v1628, %v1624
  %v1745 = vpack.c.b16 %v1629, %v1625
  %v1746 = vpack.c.b16 %v1630, %v1626
  %v1747 = vpack.c.b16 %v1631, %v1627
  %v1748 = vpack.c.b16 %v1636, %v1632
  %v1749 = vpack.c.b16 %v1637, %v1633
  %v1750 = vpack.c.b16 %v1638, %v1634
  %v1751 = vpack.c.b16 %v1639, %v1635
  %v1752 = vpack.c.b16 %v1644, %v1640
  %v1753 = vpack.c.b16 %v1645, %v1641
  %v1754 = vpack.c.b16 %v1646, %v1642
  %v1755 = vpack.c.b16 %v1647, %v1643
  %v1756 = vpack.c.b16 %v1652, %v1648
  %v1757 = vpack.c.b16 %v1653, %v1649
  %v1758 = vpack.c.b16 %v1654, %v1650
  %v1759 = vpack.c.b16 %v1655, %v1651
  %v1760 = vpack.c.b16 %v1660, %v1656
  %v1761 = vpack.c.b16 %v1661, %v1657
  %v1762 = vpack.c.b16 %v1662, %v1658
  %v1763 = vpack.c.b16 %v1663, %v1659
  %v1764 = vpack.c.b16 %v1668, %v1664
  %v1765 = vpack.c.b16 %v1669, %v1665
  %v1766 = vpack.c.b16 %v1670, %v1666
  %v1767 = vpack.c.b16 %v1671, %v1667
  %v1768 = vpack.c.b16 %v1676, %v1672
  %v1769 = vpack.c.b16 %v1677, %v1673
  %v1770 = vpack.c.b16 %v1678, %v1674
  %v1771 = vpack.c.b16 %v1679, %v1675
  %v1772 = vpack.c.b16 %v1684, %v1680
  %v1773 = vpack.c.b16 %v1685, %v1681
  %v1774 = vpack.c.b16 %v1686, %v1682
  %v1775 = vpack.c.b16 %v1687, %v1683
  %v1776 = vpack.c.b16 %v1692, %v1688
  %v1777 = vpack.c.b16 %v1693, %v1689
  %v1778 = vpack.c.b16 %v1694, %v1690
  %v1779 = vpack.c.b16 %v1695, %v1691
  %v1780 = vpack.c.b16 %v1700, %v1696
  %v1781 = vpack.c.b16 %v1701, %v1697
  %v1782 = vpack.c.b16 %v1702, %v1698
  %v1783 = vpack.c.b16 %v1703, %v1699
  %v1784 = vpack.c.b16 %v1708, %v1704
  %v1785 = vpack.c.b16 %v1709, %v1705
  %v1786 = vpack.c.b16 %v1710, %v1706
  %v1787 = vpack.c.b16 %v1711, %v1707
  %v1788 = vpack.c.b16 %v1716, %v1712
  %v1789 = vpack.c.b16 %v1717, %v1713
  %v1790 = vpack.c.b16 %v1718, %v1714
  %v1791 = vpack.c.b16 %v1719, %v1715
  %v1792 = vpack.c.b16 %v1724, %v1720
  %v1793 = vpack.c.b16 %v1725, %v1721
  %v1794 = vpack.c.b16 %v1726, %v1722
  %v1795 = vpack.c.b16 %v1727, %v1723
  %v1796 = vpack.c.b16 %v1732, %v1728
  %v1797 = vpack.c.b16 %v1733, %v1729
  %v1798 = vpack.c.b16 %v1734, %v1730
  %v1799 = vpack.c.b16 %v1735, %v1731
  %1864 = vmatprep.subr.bf16.mxu0 %v1765
  %1865 = vmatpush1.bf16.msra.mxu0 %v1764
  %1866 = vmatprep.subr.bf16.mxu0 %v1761
  %1867 = vmatpush1.bf16.msra.mxu0 %v1760
  %1868 = vmatprep.subr.bf16.mxu0 %v1757
  %1869 = vmatpush1.bf16.msra.mxu0 %v1756
  %1870 = vmatprep.subr.bf16.mxu0 %v1753
  %1871 = vmatpush1.bf16.msra.mxu0 %v1752
  %1872 = vmatprep.subr.bf16.mxu0 %v1749
  %1873 = vmatpush1.bf16.msra.mxu0 %v1748
  %1874 = vmatprep.subr.bf16.mxu0 %v1745
  %1875 = vmatpush1.bf16.msra.mxu0 %v1744
  %1876 = vmatprep.subr.bf16.mxu0 %v1741
  %1877 = vmatpush1.bf16.msra.mxu0 %v1740
  %1878 = vmatprep.subr.bf16.mxu0 %v1737
  %1879 = vmatpush1.bf16.msra.mxu0 %v1736
  %1880 = vmatprep.subr.bf16.mxu0 %v1797
  %1881 = vmatpush2.bf16.msra.mxu0 %v1796
  %1882 = vmatprep.subr.bf16.mxu0 %v1793
  %1883 = vmatpush2.bf16.msra.mxu0 %v1792
  %1884 = vmatprep.subr.bf16.mxu0 %v1789
  %1885 = vmatpush2.bf16.msra.mxu0 %v1788
  %1886 = vmatprep.subr.bf16.mxu0 %v1785
  %1887 = vmatpush2.bf16.msra.mxu0 %v1784
  %1888 = vmatprep.subr.bf16.mxu0 %v1781
  %1889 = vmatpush2.bf16.msra.mxu0 %v1780
  %1890 = vmatprep.subr.bf16.mxu0 %v1777
  %1891 = vmatpush2.bf16.msra.mxu0 %v1776
  %1892 = vmatprep.subr.bf16.mxu0 %v1773
  %1893 = vmatpush2.bf16.msra.mxu0 %v1772
  %1894 = vmatprep.subr.bf16.mxu0 %v1769
  %1895 = vmatpush2.bf16.msra.mxu0 %v1768
  %1896 = vmatprep.mubr.bf16.mxu0 %v1529
  %1897 = vmatmul.mubr.bf16.gmra.mxu0 %v1528
  %v1898 = vpop.f32.mrf.mxu0
  %v1899 = vadd.f32 0.0, %v1898
  %v1900 = vpop.f32.mrf.mxu0
  %v1901 = vadd.f32 0.0, %v1900
  %v1902 = vpop.f32.mrf.mxu0
  %v1903 = vadd.f32 0.0, %v1902
  %v1904 = vpop.f32.mrf.mxu0
  %v1905 = vadd.f32 0.0, %v1904
  %1906 = vmatprep.mubr.bf16.mxu0 %v1531
  %1907 = vmatmul.mubr.bf16.gmra.mxu0 %v1530
  %v1908 = vpop.f32.mrf.mxu0
  %v1909 = vadd.f32 0.0, %v1908
  %v1910 = vpop.f32.mrf.mxu0
  %v1911 = vadd.f32 0.0, %v1910
  %v1912 = vpop.f32.mrf.mxu0
  %v1913 = vadd.f32 0.0, %v1912
  %v1914 = vpop.f32.mrf.mxu0
  %v1915 = vadd.f32 0.0, %v1914
  %1916 = vmatprep.mubr.bf16.mxu0 %v1533
  %1917 = vmatmul.mubr.bf16.gmra.mxu0 %v1532
  %v1918 = vpop.f32.mrf.mxu0
  %v1919 = vadd.f32 0.0, %v1918
  %v1920 = vpop.f32.mrf.mxu0
  %v1921 = vadd.f32 0.0, %v1920
  %v1922 = vpop.f32.mrf.mxu0
  %v1923 = vadd.f32 0.0, %v1922
  %v1924 = vpop.f32.mrf.mxu0
  %v1925 = vadd.f32 0.0, %v1924
  %1926 = vmatprep.mubr.bf16.mxu0 %v1535
  %1927 = vmatmul.mubr.bf16.gmra.mxu0 %v1534
  %v1928 = vpop.f32.mrf.mxu0
  %v1929 = vadd.f32 0.0, %v1928
  %v1930 = vpop.f32.mrf.mxu0
  %v1931 = vadd.f32 0.0, %v1930
  %v1932 = vpop.f32.mrf.mxu0
  %v1933 = vadd.f32 0.0, %v1932
  %v1934 = vpop.f32.mrf.mxu0
  %v1935 = vadd.f32 0.0, %v1934
  %1936 = vmatprep.mubr.bf16.mxu0 %v1537
  %1937 = vmatmul.mubr.bf16.gmra.mxu0 %v1536
  %v1938 = vpop.f32.mrf.mxu0
  %v1939 = vadd.f32 0.0, %v1938
  %v1940 = vpop.f32.mrf.mxu0
  %v1941 = vadd.f32 0.0, %v1940
  %v1942 = vpop.f32.mrf.mxu0
  %v1943 = vadd.f32 0.0, %v1942
  %v1944 = vpop.f32.mrf.mxu0
  %v1945 = vadd.f32 0.0, %v1944
  %1946 = vmatprep.mubr.bf16.mxu0 %v1539
  %1947 = vmatmul.mubr.bf16.gmra.mxu0 %v1538
  %v1948 = vpop.f32.mrf.mxu0
  %v1949 = vadd.f32 0.0, %v1948
  %v1950 = vpop.f32.mrf.mxu0
  %v1951 = vadd.f32 0.0, %v1950
  %v1952 = vpop.f32.mrf.mxu0
  %v1953 = vadd.f32 0.0, %v1952
  %v1954 = vpop.f32.mrf.mxu0
  %v1955 = vadd.f32 0.0, %v1954
  %1956 = vmatprep.mubr.bf16.mxu0 %v1541
  %1957 = vmatmul.mubr.bf16.gmra.mxu0 %v1540
  %v1958 = vpop.f32.mrf.mxu0
  %v1959 = vadd.f32 0.0, %v1958
  %v1960 = vpop.f32.mrf.mxu0
  %v1961 = vadd.f32 0.0, %v1960
  %v1962 = vpop.f32.mrf.mxu0
  %v1963 = vadd.f32 0.0, %v1962
  %v1964 = vpop.f32.mrf.mxu0
  %v1965 = vadd.f32 0.0, %v1964
  %1966 = vmatprep.mubr.bf16.mxu0 %v1543
  %1967 = vmatmul.mubr.bf16.gmra.mxu0 %v1542
  %v1968 = vpop.f32.mrf.mxu0
  %v1969 = vadd.f32 0.0, %v1968
  %v1970 = vpop.f32.mrf.mxu0
  %v1971 = vadd.f32 0.0, %v1970
  %v1972 = vpop.f32.mrf.mxu0
  %v1973 = vadd.f32 0.0, %v1972
  %v1974 = vpop.f32.mrf.mxu0
  %v1975 = vadd.f32 0.0, %v1974
  %1976 = vdwg.mxu0
  %1977 = vmatprep.subr.bf16.mxu0 %v1767
  %1978 = vmatpush1.bf16.msra.mxu0 %v1766
  %1979 = vmatprep.subr.bf16.mxu0 %v1763
  %1980 = vmatpush1.bf16.msra.mxu0 %v1762
  %1981 = vmatprep.subr.bf16.mxu0 %v1759
  %1982 = vmatpush1.bf16.msra.mxu0 %v1758
  %1983 = vmatprep.subr.bf16.mxu0 %v1755
  %1984 = vmatpush1.bf16.msra.mxu0 %v1754
  %1985 = vmatprep.subr.bf16.mxu0 %v1751
  %1986 = vmatpush1.bf16.msra.mxu0 %v1750
  %1987 = vmatprep.subr.bf16.mxu0 %v1747
  %1988 = vmatpush1.bf16.msra.mxu0 %v1746
  %1989 = vmatprep.subr.bf16.mxu0 %v1743
  %1990 = vmatpush1.bf16.msra.mxu0 %v1742
  %1991 = vmatprep.subr.bf16.mxu0 %v1739
  %1992 = vmatpush1.bf16.msra.mxu0 %v1738
  %1993 = vmatprep.subr.bf16.mxu0 %v1799
  %1994 = vmatpush2.bf16.msra.mxu0 %v1798
  %1995 = vmatprep.subr.bf16.mxu0 %v1795
  %1996 = vmatpush2.bf16.msra.mxu0 %v1794
  %1997 = vmatprep.subr.bf16.mxu0 %v1791
  %1998 = vmatpush2.bf16.msra.mxu0 %v1790
  %1999 = vmatprep.subr.bf16.mxu0 %v1787
  %2000 = vmatpush2.bf16.msra.mxu0 %v1786
  %2001 = vmatprep.subr.bf16.mxu0 %v1783
  %2002 = vmatpush2.bf16.msra.mxu0 %v1782
  %2003 = vmatprep.subr.bf16.mxu0 %v1779
  %2004 = vmatpush2.bf16.msra.mxu0 %v1778
  %2005 = vmatprep.subr.bf16.mxu0 %v1775
  %2006 = vmatpush2.bf16.msra.mxu0 %v1774
  %2007 = vmatprep.subr.bf16.mxu0 %v1771
  %2008 = vmatpush2.bf16.msra.mxu0 %v1770
  %2009 = vmatprep.mubr.bf16.mxu0 %v1529
  %2010 = vmatmul.mubr.bf16.gmra.mxu0 %v1528
  %v2011 = vpop.f32.mrf.mxu0
  %v2012 = vadd.f32 0.0, %v2011
  %v2013 = vpop.f32.mrf.mxu0
  %v2014 = vadd.f32 0.0, %v2013
  %v2015 = vpop.f32.mrf.mxu0
  %v2016 = vadd.f32 0.0, %v2015
  %v2017 = vpop.f32.mrf.mxu0
  %v2018 = vadd.f32 0.0, %v2017
  %2019 = vmatprep.mubr.bf16.mxu0 %v1531
  %2020 = vmatmul.mubr.bf16.gmra.mxu0 %v1530
  %v2021 = vpop.f32.mrf.mxu0
  %v2022 = vadd.f32 0.0, %v2021
  %v2023 = vpop.f32.mrf.mxu0
  %v2024 = vadd.f32 0.0, %v2023
  %v2025 = vpop.f32.mrf.mxu0
  %v2026 = vadd.f32 0.0, %v2025
  %v2027 = vpop.f32.mrf.mxu0
  %v2028 = vadd.f32 0.0, %v2027
  %2029 = vmatprep.mubr.bf16.mxu0 %v1533
  %2030 = vmatmul.mubr.bf16.gmra.mxu0 %v1532
  %v2031 = vpop.f32.mrf.mxu0
  %v2032 = vadd.f32 0.0, %v2031
  %v2033 = vpop.f32.mrf.mxu0
  %v2034 = vadd.f32 0.0, %v2033
  %v2035 = vpop.f32.mrf.mxu0
  %v2036 = vadd.f32 0.0, %v2035
  %v2037 = vpop.f32.mrf.mxu0
  %v2038 = vadd.f32 0.0, %v2037
  %2039 = vmatprep.mubr.bf16.mxu0 %v1535
  %2040 = vmatmul.mubr.bf16.gmra.mxu0 %v1534
  %v2041 = vpop.f32.mrf.mxu0
  %v2042 = vadd.f32 0.0, %v2041
  %v2043 = vpop.f32.mrf.mxu0
  %v2044 = vadd.f32 0.0, %v2043
  %v2045 = vpop.f32.mrf.mxu0
  %v2046 = vadd.f32 0.0, %v2045
  %v2047 = vpop.f32.mrf.mxu0
  %v2048 = vadd.f32 0.0, %v2047
  %2049 = vmatprep.mubr.bf16.mxu0 %v1537
  %2050 = vmatmul.mubr.bf16.gmra.mxu0 %v1536
  %v2051 = vpop.f32.mrf.mxu0
  %v2052 = vadd.f32 0.0, %v2051
  %v2053 = vpop.f32.mrf.mxu0
  %v2054 = vadd.f32 0.0, %v2053
  %v2055 = vpop.f32.mrf.mxu0
  %v2056 = vadd.f32 0.0, %v2055
  %v2057 = vpop.f32.mrf.mxu0
  %v2058 = vadd.f32 0.0, %v2057
  %2059 = vmatprep.mubr.bf16.mxu0 %v1539
  %2060 = vmatmul.mubr.bf16.gmra.mxu0 %v1538
  %v2061 = vpop.f32.mrf.mxu0
  %v2062 = vadd.f32 0.0, %v2061
  %v2063 = vpop.f32.mrf.mxu0
  %v2064 = vadd.f32 0.0, %v2063
  %v2065 = vpop.f32.mrf.mxu0
  %v2066 = vadd.f32 0.0, %v2065
  %v2067 = vpop.f32.mrf.mxu0
  %v2068 = vadd.f32 0.0, %v2067
  %2069 = vmatprep.mubr.bf16.mxu0 %v1541
  %2070 = vmatmul.mubr.bf16.gmra.mxu0 %v1540
  %v2071 = vpop.f32.mrf.mxu0
  %v2072 = vadd.f32 0.0, %v2071
  %v2073 = vpop.f32.mrf.mxu0
  %v2074 = vadd.f32 0.0, %v2073
  %v2075 = vpop.f32.mrf.mxu0
  %v2076 = vadd.f32 0.0, %v2075
  %v2077 = vpop.f32.mrf.mxu0
  %v2078 = vadd.f32 0.0, %v2077
  %2079 = vmatprep.mubr.bf16.mxu0 %v1543
  %2080 = vmatmul.mubr.bf16.gmra.mxu0 %v1542
  %v2081 = vpop.f32.mrf.mxu0
  %v2082 = vadd.f32 0.0, %v2081
  %v2083 = vpop.f32.mrf.mxu0
  %v2084 = vadd.f32 0.0, %v2083
  %v2085 = vpop.f32.mrf.mxu0
  %v2086 = vadd.f32 0.0, %v2085
  %v2087 = vpop.f32.mrf.mxu0
  %v2088 = vadd.f32 0.0, %v2087
  %2089 = vdwg.mxu0
  %v2090 = vadd.f32 %v1899, %v1903
  %v2091 = vadd.f32 %v2090, %v1909
  %v2092 = vadd.f32 %v2091, %v1913
  %v2093 = vadd.f32 %v2092, %v1919
  %v2094 = vadd.f32 %v2093, %v1923
  %v2095 = vadd.f32 %v2094, %v1929
  %v2096 = vadd.f32 %v2095, %v1933
  %v2097 = vadd.f32 %v2096, %v1939
  %v2098 = vadd.f32 %v2097, %v1943
  %v2099 = vadd.f32 %v2098, %v1949
  %v2100 = vadd.f32 %v2099, %v1953
  %v2101 = vadd.f32 %v2100, %v1959
  %v2102 = vadd.f32 %v2101, %v1963
  %v2103 = vadd.f32 %v2102, %v1969
  %v2104 = vadd.f32 %v2103, %v1973
  %v2105 = vrot.slane %v2104, 4
  %v2106 = vadd.f32 %v2104, %v2105
  %v2107 = vrot.slane %v2106, 2
  %v2108 = vadd.f32 %v2106, %v2107
  %v2109 = vrot.slane %v2108, 1
  %v2110 = vadd.f32 %v2108, %v2109
  %v2111 = vadd.f32 %v1901, %v1905
  %v2112 = vadd.f32 %v2111, %v1911
  %v2113 = vadd.f32 %v2112, %v1915
  %v2114 = vadd.f32 %v2113, %v1921
  %v2115 = vadd.f32 %v2114, %v1925
  %v2116 = vadd.f32 %v2115, %v1931
  %v2117 = vadd.f32 %v2116, %v1935
  %v2118 = vadd.f32 %v2117, %v1941
  %v2119 = vadd.f32 %v2118, %v1945
  %v2120 = vadd.f32 %v2119, %v1951
  %v2121 = vadd.f32 %v2120, %v1955
  %v2122 = vadd.f32 %v2121, %v1961
  %v2123 = vadd.f32 %v2122, %v1965
  %v2124 = vadd.f32 %v2123, %v1971
  %v2125 = vadd.f32 %v2124, %v1975
  %v2126 = vrot.slane %v2125, 4
  %v2127 = vadd.f32 %v2125, %v2126
  %v2128 = vrot.slane %v2127, 2
  %v2129 = vadd.f32 %v2127, %v2128
  %v2130 = vrot.slane %v2129, 1
  %v2131 = vadd.f32 %v2129, %v2130
  %v2132 = vadd.f32 %v2012, %v2016
  %v2133 = vadd.f32 %v2132, %v2022
  %v2134 = vadd.f32 %v2133, %v2026
  %v2135 = vadd.f32 %v2134, %v2032
  %v2136 = vadd.f32 %v2135, %v2036
  %v2137 = vadd.f32 %v2136, %v2042
  %v2138 = vadd.f32 %v2137, %v2046
  %v2139 = vadd.f32 %v2138, %v2052
  %v2140 = vadd.f32 %v2139, %v2056
  %v2141 = vadd.f32 %v2140, %v2062
  %v2142 = vadd.f32 %v2141, %v2066
  %v2143 = vadd.f32 %v2142, %v2072
  %v2144 = vadd.f32 %v2143, %v2076
  %v2145 = vadd.f32 %v2144, %v2082
  %v2146 = vadd.f32 %v2145, %v2086
  %v2147 = vrot.slane %v2146, 4
  %v2148 = vadd.f32 %v2146, %v2147
  %v2149 = vrot.slane %v2148, 2
  %v2150 = vadd.f32 %v2148, %v2149
  %v2151 = vrot.slane %v2150, 1
  %v2152 = vadd.f32 %v2150, %v2151
  %v2153 = vadd.f32 %v2014, %v2018
  %v2154 = vadd.f32 %v2153, %v2024
  %v2155 = vadd.f32 %v2154, %v2028
  %v2156 = vadd.f32 %v2155, %v2034
  %v2157 = vadd.f32 %v2156, %v2038
  %v2158 = vadd.f32 %v2157, %v2044
  %v2159 = vadd.f32 %v2158, %v2048
  %v2160 = vadd.f32 %v2159, %v2054
  %v2161 = vadd.f32 %v2160, %v2058
  %v2162 = vadd.f32 %v2161, %v2064
  %v2163 = vadd.f32 %v2162, %v2068
  %v2164 = vadd.f32 %v2163, %v2074
  %v2165 = vadd.f32 %v2164, %v2078
  %v2166 = vadd.f32 %v2165, %v2084
  %v2167 = vadd.f32 %v2166, %v2088
  %v2168 = vrot.slane %v2167, 4
  %v2169 = vadd.f32 %v2167, %v2168
  %v2170 = vrot.slane %v2169, 2
  %v2171 = vadd.f32 %v2169, %v2170
  %v2172 = vrot.slane %v2171, 1
  %v2173 = vadd.f32 %v2171, %v2172
  %v2174 = vmul.f32 %v2110, %v238
  %v2175 = vmul.f32 %v2131, %v238
  %v2176 = vmul.f32 %v2152, %v238
  %v2177 = vmul.f32 %v2173, %v238
  %v2178 = vsub.f32 %v1899, %v2174
  %v2179 = vsub.f32 %v1901, %v2175
  %v2180 = vsub.f32 %v2012, %v2176
  %v2181 = vsub.f32 %v2014, %v2177
  %v2182 = vsub.f32 %v1903, %v2174
  %v2183 = vsub.f32 %v1905, %v2175
  %v2184 = vsub.f32 %v2016, %v2176
  %v2185 = vsub.f32 %v2018, %v2177
  %v2186 = vsub.f32 %v1909, %v2174
  %v2187 = vsub.f32 %v1911, %v2175
  %v2188 = vsub.f32 %v2022, %v2176
  %v2189 = vsub.f32 %v2024, %v2177
  %v2190 = vsub.f32 %v1913, %v2174
  %v2191 = vsub.f32 %v1915, %v2175
  %v2192 = vsub.f32 %v2026, %v2176
  %v2193 = vsub.f32 %v2028, %v2177
  %v2194 = vsub.f32 %v1919, %v2174
  %v2195 = vsub.f32 %v1921, %v2175
  %v2196 = vsub.f32 %v2032, %v2176
  %v2197 = vsub.f32 %v2034, %v2177
  %v2198 = vsub.f32 %v1923, %v2174
  %v2199 = vsub.f32 %v1925, %v2175
  %v2200 = vsub.f32 %v2036, %v2176
  %v2201 = vsub.f32 %v2038, %v2177
  %v2202 = vsub.f32 %v1929, %v2174
  %v2203 = vsub.f32 %v1931, %v2175
  %v2204 = vsub.f32 %v2042, %v2176
  %v2205 = vsub.f32 %v2044, %v2177
  %v2206 = vsub.f32 %v1933, %v2174
  %v2207 = vsub.f32 %v1935, %v2175
  %v2208 = vsub.f32 %v2046, %v2176
  %v2209 = vsub.f32 %v2048, %v2177
  %v2210 = vsub.f32 %v1939, %v2174
  %v2211 = vsub.f32 %v1941, %v2175
  %v2212 = vsub.f32 %v2052, %v2176
  %v2213 = vsub.f32 %v2054, %v2177
  %v2214 = vsub.f32 %v1943, %v2174
  %v2215 = vsub.f32 %v1945, %v2175
  %v2216 = vsub.f32 %v2056, %v2176
  %v2217 = vsub.f32 %v2058, %v2177
  %v2218 = vsub.f32 %v1949, %v2174
  %v2219 = vsub.f32 %v1951, %v2175
  %v2220 = vsub.f32 %v2062, %v2176
  %v2221 = vsub.f32 %v2064, %v2177
  %v2222 = vsub.f32 %v1953, %v2174
  %v2223 = vsub.f32 %v1955, %v2175
  %v2224 = vsub.f32 %v2066, %v2176
  %v2225 = vsub.f32 %v2068, %v2177
  %v2226 = vsub.f32 %v1959, %v2174
  %v2227 = vsub.f32 %v1961, %v2175
  %v2228 = vsub.f32 %v2072, %v2176
  %v2229 = vsub.f32 %v2074, %v2177
  %v2230 = vsub.f32 %v1963, %v2174
  %v2231 = vsub.f32 %v1965, %v2175
  %v2232 = vsub.f32 %v2076, %v2176
  %v2233 = vsub.f32 %v2078, %v2177
  %v2234 = vsub.f32 %v1969, %v2174
  %v2235 = vsub.f32 %v1971, %v2175
  %v2236 = vsub.f32 %v2082, %v2176
  %v2237 = vsub.f32 %v2084, %v2177
  %v2238 = vsub.f32 %v1973, %v2174
  %v2239 = vsub.f32 %v1975, %v2175
  %v2240 = vsub.f32 %v2086, %v2176
  %v2241 = vsub.f32 %v2088, %v2177
  %v2242 = vmul.f32 %v2178, %v2178
  %v2243 = vmul.f32 %v2179, %v2179
  %v2244 = vmul.f32 %v2180, %v2180
  %v2245 = vmul.f32 %v2181, %v2181
  %v2246 = vmul.f32 %v2182, %v2182
  %v2247 = vmul.f32 %v2183, %v2183
  %v2248 = vmul.f32 %v2184, %v2184
  %v2249 = vmul.f32 %v2185, %v2185
  %v2250 = vmul.f32 %v2186, %v2186
  %v2251 = vmul.f32 %v2187, %v2187
  %v2252 = vmul.f32 %v2188, %v2188
  %v2253 = vmul.f32 %v2189, %v2189
  %v2254 = vmul.f32 %v2190, %v2190
  %v2255 = vmul.f32 %v2191, %v2191
  %v2256 = vmul.f32 %v2192, %v2192
  %v2257 = vmul.f32 %v2193, %v2193
  %v2258 = vmul.f32 %v2194, %v2194
  %v2259 = vmul.f32 %v2195, %v2195
  %v2260 = vmul.f32 %v2196, %v2196
  %v2261 = vmul.f32 %v2197, %v2197
  %v2262 = vmul.f32 %v2198, %v2198
  %v2263 = vmul.f32 %v2199, %v2199
  %v2264 = vmul.f32 %v2200, %v2200
  %v2265 = vmul.f32 %v2201, %v2201
  %v2266 = vmul.f32 %v2202, %v2202
  %v2267 = vmul.f32 %v2203, %v2203
  %v2268 = vmul.f32 %v2204, %v2204
  %v2269 = vmul.f32 %v2205, %v2205
  %v2270 = vmul.f32 %v2206, %v2206
  %v2271 = vmul.f32 %v2207, %v2207
  %v2272 = vmul.f32 %v2208, %v2208
  %v2273 = vmul.f32 %v2209, %v2209
  %v2274 = vmul.f32 %v2210, %v2210
  %v2275 = vmul.f32 %v2211, %v2211
  %v2276 = vmul.f32 %v2212, %v2212
  %v2277 = vmul.f32 %v2213, %v2213
  %v2278 = vmul.f32 %v2214, %v2214
  %v2279 = vmul.f32 %v2215, %v2215
  %v2280 = vmul.f32 %v2216, %v2216
  %v2281 = vmul.f32 %v2217, %v2217
  %v2282 = vmul.f32 %v2218, %v2218
  %v2283 = vmul.f32 %v2219, %v2219
  %v2284 = vmul.f32 %v2220, %v2220
  %v2285 = vmul.f32 %v2221, %v2221
  %v2286 = vmul.f32 %v2222, %v2222
  %v2287 = vmul.f32 %v2223, %v2223
  %v2288 = vmul.f32 %v2224, %v2224
  %v2289 = vmul.f32 %v2225, %v2225
  %v2290 = vmul.f32 %v2226, %v2226
  %v2291 = vmul.f32 %v2227, %v2227
  %v2292 = vmul.f32 %v2228, %v2228
  %v2293 = vmul.f32 %v2229, %v2229
  %v2294 = vmul.f32 %v2230, %v2230
  %v2295 = vmul.f32 %v2231, %v2231
  %v2296 = vmul.f32 %v2232, %v2232
  %v2297 = vmul.f32 %v2233, %v2233
  %v2298 = vmul.f32 %v2234, %v2234
  %v2299 = vmul.f32 %v2235, %v2235
  %v2300 = vmul.f32 %v2236, %v2236
  %v2301 = vmul.f32 %v2237, %v2237
  %v2302 = vmul.f32 %v2238, %v2238
  %v2303 = vmul.f32 %v2239, %v2239
  %v2304 = vmul.f32 %v2240, %v2240
  %v2305 = vmul.f32 %v2241, %v2241
  %v2306 = vadd.f32 %v2242, %v2246
  %v2307 = vadd.f32 %v2306, %v2250
  %v2308 = vadd.f32 %v2307, %v2254
  %v2309 = vadd.f32 %v2308, %v2258
  %v2310 = vadd.f32 %v2309, %v2262
  %v2311 = vadd.f32 %v2310, %v2266
  %v2312 = vadd.f32 %v2311, %v2270
  %v2313 = vadd.f32 %v2312, %v2274
  %v2314 = vadd.f32 %v2313, %v2278
  %v2315 = vadd.f32 %v2314, %v2282
  %v2316 = vadd.f32 %v2315, %v2286
  %v2317 = vadd.f32 %v2316, %v2290
  %v2318 = vadd.f32 %v2317, %v2294
  %v2319 = vadd.f32 %v2318, %v2298
  %v2320 = vadd.f32 %v2319, %v2302
  %v2321 = vrot.slane %v2320, 4
  %v2322 = vadd.f32 %v2320, %v2321
  %v2323 = vrot.slane %v2322, 2
  %v2324 = vadd.f32 %v2322, %v2323
  %v2325 = vrot.slane %v2324, 1
  %v2326 = vadd.f32 %v2324, %v2325
  %v2327 = vadd.f32 %v2243, %v2247
  %v2328 = vadd.f32 %v2327, %v2251
  %v2329 = vadd.f32 %v2328, %v2255
  %v2330 = vadd.f32 %v2329, %v2259
  %v2331 = vadd.f32 %v2330, %v2263
  %v2332 = vadd.f32 %v2331, %v2267
  %v2333 = vadd.f32 %v2332, %v2271
  %v2334 = vadd.f32 %v2333, %v2275
  %v2335 = vadd.f32 %v2334, %v2279
  %v2336 = vadd.f32 %v2335, %v2283
  %v2337 = vadd.f32 %v2336, %v2287
  %v2338 = vadd.f32 %v2337, %v2291
  %v2339 = vadd.f32 %v2338, %v2295
  %v2340 = vadd.f32 %v2339, %v2299
  %v2341 = vadd.f32 %v2340, %v2303
  %v2342 = vrot.slane %v2341, 4
  %v2343 = vadd.f32 %v2341, %v2342
  %v2344 = vrot.slane %v2343, 2
  %v2345 = vadd.f32 %v2343, %v2344
  %v2346 = vrot.slane %v2345, 1
  %v2347 = vadd.f32 %v2345, %v2346
  %v2348 = vadd.f32 %v2244, %v2248
  %v2349 = vadd.f32 %v2348, %v2252
  %v2350 = vadd.f32 %v2349, %v2256
  %v2351 = vadd.f32 %v2350, %v2260
  %v2352 = vadd.f32 %v2351, %v2264
  %v2353 = vadd.f32 %v2352, %v2268
  %v2354 = vadd.f32 %v2353, %v2272
  %v2355 = vadd.f32 %v2354, %v2276
  %v2356 = vadd.f32 %v2355, %v2280
  %v2357 = vadd.f32 %v2356, %v2284
  %v2358 = vadd.f32 %v2357, %v2288
  %v2359 = vadd.f32 %v2358, %v2292
  %v2360 = vadd.f32 %v2359, %v2296
  %v2361 = vadd.f32 %v2360, %v2300
  %v2362 = vadd.f32 %v2361, %v2304
  %v2363 = vrot.slane %v2362, 4
  %v2364 = vadd.f32 %v2362, %v2363
  %v2365 = vrot.slane %v2364, 2
  %v2366 = vadd.f32 %v2364, %v2365
  %v2367 = vrot.slane %v2366, 1
  %v2368 = vadd.f32 %v2366, %v2367
  %v2369 = vadd.f32 %v2245, %v2249
  %v2370 = vadd.f32 %v2369, %v2253
  %v2371 = vadd.f32 %v2370, %v2257
  %v2372 = vadd.f32 %v2371, %v2261
  %v2373 = vadd.f32 %v2372, %v2265
  %v2374 = vadd.f32 %v2373, %v2269
  %v2375 = vadd.f32 %v2374, %v2273
  %v2376 = vadd.f32 %v2375, %v2277
  %v2377 = vadd.f32 %v2376, %v2281
  %v2378 = vadd.f32 %v2377, %v2285
  %v2379 = vadd.f32 %v2378, %v2289
  %v2380 = vadd.f32 %v2379, %v2293
  %v2381 = vadd.f32 %v2380, %v2297
  %v2382 = vadd.f32 %v2381, %v2301
  %v2383 = vadd.f32 %v2382, %v2305
  %v2384 = vrot.slane %v2383, 4
  %v2385 = vadd.f32 %v2383, %v2384
  %v2386 = vrot.slane %v2385, 2
  %v2387 = vadd.f32 %v2385, %v2386
  %v2388 = vrot.slane %v2387, 1
  %v2389 = vadd.f32 %v2387, %v2388
  %v2390 = vmul.f32 %v2326, %v238
  %v2391 = vmul.f32 %v2347, %v238
  %v2392 = vmul.f32 %v2368, %v238
  %v2393 = vmul.f32 %v2389, %v238
  %v2394 = vadd.f32 %v2390, 1e-05
  %v2395 = vadd.f32 %v2391, 1e-05
  %v2396 = vadd.f32 %v2392, 1e-05
  %v2397 = vadd.f32 %v2393, 1e-05
  %v2398 = vrsqrt.pop %v2394
  %v2399 = vrsqrt.pop %v2395
  %v2400 = vrsqrt.pop %v2396
  %v2401 = vrsqrt.pop %v2397
  %v2402 = vmul.f32 %v35, %v2398
  %v2403 = vmul.f32 %v36, %v2399
  %v2404 = vmul.f32 %v37, %v2400
  %v2405 = vmul.f32 %v38, %v2401
  %v2406 = vlaneseq
  %v2407 = vshrl.u32 %v2406, 7
  %v2408 = vsub.s32 0, %v2407
  %v2409 = vrot.slane %v2402, %v2408
  %v2410 = vlaneseq
  %v2411 = vshrl.u32 %v2410, 7
  %v2412 = vsub.s32 0, %v2411
  %v2413 = vrot.slane %v2403, %v2412
  %v2414 = vlaneseq
  %v2415 = vshrl.u32 %v2414, 7
  %v2416 = vsub.s32 0, %v2415
  %v2417 = vrot.slane %v2404, %v2416
  %v2418 = vlaneseq
  %v2419 = vshrl.u32 %v2418, 7
  %v2420 = vsub.s32 0, %v2419
  %v2421 = vrot.slane %v2405, %v2420
  %v2422 = vmul.f32 %v2178, %v2409
  %v2423 = vmul.f32 %v2179, %v2413
  %v2424 = vmul.f32 %v2180, %v2417
  %v2425 = vmul.f32 %v2181, %v2421
  %v2426 = vmul.f32 %v2182, %v2409
  %v2427 = vmul.f32 %v2183, %v2413
  %v2428 = vmul.f32 %v2184, %v2417
  %v2429 = vmul.f32 %v2185, %v2421
  %v2430 = vmul.f32 %v2186, %v2409
  %v2431 = vmul.f32 %v2187, %v2413
  %v2432 = vmul.f32 %v2188, %v2417
  %v2433 = vmul.f32 %v2189, %v2421
  %v2434 = vmul.f32 %v2190, %v2409
  %v2435 = vmul.f32 %v2191, %v2413
  %v2436 = vmul.f32 %v2192, %v2417
  %v2437 = vmul.f32 %v2193, %v2421
  %v2438 = vmul.f32 %v2194, %v2409
  %v2439 = vmul.f32 %v2195, %v2413
  %v2440 = vmul.f32 %v2196, %v2417
  %v2441 = vmul.f32 %v2197, %v2421
  %v2442 = vmul.f32 %v2198, %v2409
  %v2443 = vmul.f32 %v2199, %v2413
  %v2444 = vmul.f32 %v2200, %v2417
  %v2445 = vmul.f32 %v2201, %v2421
  %v2446 = vmul.f32 %v2202, %v2409
  %v2447 = vmul.f32 %v2203, %v2413
  %v2448 = vmul.f32 %v2204, %v2417
  %v2449 = vmul.f32 %v2205, %v2421
  %v2450 = vmul.f32 %v2206, %v2409
  %v2451 = vmul.f32 %v2207, %v2413
  %v2452 = vmul.f32 %v2208, %v2417
  %v2453 = vmul.f32 %v2209, %v2421
  %v2454 = vmul.f32 %v2210, %v2409
  %v2455 = vmul.f32 %v2211, %v2413
  %v2456 = vmul.f32 %v2212, %v2417
  %v2457 = vmul.f32 %v2213, %v2421
  %v2458 = vmul.f32 %v2214, %v2409
  %v2459 = vmul.f32 %v2215, %v2413
  %v2460 = vmul.f32 %v2216, %v2417
  %v2461 = vmul.f32 %v2217, %v2421
  %v2462 = vmul.f32 %v2218, %v2409
  %v2463 = vmul.f32 %v2219, %v2413
  %v2464 = vmul.f32 %v2220, %v2417
  %v2465 = vmul.f32 %v2221, %v2421
  %v2466 = vmul.f32 %v2222, %v2409
  %v2467 = vmul.f32 %v2223, %v2413
  %v2468 = vmul.f32 %v2224, %v2417
  %v2469 = vmul.f32 %v2225, %v2421
  %v2470 = vmul.f32 %v2226, %v2409
  %v2471 = vmul.f32 %v2227, %v2413
  %v2472 = vmul.f32 %v2228, %v2417
  %v2473 = vmul.f32 %v2229, %v2421
  %v2474 = vmul.f32 %v2230, %v2409
  %v2475 = vmul.f32 %v2231, %v2413
  %v2476 = vmul.f32 %v2232, %v2417
  %v2477 = vmul.f32 %v2233, %v2421
  %v2478 = vmul.f32 %v2234, %v2409
  %v2479 = vmul.f32 %v2235, %v2413
  %v2480 = vmul.f32 %v2236, %v2417
  %v2481 = vmul.f32 %v2237, %v2421
  %v2482 = vmul.f32 %v2238, %v2409
  %v2483 = vmul.f32 %v2239, %v2413
  %v2484 = vmul.f32 %v2240, %v2417
  %v2485 = vmul.f32 %v2241, %v2421
  %v2486 = vlaneseq
  %v2487 = vshrl.u32 %v2486, 7
  %v2488 = vsub.s32 1, %v2487
  %v2489 = vrot.slane %v35, %v2488
  %v2490 = vlaneseq
  %v2491 = vshrl.u32 %v2490, 7
  %v2492 = vsub.s32 1, %v2491
  %v2493 = vrot.slane %v36, %v2492
  %v2494 = vlaneseq
  %v2495 = vshrl.u32 %v2494, 7
  %v2496 = vsub.s32 1, %v2495
  %v2497 = vrot.slane %v37, %v2496
  %v2498 = vlaneseq
  %v2499 = vshrl.u32 %v2498, 7
  %v2500 = vsub.s32 1, %v2499
  %v2501 = vrot.slane %v38, %v2500
  %v2502 = vadd.f32 %v2422, %v2489
  %v2503 = vadd.f32 %v2423, %v2493
  %v2504 = vadd.f32 %v2424, %v2497
  %v2505 = vadd.f32 %v2425, %v2501
  %v2506 = vadd.f32 %v2426, %v2489
  %v2507 = vadd.f32 %v2427, %v2493
  %v2508 = vadd.f32 %v2428, %v2497
  %v2509 = vadd.f32 %v2429, %v2501
  %v2510 = vadd.f32 %v2430, %v2489
  %v2511 = vadd.f32 %v2431, %v2493
  %v2512 = vadd.f32 %v2432, %v2497
  %v2513 = vadd.f32 %v2433, %v2501
  %v2514 = vadd.f32 %v2434, %v2489
  %v2515 = vadd.f32 %v2435, %v2493
  %v2516 = vadd.f32 %v2436, %v2497
  %v2517 = vadd.f32 %v2437, %v2501
  %v2518 = vadd.f32 %v2438, %v2489
  %v2519 = vadd.f32 %v2439, %v2493
  %v2520 = vadd.f32 %v2440, %v2497
  %v2521 = vadd.f32 %v2441, %v2501
  %v2522 = vadd.f32 %v2442, %v2489
  %v2523 = vadd.f32 %v2443, %v2493
  %v2524 = vadd.f32 %v2444, %v2497
  %v2525 = vadd.f32 %v2445, %v2501
  %v2526 = vadd.f32 %v2446, %v2489
  %v2527 = vadd.f32 %v2447, %v2493
  %v2528 = vadd.f32 %v2448, %v2497
  %v2529 = vadd.f32 %v2449, %v2501
  %v2530 = vadd.f32 %v2450, %v2489
  %v2531 = vadd.f32 %v2451, %v2493
  %v2532 = vadd.f32 %v2452, %v2497
  %v2533 = vadd.f32 %v2453, %v2501
  %v2534 = vadd.f32 %v2454, %v2489
  %v2535 = vadd.f32 %v2455, %v2493
  %v2536 = vadd.f32 %v2456, %v2497
  %v2537 = vadd.f32 %v2457, %v2501
  %v2538 = vadd.f32 %v2458, %v2489
  %v2539 = vadd.f32 %v2459, %v2493
  %v2540 = vadd.f32 %v2460, %v2497
  %v2541 = vadd.f32 %v2461, %v2501
  %v2542 = vadd.f32 %v2462, %v2489
  %v2543 = vadd.f32 %v2463, %v2493
  %v2544 = vadd.f32 %v2464, %v2497
  %v2545 = vadd.f32 %v2465, %v2501
  %v2546 = vadd.f32 %v2466, %v2489
  %v2547 = vadd.f32 %v2467, %v2493
  %v2548 = vadd.f32 %v2468, %v2497
  %v2549 = vadd.f32 %v2469, %v2501
  %v2550 = vadd.f32 %v2470, %v2489
  %v2551 = vadd.f32 %v2471, %v2493
  %v2552 = vadd.f32 %v2472, %v2497
  %v2553 = vadd.f32 %v2473, %v2501
  %v2554 = vadd.f32 %v2474, %v2489
  %v2555 = vadd.f32 %v2475, %v2493
  %v2556 = vadd.f32 %v2476, %v2497
  %v2557 = vadd.f32 %v2477, %v2501
  %v2558 = vadd.f32 %v2478, %v2489
  %v2559 = vadd.f32 %v2479, %v2493
  %v2560 = vadd.f32 %v2480, %v2497
  %v2561 = vadd.f32 %v2481, %v2501
  %v2562 = vadd.f32 %v2482, %v2489
  %v2563 = vadd.f32 %v2483, %v2493
  %v2564 = vadd.f32 %v2484, %v2497
  %v2565 = vadd.f32 %v2485, %v2501
  %v2566 = vmax.f32 %v2502, 0.0
  %v2567 = vmax.f32 %v2503, 0.0
  %v2568 = vmax.f32 %v2504, 0.0
  %v2569 = vmax.f32 %v2505, 0.0
  %v2570 = vmax.f32 %v2506, 0.0
  %v2571 = vmax.f32 %v2507, 0.0
  %v2572 = vmax.f32 %v2508, 0.0
  %v2573 = vmax.f32 %v2509, 0.0
  %v2574 = vmax.f32 %v2510, 0.0
  %v2575 = vmax.f32 %v2511, 0.0
  %v2576 = vmax.f32 %v2512, 0.0
  %v2577 = vmax.f32 %v2513, 0.0
  %v2578 = vmax.f32 %v2514, 0.0
  %v2579 = vmax.f32 %v2515, 0.0
  %v2580 = vmax.f32 %v2516, 0.0
  %v2581 = vmax.f32 %v2517, 0.0
  %v2582 = vmax.f32 %v2518, 0.0
  %v2583 = vmax.f32 %v2519, 0.0
  %v2584 = vmax.f32 %v2520, 0.0
  %v2585 = vmax.f32 %v2521, 0.0
  %v2586 = vmax.f32 %v2522, 0.0
  %v2587 = vmax.f32 %v2523, 0.0
  %v2588 = vmax.f32 %v2524, 0.0
  %v2589 = vmax.f32 %v2525, 0.0
  %v2590 = vmax.f32 %v2526, 0.0
  %v2591 = vmax.f32 %v2527, 0.0
  %v2592 = vmax.f32 %v2528, 0.0
  %v2593 = vmax.f32 %v2529, 0.0
  %v2594 = vmax.f32 %v2530, 0.0
  %v2595 = vmax.f32 %v2531, 0.0
  %v2596 = vmax.f32 %v2532, 0.0
  %v2597 = vmax.f32 %v2533, 0.0
  %v2598 = vmax.f32 %v2534, 0.0
  %v2599 = vmax.f32 %v2535, 0.0
  %v2600 = vmax.f32 %v2536, 0.0
  %v2601 = vmax.f32 %v2537, 0.0
  %v2602 = vmax.f32 %v2538, 0.0
  %v2603 = vmax.f32 %v2539, 0.0
  %v2604 = vmax.f32 %v2540, 0.0
  %v2605 = vmax.f32 %v2541, 0.0
  %v2606 = vmax.f32 %v2542, 0.0
  %v2607 = vmax.f32 %v2543, 0.0
  %v2608 = vmax.f32 %v2544, 0.0
  %v2609 = vmax.f32 %v2545, 0.0
  %v2610 = vmax.f32 %v2546, 0.0
  %v2611 = vmax.f32 %v2547, 0.0
  %v2612 = vmax.f32 %v2548, 0.0
  %v2613 = vmax.f32 %v2549, 0.0
  %v2614 = vmax.f32 %v2550, 0.0
  %v2615 = vmax.f32 %v2551, 0.0
  %v2616 = vmax.f32 %v2552, 0.0
  %v2617 = vmax.f32 %v2553, 0.0
  %v2618 = vmax.f32 %v2554, 0.0
  %v2619 = vmax.f32 %v2555, 0.0
  %v2620 = vmax.f32 %v2556, 0.0
  %v2621 = vmax.f32 %v2557, 0.0
  %v2622 = vmax.f32 %v2558, 0.0
  %v2623 = vmax.f32 %v2559, 0.0
  %v2624 = vmax.f32 %v2560, 0.0
  %v2625 = vmax.f32 %v2561, 0.0
  %v2626 = vmax.f32 %v2562, 0.0
  %v2627 = vmax.f32 %v2563, 0.0
  %v2628 = vmax.f32 %v2564, 0.0
  %v2629 = vmax.f32 %v2565, 0.0
  %v2630 = vld [vmem:[%s6] sm:$0xff]
  %v2631 = vld [vmem:[%s6 + $0x8] sm:$0xff]
  %v2632 = vld [vmem:[%s6 + $0x10] sm:$0xff]
  %v2633 = vld [vmem:[%s6 + $0x18] sm:$0xf]
  %v2634 = vld [vmem:[%s6 + $0x1c] sm:$0xff]
  %v2635 = vld [vmem:[%s6 + $0x24] sm:$0xff]
  %v2636 = vld [vmem:[%s6 + $0x2c] sm:$0xff]
  %v2637 = vld [vmem:[%s6 + $0x34] sm:$0xf]
  %v2638 = vld [vmem:[%s6 + $0x38] sm:$0xff]
  %v2639 = vld [vmem:[%s6 + $0x40] sm:$0xff]
  %v2640 = vld [vmem:[%s6 + $0x48] sm:$0xff]
  %v2641 = vld [vmem:[%s6 + $0x50] sm:$0xf]
  %v2642 = vld [vmem:[%s6 + $0x54] sm:$0xff]
  %v2643 = vld [vmem:[%s6 + $0x5c] sm:$0xff]
  %v2644 = vld [vmem:[%s6 + $0x64] sm:$0xff]
  %v2645 = vld [vmem:[%s6 + $0x6c] sm:$0xf]
  %v2646 = vld [vmem:[%s6 + $0x70] sm:$0xff]
  %v2647 = vld [vmem:[%s6 + $0x78] sm:$0xff]
  %v2648 = vld [vmem:[%s6 + $0x80] sm:$0xff]
  %v2649 = vld [vmem:[%s6 + $0x88] sm:$0xf]
  %v2650 = vld [vmem:[%s6 + $0x8c] sm:$0xff]
  %v2651 = vld [vmem:[%s6 + $0x94] sm:$0xff]
  %v2652 = vld [vmem:[%s6 + $0x9c] sm:$0xff]
  %v2653 = vld [vmem:[%s6 + $0xa4] sm:$0xf]
  %v2654 = vld [vmem:[%s6 + $0xa8] sm:$0xff]
  %v2655 = vld [vmem:[%s6 + $0xb0] sm:$0xff]
  %v2656 = vld [vmem:[%s6 + $0xb8] sm:$0xff]
  %v2657 = vld [vmem:[%s6 + $0xc0] sm:$0xf]
  %v2658 = vld [vmem:[%s6 + $0xc4] sm:$0xff]
  %v2659 = vld [vmem:[%s6 + $0xcc] sm:$0xff]
  %v2660 = vld [vmem:[%s6 + $0xd4] sm:$0xff]
  %v2661 = vld [vmem:[%s6 + $0xdc] sm:$0xf]
  %v2662 = vld [vmem:[%s6 + $0xe0] sm:$0xff]
  %v2663 = vld [vmem:[%s6 + $0xe8] sm:$0xff]
  %v2664 = vld [vmem:[%s6 + $0xf0] sm:$0xff]
  %v2665 = vld [vmem:[%s6 + $0xf8] sm:$0xf]
  %v2666 = vld [vmem:[%s6 + $0xfc] sm:$0xff]
  %v2667 = vld [vmem:[%s6 + $0x104] sm:$0xff]
  %v2668 = vld [vmem:[%s6 + $0x10c] sm:$0xff]
  %v2669 = vld [vmem:[%s6 + $0x114] sm:$0xf]
  %v2670 = vld [vmem:[%s6 + $0x118] sm:$0xff]
  %v2671 = vld [vmem:[%s6 + $0x120] sm:$0xff]
  %v2672 = vld [vmem:[%s6 + $0x128] sm:$0xff]
  %v2673 = vld [vmem:[%s6 + $0x130] sm:$0xf]
  %v2674 = vld [vmem:[%s6 + $0x134] sm:$0xff]
  %v2675 = vld [vmem:[%s6 + $0x13c] sm:$0xff]
  %v2676 = vld [vmem:[%s6 + $0x144] sm:$0xff]
  %v2677 = vld [vmem:[%s6 + $0x14c] sm:$0xf]
  %v2678 = vld [vmem:[%s6 + $0x150] sm:$0xff]
  %v2679 = vld [vmem:[%s6 + $0x158] sm:$0xff]
  %v2680 = vld [vmem:[%s6 + $0x160] sm:$0xff]
  %v2681 = vld [vmem:[%s6 + $0x168] sm:$0xf]
  %v2682 = vld [vmem:[%s6 + $0x16c] sm:$0xff]
  %v2683 = vld [vmem:[%s6 + $0x174] sm:$0xff]
  %v2684 = vld [vmem:[%s6 + $0x17c] sm:$0xff]
  %v2685 = vld [vmem:[%s6 + $0x184] sm:$0xf]
  %v2686 = vld [vmem:[%s6 + $0x188] sm:$0xff]
  %v2687 = vld [vmem:[%s6 + $0x190] sm:$0xff]
  %v2688 = vld [vmem:[%s6 + $0x198] sm:$0xff]
  %v2689 = vld [vmem:[%s6 + $0x1a0] sm:$0xf]
  %v2690 = vld [vmem:[%s6 + $0x1a4] sm:$0xff]
  %v2691 = vld [vmem:[%s6 + $0x1ac] sm:$0xff]
  %v2692 = vld [vmem:[%s6 + $0x1b4] sm:$0xff]
  %v2693 = vld [vmem:[%s6 + $0x1bc] sm:$0xf]
  %v2694 = vld [vmem:[%s6 + $0x1c0] sm:$0xff]
  %v2695 = vld [vmem:[%s6 + $0x1c8] sm:$0xff]
  %v2696 = vld [vmem:[%s6 + $0x1d0] sm:$0xff]
  %v2697 = vld [vmem:[%s6 + $0x1d8] sm:$0xf]
  %v2698 = vld [vmem:[%s6 + $0x1dc] sm:$0xff]
  %v2699 = vld [vmem:[%s6 + $0x1e4] sm:$0xff]
  %v2700 = vld [vmem:[%s6 + $0x1ec] sm:$0xff]
  %v2701 = vld [vmem:[%s6 + $0x1f4] sm:$0xf]
  %v2702 = vld [vmem:[%s6 + $0x1f8] sm:$0xff]
  %v2703 = vld [vmem:[%s6 + $0x200] sm:$0xff]
  %v2704 = vld [vmem:[%s6 + $0x208] sm:$0xff]
  %v2705 = vld [vmem:[%s6 + $0x210] sm:$0xf]
  %v2706 = vld [vmem:[%s6 + $0x214] sm:$0xff]
  %v2707 = vld [vmem:[%s6 + $0x21c] sm:$0xff]
  %v2708 = vld [vmem:[%s6 + $0x224] sm:$0xff]
  %v2709 = vld [vmem:[%s6 + $0x22c] sm:$0xf]
  %v2710 = vld [vmem:[%s6 + $0x230] sm:$0xff]
  %v2711 = vld [vmem:[%s6 + $0x238] sm:$0xff]
  %v2712 = vld [vmem:[%s6 + $0x240] sm:$0xff]
  %v2713 = vld [vmem:[%s6 + $0x248] sm:$0xf]
  %v2714 = vld [vmem:[%s6 + $0x24c] sm:$0xff]
  %v2715 = vld [vmem:[%s6 + $0x254] sm:$0xff]
  %v2716 = vld [vmem:[%s6 + $0x25c] sm:$0xff]
  %v2717 = vld [vmem:[%s6 + $0x264] sm:$0xf]
  %v2718 = vld [vmem:[%s6 + $0x268] sm:$0xff]
  %v2719 = vld [vmem:[%s6 + $0x270] sm:$0xff]
  %v2720 = vld [vmem:[%s6 + $0x278] sm:$0xff]
  %v2721 = vld [vmem:[%s6 + $0x280] sm:$0xf]
  %v2722 = vld [vmem:[%s6 + $0x284] sm:$0xff]
  %v2723 = vld [vmem:[%s6 + $0x28c] sm:$0xff]
  %v2724 = vld [vmem:[%s6 + $0x294] sm:$0xff]
  %v2725 = vld [vmem:[%s6 + $0x29c] sm:$0xf]
  %v2726 = vld [vmem:[%s6 + $0x2a0] sm:$0xff]
  %v2727 = vld [vmem:[%s6 + $0x2a8] sm:$0xff]
  %v2728 = vld [vmem:[%s6 + $0x2b0] sm:$0xff]
  %v2729 = vld [vmem:[%s6 + $0x2b8] sm:$0xf]
  %v2730 = vld [vmem:[%s6 + $0x2bc] sm:$0xff]
  %v2731 = vld [vmem:[%s6 + $0x2c4] sm:$0xff]
  %v2732 = vld [vmem:[%s6 + $0x2cc] sm:$0xff]
  %v2733 = vld [vmem:[%s6 + $0x2d4] sm:$0xf]
  %v2734 = vld [vmem:[%s6 + $0x2d8] sm:$0xff]
  %v2735 = vld [vmem:[%s6 + $0x2e0] sm:$0xff]
  %v2736 = vld [vmem:[%s6 + $0x2e8] sm:$0xff]
  %v2737 = vld [vmem:[%s6 + $0x2f0] sm:$0xf]
  %v2738 = vld [vmem:[%s6 + $0x2f4] sm:$0xff]
  %v2739 = vld [vmem:[%s6 + $0x2fc] sm:$0xff]
  %v2740 = vld [vmem:[%s6 + $0x304] sm:$0xff]
  %v2741 = vld [vmem:[%s6 + $0x30c] sm:$0xf]
  %v2742 = vld [vmem:[%s6 + $0x310] sm:$0xff]
  %v2743 = vld [vmem:[%s6 + $0x318] sm:$0xff]
  %v2744 = vld [vmem:[%s6 + $0x320] sm:$0xff]
  %v2745 = vld [vmem:[%s6 + $0x328] sm:$0xf]
  %v2746 = vld [vmem:[%s6 + $0x32c] sm:$0xff]
  %v2747 = vld [vmem:[%s6 + $0x334] sm:$0xff]
  %v2748 = vld [vmem:[%s6 + $0x33c] sm:$0xff]
  %v2749 = vld [vmem:[%s6 + $0x344] sm:$0xf]
  %v2750 = vld [vmem:[%s6 + $0x348] sm:$0xff]
  %v2751 = vld [vmem:[%s6 + $0x350] sm:$0xff]
  %v2752 = vld [vmem:[%s6 + $0x358] sm:$0xff]
  %v2753 = vld [vmem:[%s6 + $0x360] sm:$0xf]
  %v2754 = vld [vmem:[%s6 + $0x364] sm:$0xff]
  %v2755 = vld [vmem:[%s6 + $0x36c] sm:$0xff]
  %v2756 = vld [vmem:[%s6 + $0x374] sm:$0xff]
  %v2757 = vld [vmem:[%s6 + $0x37c] sm:$0xf]
  %v2758 = vld [vmem:[%s6 + $0x380] sm:$0xff]
  %v2759 = vld [vmem:[%s6 + $0x388] sm:$0xff]
  %v2760 = vld [vmem:[%s6 + $0x390] sm:$0xff]
  %v2761 = vld [vmem:[%s6 + $0x398] sm:$0xf]
  %v2762 = vld [vmem:[%s6 + $0x39c] sm:$0xff]
  %v2763 = vld [vmem:[%s6 + $0x3a4] sm:$0xff]
  %v2764 = vld [vmem:[%s6 + $0x3ac] sm:$0xff]
  %v2765 = vld [vmem:[%s6 + $0x3b4] sm:$0xf]
  %v2766 = vld [vmem:[%s6 + $0x3b8] sm:$0xff]
  %v2767 = vld [vmem:[%s6 + $0x3c0] sm:$0xff]
  %v2768 = vld [vmem:[%s6 + $0x3c8] sm:$0xff]
  %v2769 = vld [vmem:[%s6 + $0x3d0] sm:$0xf]
  %v2770 = vld [vmem:[%s6 + $0x3d4] sm:$0xff]
  %v2771 = vld [vmem:[%s6 + $0x3dc] sm:$0xff]
  %v2772 = vld [vmem:[%s6 + $0x3e4] sm:$0xff]
  %v2773 = vld [vmem:[%s6 + $0x3ec] sm:$0xf]
  %v2774 = vld [vmem:[%s6 + $0x3f0] sm:$0xff]
  %v2775 = vld [vmem:[%s6 + $0x3f8] sm:$0xff]
  %v2776 = vld [vmem:[%s6 + $0x400] sm:$0xff]
  %v2777 = vld [vmem:[%s6 + $0x408] sm:$0xf]
  %v2778 = vld [vmem:[%s6 + $0x40c] sm:$0xff]
  %v2779 = vld [vmem:[%s6 + $0x414] sm:$0xff]
  %v2780 = vld [vmem:[%s6 + $0x41c] sm:$0xff]
  %v2781 = vld [vmem:[%s6 + $0x424] sm:$0xf]
  %v2782 = vld [vmem:[%s6 + $0x428] sm:$0xff]
  %v2783 = vld [vmem:[%s6 + $0x430] sm:$0xff]
  %v2784 = vld [vmem:[%s6 + $0x438] sm:$0xff]
  %v2785 = vld [vmem:[%s6 + $0x440] sm:$0xf]
  %v2786 = vld [vmem:[%s6 + $0x444] sm:$0xff]
  %v2787 = vld [vmem:[%s6 + $0x44c] sm:$0xff]
  %v2788 = vld [vmem:[%s6 + $0x454] sm:$0xff]
  %v2789 = vld [vmem:[%s6 + $0x45c] sm:$0xf]
  %v2790 = vld [vmem:[%s6 + $0x460] sm:$0xff]
  %v2791 = vld [vmem:[%s6 + $0x468] sm:$0xff]
  %v2792 = vld [vmem:[%s6 + $0x470] sm:$0xff]
  %v2793 = vld [vmem:[%s6 + $0x478] sm:$0xf]
  %v2794 = vld [vmem:[%s6 + $0x47c] sm:$0xff]
  %v2795 = vld [vmem:[%s6 + $0x484] sm:$0xff]
  %v2796 = vld [vmem:[%s6 + $0x48c] sm:$0xff]
  %v2797 = vld [vmem:[%s6 + $0x494] sm:$0xf]
  %v2798 = vld [vmem:[%s6 + $0x498] sm:$0xff]
  %v2799 = vld [vmem:[%s6 + $0x4a0] sm:$0xff]
  %v2800 = vld [vmem:[%s6 + $0x4a8] sm:$0xff]
  %v2801 = vld [vmem:[%s6 + $0x4b0] sm:$0xf]
  %v2802 = vld [vmem:[%s6 + $0x4b4] sm:$0xff]
  %v2803 = vld [vmem:[%s6 + $0x4bc] sm:$0xff]
  %v2804 = vld [vmem:[%s6 + $0x4c4] sm:$0xff]
  %v2805 = vld [vmem:[%s6 + $0x4cc] sm:$0xf]
  %v2806 = vld [vmem:[%s6 + $0x4d0] sm:$0xff]
  %v2807 = vld [vmem:[%s6 + $0x4d8] sm:$0xff]
  %v2808 = vld [vmem:[%s6 + $0x4e0] sm:$0xff]
  %v2809 = vld [vmem:[%s6 + $0x4e8] sm:$0xf]
  %v2810 = vld [vmem:[%s6 + $0x4ec] sm:$0xff]
  %v2811 = vld [vmem:[%s6 + $0x4f4] sm:$0xff]
  %v2812 = vld [vmem:[%s6 + $0x4fc] sm:$0xff]
  %v2813 = vld [vmem:[%s6 + $0x504] sm:$0xf]
  %v2814 = vld [vmem:[%s6 + $0x508] sm:$0xff]
  %v2815 = vld [vmem:[%s6 + $0x510] sm:$0xff]
  %v2816 = vld [vmem:[%s6 + $0x518] sm:$0xff]
  %v2817 = vld [vmem:[%s6 + $0x520] sm:$0xf]
  %v2818 = vld [vmem:[%s6 + $0x524] sm:$0xff]
  %v2819 = vld [vmem:[%s6 + $0x52c] sm:$0xff]
  %v2820 = vld [vmem:[%s6 + $0x534] sm:$0xff]
  %v2821 = vld [vmem:[%s6 + $0x53c] sm:$0xf]
  %v2822 = vld [vmem:[%s6 + $0x540] sm:$0xff]
  %v2823 = vld [vmem:[%s6 + $0x548] sm:$0xff]
  %v2824 = vld [vmem:[%s6 + $0x550] sm:$0xff]
  %v2825 = vld [vmem:[%s6 + $0x558] sm:$0xf]
  %v2826 = vld [vmem:[%s6 + $0x55c] sm:$0xff]
  %v2827 = vld [vmem:[%s6 + $0x564] sm:$0xff]
  %v2828 = vld [vmem:[%s6 + $0x56c] sm:$0xff]
  %v2829 = vld [vmem:[%s6 + $0x574] sm:$0xf]
  %v2830 = vld [vmem:[%s6 + $0x578] sm:$0xff]
  %v2831 = vld [vmem:[%s6 + $0x580] sm:$0xff]
  %v2832 = vld [vmem:[%s6 + $0x588] sm:$0xff]
  %v2833 = vld [vmem:[%s6 + $0x590] sm:$0xf]
  %v2834 = vld [vmem:[%s6 + $0x594] sm:$0xff]
  %v2835 = vld [vmem:[%s6 + $0x59c] sm:$0xff]
  %v2836 = vld [vmem:[%s6 + $0x5a4] sm:$0xff]
  %v2837 = vld [vmem:[%s6 + $0x5ac] sm:$0xf]
  %v2838 = vld [vmem:[%s6 + $0x5b0] sm:$0xff]
  %v2839 = vld [vmem:[%s6 + $0x5b8] sm:$0xff]
  %v2840 = vld [vmem:[%s6 + $0x5c0] sm:$0xff]
  %v2841 = vld [vmem:[%s6 + $0x5c8] sm:$0xf]
  %v2842 = vld [vmem:[%s6 + $0x5cc] sm:$0xff]
  %v2843 = vld [vmem:[%s6 + $0x5d4] sm:$0xff]
  %v2844 = vld [vmem:[%s6 + $0x5dc] sm:$0xff]
  %v2845 = vld [vmem:[%s6 + $0x5e4] sm:$0xf]
  %v2846 = vld [vmem:[%s6 + $0x5e8] sm:$0xff]
  %v2847 = vld [vmem:[%s6 + $0x5f0] sm:$0xff]
  %v2848 = vld [vmem:[%s6 + $0x5f8] sm:$0xff]
  %v2849 = vld [vmem:[%s6 + $0x600] sm:$0xf]
  %v2850 = vld [vmem:[%s6 + $0x604] sm:$0xff]
  %v2851 = vld [vmem:[%s6 + $0x60c] sm:$0xff]
  %v2852 = vld [vmem:[%s6 + $0x614] sm:$0xff]
  %v2853 = vld [vmem:[%s6 + $0x61c] sm:$0xf]
  %v2854 = vld [vmem:[%s6 + $0x620] sm:$0xff]
  %v2855 = vld [vmem:[%s6 + $0x628] sm:$0xff]
  %v2856 = vld [vmem:[%s6 + $0x630] sm:$0xff]
  %v2857 = vld [vmem:[%s6 + $0x638] sm:$0xf]
  %v2858 = vld [vmem:[%s6 + $0x63c] sm:$0xff]
  %v2859 = vld [vmem:[%s6 + $0x644] sm:$0xff]
  %v2860 = vld [vmem:[%s6 + $0x64c] sm:$0xff]
  %v2861 = vld [vmem:[%s6 + $0x654] sm:$0xf]
  %v2862 = vld [vmem:[%s6 + $0x658] sm:$0xff]
  %v2863 = vld [vmem:[%s6 + $0x660] sm:$0xff]
  %v2864 = vld [vmem:[%s6 + $0x668] sm:$0xff]
  %v2865 = vld [vmem:[%s6 + $0x670] sm:$0xf]
  %v2866 = vld [vmem:[%s6 + $0x674] sm:$0xff]
  %v2867 = vld [vmem:[%s6 + $0x67c] sm:$0xff]
  %v2868 = vld [vmem:[%s6 + $0x684] sm:$0xff]
  %v2869 = vld [vmem:[%s6 + $0x68c] sm:$0xf]
  %v2870 = vld [vmem:[%s6 + $0x690] sm:$0xff]
  %v2871 = vld [vmem:[%s6 + $0x698] sm:$0xff]
  %v2872 = vld [vmem:[%s6 + $0x6a0] sm:$0xff]
  %v2873 = vld [vmem:[%s6 + $0x6a8] sm:$0xf]
  %v2874 = vld [vmem:[%s6 + $0x6ac] sm:$0xff]
  %v2875 = vld [vmem:[%s6 + $0x6b4] sm:$0xff]
  %v2876 = vld [vmem:[%s6 + $0x6bc] sm:$0xff]
  %v2877 = vld [vmem:[%s6 + $0x6c4] sm:$0xf]
  %v2878 = vld [vmem:[%s6 + $0x6c8] sm:$0xff]
  %v2879 = vld [vmem:[%s6 + $0x6d0] sm:$0xff]
  %v2880 = vld [vmem:[%s6 + $0x6d8] sm:$0xff]
  %v2881 = vld [vmem:[%s6 + $0x6e0] sm:$0xf]
  %v2882 = vld [vmem:[%s6 + $0x6e4] sm:$0xff]
  %v2883 = vld [vmem:[%s6 + $0x6ec] sm:$0xff]
  %v2884 = vld [vmem:[%s6 + $0x6f4] sm:$0xff]
  %v2885 = vld [vmem:[%s6 + $0x6fc] sm:$0xf]
  %v2886 = vpack.c.bf16 %v2570, %v2566
  %v2887 = vpack.c.bf16 %v2571, %v2567
  %v2888 = vpack.c.bf16 %v2572, %v2568
  %v2889 = vpack.c.bf16 %v2573, %v2569
  %v2890 = vpack.c.bf16 %v2578, %v2574
  %v2891 = vpack.c.bf16 %v2579, %v2575
  %v2892 = vpack.c.bf16 %v2580, %v2576
  %v2893 = vpack.c.bf16 %v2581, %v2577
  %v2894 = vpack.c.bf16 %v2586, %v2582
  %v2895 = vpack.c.bf16 %v2587, %v2583
  %v2896 = vpack.c.bf16 %v2588, %v2584
  %v2897 = vpack.c.bf16 %v2589, %v2585
  %v2898 = vpack.c.bf16 %v2594, %v2590
  %v2899 = vpack.c.bf16 %v2595, %v2591
  %v2900 = vpack.c.bf16 %v2596, %v2592
  %v2901 = vpack.c.bf16 %v2597, %v2593
  %v2902 = vpack.c.bf16 %v2602, %v2598
  %v2903 = vpack.c.bf16 %v2603, %v2599
  %v2904 = vpack.c.bf16 %v2604, %v2600
  %v2905 = vpack.c.bf16 %v2605, %v2601
  %v2906 = vpack.c.bf16 %v2610, %v2606
  %v2907 = vpack.c.bf16 %v2611, %v2607
  %v2908 = vpack.c.bf16 %v2612, %v2608
  %v2909 = vpack.c.bf16 %v2613, %v2609
  %v2910 = vpack.c.bf16 %v2618, %v2614
  %v2911 = vpack.c.bf16 %v2619, %v2615
  %v2912 = vpack.c.bf16 %v2620, %v2616
  %v2913 = vpack.c.bf16 %v2621, %v2617
  %v2914 = vpack.c.bf16 %v2626, %v2622
  %v2915 = vpack.c.bf16 %v2627, %v2623
  %v2916 = vpack.c.bf16 %v2628, %v2624
  %v2917 = vpack.c.bf16 %v2629, %v2625
  %v2918 = vld [vmem:[%s7] sm:$0x7f]
  %v2920 = vlaneseq
  %v2921 = vshrl.u32 %v2920, 7
  %v2922 = vsub.s32 0, %v2921
  %v2923 = vrot.slane %v2918, %v2922
  %v2924 = vlaneseq
  %v2925 = vshrl.u32 %v2924, 7
  %v2926 = vsub.s32 1, %v2925
  %v2927 = vrot.slane %v2918, %v2926
  %v2928 = vlaneseq
  %v2929 = vshrl.u32 %v2928, 7
  %v2930 = vsub.s32 2, %v2929
  %v2931 = vrot.slane %v2918, %v2930
  %v2932 = vlaneseq
  %v2933 = vshrl.u32 %v2932, 7
  %v2934 = vsub.s32 3, %v2933
  %v2935 = vrot.slane %v2918, %v2934
  %v2936 = vlaneseq
  %v2937 = vshrl.u32 %v2936, 7
  %v2938 = vsub.s32 4, %v2937
  %v2939 = vrot.slane %v2918, %v2938
  %v2940 = vlaneseq
  %v2941 = vshrl.u32 %v2940, 7
  %v2942 = vsub.s32 5, %v2941
  %v2943 = vrot.slane %v2918, %v2942
  %v2944 = vlaneseq
  %v2945 = vshrl.u32 %v2944, 7
  %v2946 = vsub.s32 6, %v2945
  %v2947 = vrot.slane %v2918, %v2946
  %v3211 = vunpack.c.l.b16 %v2630
  %v3212 = vunpack.c.h.b16 %v2630
  %v3213 = vunpack.c.l.b16 %v2631
  %v3214 = vunpack.c.h.b16 %v2631
  %v3215 = vunpack.c.l.b16 %v2632
  %v3216 = vunpack.c.h.b16 %v2632
  %v3217 = vunpack.c.l.b16 %v2633
  %v3218 = vunpack.c.l.b16 %v2634
  %v3219 = vunpack.c.h.b16 %v2634
  %v3220 = vunpack.c.l.b16 %v2635
  %v3221 = vunpack.c.h.b16 %v2635
  %v3222 = vunpack.c.l.b16 %v2636
  %v3223 = vunpack.c.h.b16 %v2636
  %v3224 = vunpack.c.l.b16 %v2637
  %v3225 = vunpack.c.l.b16 %v2638
  %v3226 = vunpack.c.h.b16 %v2638
  %v3227 = vunpack.c.l.b16 %v2639
  %v3228 = vunpack.c.h.b16 %v2639
  %v3229 = vunpack.c.l.b16 %v2640
  %v3230 = vunpack.c.h.b16 %v2640
  %v3231 = vunpack.c.l.b16 %v2641
  %v3232 = vunpack.c.l.b16 %v2642
  %v3233 = vunpack.c.h.b16 %v2642
  %v3234 = vunpack.c.l.b16 %v2643
  %v3235 = vunpack.c.h.b16 %v2643
  %v3236 = vunpack.c.l.b16 %v2644
  %v3237 = vunpack.c.h.b16 %v2644
  %v3238 = vunpack.c.l.b16 %v2645
  %v3239 = vunpack.c.l.b16 %v2646
  %v3240 = vunpack.c.h.b16 %v2646
  %v3241 = vunpack.c.l.b16 %v2647
  %v3242 = vunpack.c.h.b16 %v2647
  %v3243 = vunpack.c.l.b16 %v2648
  %v3244 = vunpack.c.h.b16 %v2648
  %v3245 = vunpack.c.l.b16 %v2649
  %v3246 = vunpack.c.l.b16 %v2650
  %v3247 = vunpack.c.h.b16 %v2650
  %v3248 = vunpack.c.l.b16 %v2651
  %v3249 = vunpack.c.h.b16 %v2651
  %v3250 = vunpack.c.l.b16 %v2652
  %v3251 = vunpack.c.h.b16 %v2652
  %v3252 = vunpack.c.l.b16 %v2653
  %v3253 = vunpack.c.l.b16 %v2654
  %v3254 = vunpack.c.h.b16 %v2654
  %v3255 = vunpack.c.l.b16 %v2655
  %v3256 = vunpack.c.h.b16 %v2655
  %v3257 = vunpack.c.l.b16 %v2656
  %v3258 = vunpack.c.h.b16 %v2656
  %v3259 = vunpack.c.l.b16 %v2657
  %v3260 = vunpack.c.l.b16 %v2658
  %v3261 = vunpack.c.h.b16 %v2658
  %v3262 = vunpack.c.l.b16 %v2659
  %v3263 = vunpack.c.h.b16 %v2659
  %v3264 = vunpack.c.l.b16 %v2660
  %v3265 = vunpack.c.h.b16 %v2660
  %v3266 = vunpack.c.l.b16 %v2661
  %v3267 = vunpack.c.l.b16 %v2662
  %v3268 = vunpack.c.h.b16 %v2662
  %v3269 = vunpack.c.l.b16 %v2663
  %v3270 = vunpack.c.h.b16 %v2663
  %v3271 = vunpack.c.l.b16 %v2664
  %v3272 = vunpack.c.h.b16 %v2664
  %v3273 = vunpack.c.l.b16 %v2665
  %v3274 = vunpack.c.l.b16 %v2666
  %v3275 = vunpack.c.h.b16 %v2666
  %v3276 = vunpack.c.l.b16 %v2667
  %v3277 = vunpack.c.h.b16 %v2667
  %v3278 = vunpack.c.l.b16 %v2668
  %v3279 = vunpack.c.h.b16 %v2668
  %v3280 = vunpack.c.l.b16 %v2669
  %v3281 = vunpack.c.l.b16 %v2670
  %v3282 = vunpack.c.h.b16 %v2670
  %v3283 = vunpack.c.l.b16 %v2671
  %v3284 = vunpack.c.h.b16 %v2671
  %v3285 = vunpack.c.l.b16 %v2672
  %v3286 = vunpack.c.h.b16 %v2672
  %v3287 = vunpack.c.l.b16 %v2673
  %v3288 = vunpack.c.l.b16 %v2674
  %v3289 = vunpack.c.h.b16 %v2674
  %v3290 = vunpack.c.l.b16 %v2675
  %v3291 = vunpack.c.h.b16 %v2675
  %v3292 = vunpack.c.l.b16 %v2676
  %v3293 = vunpack.c.h.b16 %v2676
  %v3294 = vunpack.c.l.b16 %v2677
  %v3295 = vunpack.c.l.b16 %v2678
  %v3296 = vunpack.c.h.b16 %v2678
  %v3297 = vunpack.c.l.b16 %v2679
  %v3298 = vunpack.c.h.b16 %v2679
  %v3299 = vunpack.c.l.b16 %v2680
  %v3300 = vunpack.c.h.b16 %v2680
  %v3301 = vunpack.c.l.b16 %v2681
  %v3302 = vunpack.c.l.b16 %v2682
  %v3303 = vunpack.c.h.b16 %v2682
  %v3304 = vunpack.c.l.b16 %v2683
  %v3305 = vunpack.c.h.b16 %v2683
  %v3306 = vunpack.c.l.b16 %v2684
  %v3307 = vunpack.c.h.b16 %v2684
  %v3308 = vunpack.c.l.b16 %v2685
  %v3309 = vunpack.c.l.b16 %v2686
  %v3310 = vunpack.c.h.b16 %v2686
  %v3311 = vunpack.c.l.b16 %v2687
  %v3312 = vunpack.c.h.b16 %v2687
  %v3313 = vunpack.c.l.b16 %v2688
  %v3314 = vunpack.c.h.b16 %v2688
  %v3315 = vunpack.c.l.b16 %v2689
  %v3316 = vunpack.c.l.b16 %v2690
  %v3317 = vunpack.c.h.b16 %v2690
  %v3318 = vunpack.c.l.b16 %v2691
  %v3319 = vunpack.c.h.b16 %v2691
  %v3320 = vunpack.c.l.b16 %v2692
  %v3321 = vunpack.c.h.b16 %v2692
  %v3322 = vunpack.c.l.b16 %v2693
  %v3323 = vunpack.c.l.b16 %v2694
  %v3324 = vunpack.c.h.b16 %v2694
  %v3325 = vunpack.c.l.b16 %v2695
  %v3326 = vunpack.c.h.b16 %v2695
  %v3327 = vunpack.c.l.b16 %v2696
  %v3328 = vunpack.c.h.b16 %v2696
  %v3329 = vunpack.c.l.b16 %v2697
  %v3330 = vunpack.c.l.b16 %v2698
  %v3331 = vunpack.c.h.b16 %v2698
  %v3332 = vunpack.c.l.b16 %v2699
  %v3333 = vunpack.c.h.b16 %v2699
  %v3334 = vunpack.c.l.b16 %v2700
  %v3335 = vunpack.c.h.b16 %v2700
  %v3336 = vunpack.c.l.b16 %v2701
  %v3337 = vunpack.c.l.b16 %v2702
  %v3338 = vunpack.c.h.b16 %v2702
  %v3339 = vunpack.c.l.b16 %v2703
  %v3340 = vunpack.c.h.b16 %v2703
  %v3341 = vunpack.c.l.b16 %v2704
  %v3342 = vunpack.c.h.b16 %v2704
  %v3343 = vunpack.c.l.b16 %v2705
  %v3344 = vunpack.c.l.b16 %v2706
  %v3345 = vunpack.c.h.b16 %v2706
  %v3346 = vunpack.c.l.b16 %v2707
  %v3347 = vunpack.c.h.b16 %v2707
  %v3348 = vunpack.c.l.b16 %v2708
  %v3349 = vunpack.c.h.b16 %v2708
  %v3350 = vunpack.c.l.b16 %v2709
  %v3351 = vunpack.c.l.b16 %v2710
  %v3352 = vunpack.c.h.b16 %v2710
  %v3353 = vunpack.c.l.b16 %v2711
  %v3354 = vunpack.c.h.b16 %v2711
  %v3355 = vunpack.c.l.b16 %v2712
  %v3356 = vunpack.c.h.b16 %v2712
  %v3357 = vunpack.c.l.b16 %v2713
  %v3358 = vunpack.c.l.b16 %v2714
  %v3359 = vunpack.c.h.b16 %v2714
  %v3360 = vunpack.c.l.b16 %v2715
  %v3361 = vunpack.c.h.b16 %v2715
  %v3362 = vunpack.c.l.b16 %v2716
  %v3363 = vunpack.c.h.b16 %v2716
  %v3364 = vunpack.c.l.b16 %v2717
  %v3365 = vunpack.c.l.b16 %v2718
  %v3366 = vunpack.c.h.b16 %v2718
  %v3367 = vunpack.c.l.b16 %v2719
  %v3368 = vunpack.c.h.b16 %v2719
  %v3369 = vunpack.c.l.b16 %v2720
  %v3370 = vunpack.c.h.b16 %v2720
  %v3371 = vunpack.c.l.b16 %v2721
  %v3372 = vunpack.c.l.b16 %v2722
  %v3373 = vunpack.c.h.b16 %v2722
  %v3374 = vunpack.c.l.b16 %v2723
  %v3375 = vunpack.c.h.b16 %v2723
  %v3376 = vunpack.c.l.b16 %v2724
  %v3377 = vunpack.c.h.b16 %v2724
  %v3378 = vunpack.c.l.b16 %v2725
  %v3379 = vunpack.c.l.b16 %v2726
  %v3380 = vunpack.c.h.b16 %v2726
  %v3381 = vunpack.c.l.b16 %v2727
  %v3382 = vunpack.c.h.b16 %v2727
  %v3383 = vunpack.c.l.b16 %v2728
  %v3384 = vunpack.c.h.b16 %v2728
  %v3385 = vunpack.c.l.b16 %v2729
  %v3386 = vunpack.c.l.b16 %v2730
  %v3387 = vunpack.c.h.b16 %v2730
  %v3388 = vunpack.c.l.b16 %v2731
  %v3389 = vunpack.c.h.b16 %v2731
  %v3390 = vunpack.c.l.b16 %v2732
  %v3391 = vunpack.c.h.b16 %v2732
  %v3392 = vunpack.c.l.b16 %v2733
  %v3393 = vunpack.c.l.b16 %v2734
  %v3394 = vunpack.c.h.b16 %v2734
  %v3395 = vunpack.c.l.b16 %v2735
  %v3396 = vunpack.c.h.b16 %v2735
  %v3397 = vunpack.c.l.b16 %v2736
  %v3398 = vunpack.c.h.b16 %v2736
  %v3399 = vunpack.c.l.b16 %v2737
  %v3400 = vunpack.c.l.b16 %v2738
  %v3401 = vunpack.c.h.b16 %v2738
  %v3402 = vunpack.c.l.b16 %v2739
  %v3403 = vunpack.c.h.b16 %v2739
  %v3404 = vunpack.c.l.b16 %v2740
  %v3405 = vunpack.c.h.b16 %v2740
  %v3406 = vunpack.c.l.b16 %v2741
  %v3407 = vunpack.c.l.b16 %v2742
  %v3408 = vunpack.c.h.b16 %v2742
  %v3409 = vunpack.c.l.b16 %v2743
  %v3410 = vunpack.c.h.b16 %v2743
  %v3411 = vunpack.c.l.b16 %v2744
  %v3412 = vunpack.c.h.b16 %v2744
  %v3413 = vunpack.c.l.b16 %v2745
  %v3414 = vunpack.c.l.b16 %v2746
  %v3415 = vunpack.c.h.b16 %v2746
  %v3416 = vunpack.c.l.b16 %v2747
  %v3417 = vunpack.c.h.b16 %v2747
  %v3418 = vunpack.c.l.b16 %v2748
  %v3419 = vunpack.c.h.b16 %v2748
  %v3420 = vunpack.c.l.b16 %v2749
  %v3421 = vunpack.c.l.b16 %v2750
  %v3422 = vunpack.c.h.b16 %v2750
  %v3423 = vunpack.c.l.b16 %v2751
  %v3424 = vunpack.c.h.b16 %v2751
  %v3425 = vunpack.c.l.b16 %v2752
  %v3426 = vunpack.c.h.b16 %v2752
  %v3427 = vunpack.c.l.b16 %v2753
  %v3428 = vunpack.c.l.b16 %v2754
  %v3429 = vunpack.c.h.b16 %v2754
  %v3430 = vunpack.c.l.b16 %v2755
  %v3431 = vunpack.c.h.b16 %v2755
  %v3432 = vunpack.c.l.b16 %v2756
  %v3433 = vunpack.c.h.b16 %v2756
  %v3434 = vunpack.c.l.b16 %v2757
  %v3435 = vunpack.c.l.b16 %v2758
  %v3436 = vunpack.c.h.b16 %v2758
  %v3437 = vunpack.c.l.b16 %v2759
  %v3438 = vunpack.c.h.b16 %v2759
  %v3439 = vunpack.c.l.b16 %v2760
  %v3440 = vunpack.c.h.b16 %v2760
  %v3441 = vunpack.c.l.b16 %v2761
  %v3442 = vunpack.c.l.b16 %v2762
  %v3443 = vunpack.c.h.b16 %v2762
  %v3444 = vunpack.c.l.b16 %v2763
  %v3445 = vunpack.c.h.b16 %v2763
  %v3446 = vunpack.c.l.b16 %v2764
  %v3447 = vunpack.c.h.b16 %v2764
  %v3448 = vunpack.c.l.b16 %v2765
  %v3449 = vunpack.c.l.b16 %v2766
  %v3450 = vunpack.c.h.b16 %v2766
  %v3451 = vunpack.c.l.b16 %v2767
  %v3452 = vunpack.c.h.b16 %v2767
  %v3453 = vunpack.c.l.b16 %v2768
  %v3454 = vunpack.c.h.b16 %v2768
  %v3455 = vunpack.c.l.b16 %v2769
  %v3456 = vunpack.c.l.b16 %v2770
  %v3457 = vunpack.c.h.b16 %v2770
  %v3458 = vunpack.c.l.b16 %v2771
  %v3459 = vunpack.c.h.b16 %v2771
  %v3460 = vunpack.c.l.b16 %v2772
  %v3461 = vunpack.c.h.b16 %v2772
  %v3462 = vunpack.c.l.b16 %v2773
  %v3463 = vunpack.c.l.b16 %v2774
  %v3464 = vunpack.c.h.b16 %v2774
  %v3465 = vunpack.c.l.b16 %v2775
  %v3466 = vunpack.c.h.b16 %v2775
  %v3467 = vunpack.c.l.b16 %v2776
  %v3468 = vunpack.c.h.b16 %v2776
  %v3469 = vunpack.c.l.b16 %v2777
  %v3470 = vunpack.c.l.b16 %v2778
  %v3471 = vunpack.c.h.b16 %v2778
  %v3472 = vunpack.c.l.b16 %v2779
  %v3473 = vunpack.c.h.b16 %v2779
  %v3474 = vunpack.c.l.b16 %v2780
  %v3475 = vunpack.c.h.b16 %v2780
  %v3476 = vunpack.c.l.b16 %v2781
  %v3477 = vunpack.c.l.b16 %v2782
  %v3478 = vunpack.c.h.b16 %v2782
  %v3479 = vunpack.c.l.b16 %v2783
  %v3480 = vunpack.c.h.b16 %v2783
  %v3481 = vunpack.c.l.b16 %v2784
  %v3482 = vunpack.c.h.b16 %v2784
  %v3483 = vunpack.c.l.b16 %v2785
  %v3484 = vunpack.c.l.b16 %v2786
  %v3485 = vunpack.c.h.b16 %v2786
  %v3486 = vunpack.c.l.b16 %v2787
  %v3487 = vunpack.c.h.b16 %v2787
  %v3488 = vunpack.c.l.b16 %v2788
  %v3489 = vunpack.c.h.b16 %v2788
  %v3490 = vunpack.c.l.b16 %v2789
  %v3491 = vunpack.c.l.b16 %v2790
  %v3492 = vunpack.c.h.b16 %v2790
  %v3493 = vunpack.c.l.b16 %v2791
  %v3494 = vunpack.c.h.b16 %v2791
  %v3495 = vunpack.c.l.b16 %v2792
  %v3496 = vunpack.c.h.b16 %v2792
  %v3497 = vunpack.c.l.b16 %v2793
  %v3498 = vunpack.c.l.b16 %v2794
  %v3499 = vunpack.c.h.b16 %v2794
  %v3500 = vunpack.c.l.b16 %v2795
  %v3501 = vunpack.c.h.b16 %v2795
  %v3502 = vunpack.c.l.b16 %v2796
  %v3503 = vunpack.c.h.b16 %v2796
  %v3504 = vunpack.c.l.b16 %v2797
  %v3505 = vunpack.c.l.b16 %v2798
  %v3506 = vunpack.c.h.b16 %v2798
  %v3507 = vunpack.c.l.b16 %v2799
  %v3508 = vunpack.c.h.b16 %v2799
  %v3509 = vunpack.c.l.b16 %v2800
  %v3510 = vunpack.c.h.b16 %v2800
  %v3511 = vunpack.c.l.b16 %v2801
  %v3512 = vunpack.c.l.b16 %v2802
  %v3513 = vunpack.c.h.b16 %v2802
  %v3514 = vunpack.c.l.b16 %v2803
  %v3515 = vunpack.c.h.b16 %v2803
  %v3516 = vunpack.c.l.b16 %v2804
  %v3517 = vunpack.c.h.b16 %v2804
  %v3518 = vunpack.c.l.b16 %v2805
  %v3519 = vunpack.c.l.b16 %v2806
  %v3520 = vunpack.c.h.b16 %v2806
  %v3521 = vunpack.c.l.b16 %v2807
  %v3522 = vunpack.c.h.b16 %v2807
  %v3523 = vunpack.c.l.b16 %v2808
  %v3524 = vunpack.c.h.b16 %v2808
  %v3525 = vunpack.c.l.b16 %v2809
  %v3526 = vunpack.c.l.b16 %v2810
  %v3527 = vunpack.c.h.b16 %v2810
  %v3528 = vunpack.c.l.b16 %v2811
  %v3529 = vunpack.c.h.b16 %v2811
  %v3530 = vunpack.c.l.b16 %v2812
  %v3531 = vunpack.c.h.b16 %v2812
  %v3532 = vunpack.c.l.b16 %v2813
  %v3533 = vunpack.c.l.b16 %v2814
  %v3534 = vunpack.c.h.b16 %v2814
  %v3535 = vunpack.c.l.b16 %v2815
  %v3536 = vunpack.c.h.b16 %v2815
  %v3537 = vunpack.c.l.b16 %v2816
  %v3538 = vunpack.c.h.b16 %v2816
  %v3539 = vunpack.c.l.b16 %v2817
  %v3540 = vunpack.c.l.b16 %v2818
  %v3541 = vunpack.c.h.b16 %v2818
  %v3542 = vunpack.c.l.b16 %v2819
  %v3543 = vunpack.c.h.b16 %v2819
  %v3544 = vunpack.c.l.b16 %v2820
  %v3545 = vunpack.c.h.b16 %v2820
  %v3546 = vunpack.c.l.b16 %v2821
  %v3547 = vunpack.c.l.b16 %v2822
  %v3548 = vunpack.c.h.b16 %v2822
  %v3549 = vunpack.c.l.b16 %v2823
  %v3550 = vunpack.c.h.b16 %v2823
  %v3551 = vunpack.c.l.b16 %v2824
  %v3552 = vunpack.c.h.b16 %v2824
  %v3553 = vunpack.c.l.b16 %v2825
  %v3554 = vunpack.c.l.b16 %v2826
  %v3555 = vunpack.c.h.b16 %v2826
  %v3556 = vunpack.c.l.b16 %v2827
  %v3557 = vunpack.c.h.b16 %v2827
  %v3558 = vunpack.c.l.b16 %v2828
  %v3559 = vunpack.c.h.b16 %v2828
  %v3560 = vunpack.c.l.b16 %v2829
  %v3561 = vunpack.c.l.b16 %v2830
  %v3562 = vunpack.c.h.b16 %v2830
  %v3563 = vunpack.c.l.b16 %v2831
  %v3564 = vunpack.c.h.b16 %v2831
  %v3565 = vunpack.c.l.b16 %v2832
  %v3566 = vunpack.c.h.b16 %v2832
  %v3567 = vunpack.c.l.b16 %v2833
  %v3568 = vunpack.c.l.b16 %v2834
  %v3569 = vunpack.c.h.b16 %v2834
  %v3570 = vunpack.c.l.b16 %v2835
  %v3571 = vunpack.c.h.b16 %v2835
  %v3572 = vunpack.c.l.b16 %v2836
  %v3573 = vunpack.c.h.b16 %v2836
  %v3574 = vunpack.c.l.b16 %v2837
  %v3575 = vunpack.c.l.b16 %v2838
  %v3576 = vunpack.c.h.b16 %v2838
  %v3577 = vunpack.c.l.b16 %v2839
  %v3578 = vunpack.c.h.b16 %v2839
  %v3579 = vunpack.c.l.b16 %v2840
  %v3580 = vunpack.c.h.b16 %v2840
  %v3581 = vunpack.c.l.b16 %v2841
  %v3582 = vunpack.c.l.b16 %v2842
  %v3583 = vunpack.c.h.b16 %v2842
  %v3584 = vunpack.c.l.b16 %v2843
  %v3585 = vunpack.c.h.b16 %v2843
  %v3586 = vunpack.c.l.b16 %v2844
  %v3587 = vunpack.c.h.b16 %v2844
  %v3588 = vunpack.c.l.b16 %v2845
  %v3589 = vunpack.c.l.b16 %v2846
  %v3590 = vunpack.c.h.b16 %v2846
  %v3591 = vunpack.c.l.b16 %v2847
  %v3592 = vunpack.c.h.b16 %v2847
  %v3593 = vunpack.c.l.b16 %v2848
  %v3594 = vunpack.c.h.b16 %v2848
  %v3595 = vunpack.c.l.b16 %v2849
  %v3596 = vunpack.c.l.b16 %v2850
  %v3597 = vunpack.c.h.b16 %v2850
  %v3598 = vunpack.c.l.b16 %v2851
  %v3599 = vunpack.c.h.b16 %v2851
  %v3600 = vunpack.c.l.b16 %v2852
  %v3601 = vunpack.c.h.b16 %v2852
  %v3602 = vunpack.c.l.b16 %v2853
  %v3603 = vunpack.c.l.b16 %v2854
  %v3604 = vunpack.c.h.b16 %v2854
  %v3605 = vunpack.c.l.b16 %v2855
  %v3606 = vunpack.c.h.b16 %v2855
  %v3607 = vunpack.c.l.b16 %v2856
  %v3608 = vunpack.c.h.b16 %v2856
  %v3609 = vunpack.c.l.b16 %v2857
  %v3610 = vunpack.c.l.b16 %v2858
  %v3611 = vunpack.c.h.b16 %v2858
  %v3612 = vunpack.c.l.b16 %v2859
  %v3613 = vunpack.c.h.b16 %v2859
  %v3614 = vunpack.c.l.b16 %v2860
  %v3615 = vunpack.c.h.b16 %v2860
  %v3616 = vunpack.c.l.b16 %v2861
  %v3617 = vunpack.c.l.b16 %v2862
  %v3618 = vunpack.c.h.b16 %v2862
  %v3619 = vunpack.c.l.b16 %v2863
  %v3620 = vunpack.c.h.b16 %v2863
  %v3621 = vunpack.c.l.b16 %v2864
  %v3622 = vunpack.c.h.b16 %v2864
  %v3623 = vunpack.c.l.b16 %v2865
  %v3624 = vunpack.c.l.b16 %v2866
  %v3625 = vunpack.c.h.b16 %v2866
  %v3626 = vunpack.c.l.b16 %v2867
  %v3627 = vunpack.c.h.b16 %v2867
  %v3628 = vunpack.c.l.b16 %v2868
  %v3629 = vunpack.c.h.b16 %v2868
  %v3630 = vunpack.c.l.b16 %v2869
  %v3631 = vunpack.c.l.b16 %v2870
  %v3632 = vunpack.c.h.b16 %v2870
  %v3633 = vunpack.c.l.b16 %v2871
  %v3634 = vunpack.c.h.b16 %v2871
  %v3635 = vunpack.c.l.b16 %v2872
  %v3636 = vunpack.c.h.b16 %v2872
  %v3637 = vunpack.c.l.b16 %v2873
  %v3638 = vunpack.c.l.b16 %v2874
  %v3639 = vunpack.c.h.b16 %v2874
  %v3640 = vunpack.c.l.b16 %v2875
  %v3641 = vunpack.c.h.b16 %v2875
  %v3642 = vunpack.c.l.b16 %v2876
  %v3643 = vunpack.c.h.b16 %v2876
  %v3644 = vunpack.c.l.b16 %v2877
  %v3645 = vunpack.c.l.b16 %v2878
  %v3646 = vunpack.c.h.b16 %v2878
  %v3647 = vunpack.c.l.b16 %v2879
  %v3648 = vunpack.c.h.b16 %v2879
  %v3649 = vunpack.c.l.b16 %v2880
  %v3650 = vunpack.c.h.b16 %v2880
  %v3651 = vunpack.c.l.b16 %v2881
  %v3652 = vunpack.c.l.b16 %v2882
  %v3653 = vunpack.c.h.b16 %v2882
  %v3654 = vunpack.c.l.b16 %v2883
  %v3655 = vunpack.c.h.b16 %v2883
  %v3656 = vunpack.c.l.b16 %v2884
  %v3657 = vunpack.c.h.b16 %v2884
  %v3658 = vunpack.c.l.b16 %v2885
  %v3659 = vpack.c.b16 %v3218, %v3211
  %v3660 = vpack.c.b16 %v3219, %v3212
  %v3661 = vpack.c.b16 %v3220, %v3213
  %v3662 = vpack.c.b16 %v3221, %v3214
  %v3663 = vpack.c.b16 %v3222, %v3215
  %v3664 = vpack.c.b16 %v3223, %v3216
  %v3665 = vpack.c.b16 %v3224, %v3217
  %v3666 = vpack.c.b16 %v3232, %v3225
  %v3667 = vpack.c.b16 %v3233, %v3226
  %v3668 = vpack.c.b16 %v3234, %v3227
  %v3669 = vpack.c.b16 %v3235, %v3228
  %v3670 = vpack.c.b16 %v3236, %v3229
  %v3671 = vpack.c.b16 %v3237, %v3230
  %v3672 = vpack.c.b16 %v3238, %v3231
  %v3673 = vpack.c.b16 %v3246, %v3239
  %v3674 = vpack.c.b16 %v3247, %v3240
  %v3675 = vpack.c.b16 %v3248, %v3241
  %v3676 = vpack.c.b16 %v3249, %v3242
  %v3677 = vpack.c.b16 %v3250, %v3243
  %v3678 = vpack.c.b16 %v3251, %v3244
  %v3679 = vpack.c.b16 %v3252, %v3245
  %v3680 = vpack.c.b16 %v3260, %v3253
  %v3681 = vpack.c.b16 %v3261, %v3254
  %v3682 = vpack.c.b16 %v3262, %v3255
  %v3683 = vpack.c.b16 %v3263, %v3256
  %v3684 = vpack.c.b16 %v3264, %v3257
  %v3685 = vpack.c.b16 %v3265, %v3258
  %v3686 = vpack.c.b16 %v3266, %v3259
  %v3687 = vpack.c.b16 %v3274, %v3267
  %v3688 = vpack.c.b16 %v3275, %v3268
  %v3689 = vpack.c.b16 %v3276, %v3269
  %v3690 = vpack.c.b16 %v3277, %v3270
  %v3691 = vpack.c.b16 %v3278, %v3271
  %v3692 = vpack.c.b16 %v3279, %v3272
  %v3693 = vpack.c.b16 %v3280, %v3273
  %v3694 = vpack.c.b16 %v3288, %v3281
  %v3695 = vpack.c.b16 %v3289, %v3282
  %v3696 = vpack.c.b16 %v3290, %v3283
  %v3697 = vpack.c.b16 %v3291, %v3284
  %v3698 = vpack.c.b16 %v3292, %v3285
  %v3699 = vpack.c.b16 %v3293, %v3286
  %v3700 = vpack.c.b16 %v3294, %v3287
  %v3701 = vpack.c.b16 %v3302, %v3295
  %v3702 = vpack.c.b16 %v3303, %v3296
  %v3703 = vpack.c.b16 %v3304, %v3297
  %v3704 = vpack.c.b16 %v3305, %v3298
  %v3705 = vpack.c.b16 %v3306, %v3299
  %v3706 = vpack.c.b16 %v3307, %v3300
  %v3707 = vpack.c.b16 %v3308, %v3301
  %v3708 = vpack.c.b16 %v3316, %v3309
  %v3709 = vpack.c.b16 %v3317, %v3310
  %v3710 = vpack.c.b16 %v3318, %v3311
  %v3711 = vpack.c.b16 %v3319, %v3312
  %v3712 = vpack.c.b16 %v3320, %v3313
  %v3713 = vpack.c.b16 %v3321, %v3314
  %v3714 = vpack.c.b16 %v3322, %v3315
  %v3715 = vpack.c.b16 %v3330, %v3323
  %v3716 = vpack.c.b16 %v3331, %v3324
  %v3717 = vpack.c.b16 %v3332, %v3325
  %v3718 = vpack.c.b16 %v3333, %v3326
  %v3719 = vpack.c.b16 %v3334, %v3327
  %v3720 = vpack.c.b16 %v3335, %v3328
  %v3721 = vpack.c.b16 %v3336, %v3329
  %v3722 = vpack.c.b16 %v3344, %v3337
  %v3723 = vpack.c.b16 %v3345, %v3338
  %v3724 = vpack.c.b16 %v3346, %v3339
  %v3725 = vpack.c.b16 %v3347, %v3340
  %v3726 = vpack.c.b16 %v3348, %v3341
  %v3727 = vpack.c.b16 %v3349, %v3342
  %v3728 = vpack.c.b16 %v3350, %v3343
  %v3729 = vpack.c.b16 %v3358, %v3351
  %v3730 = vpack.c.b16 %v3359, %v3352
  %v3731 = vpack.c.b16 %v3360, %v3353
  %v3732 = vpack.c.b16 %v3361, %v3354
  %v3733 = vpack.c.b16 %v3362, %v3355
  %v3734 = vpack.c.b16 %v3363, %v3356
  %v3735 = vpack.c.b16 %v3364, %v3357
  %v3736 = vpack.c.b16 %v3372, %v3365
  %v3737 = vpack.c.b16 %v3373, %v3366
  %v3738 = vpack.c.b16 %v3374, %v3367
  %v3739 = vpack.c.b16 %v3375, %v3368
  %v3740 = vpack.c.b16 %v3376, %v3369
  %v3741 = vpack.c.b16 %v3377, %v3370
  %v3742 = vpack.c.b16 %v3378, %v3371
  %v3743 = vpack.c.b16 %v3386, %v3379
  %v3744 = vpack.c.b16 %v3387, %v3380
  %v3745 = vpack.c.b16 %v3388, %v3381
  %v3746 = vpack.c.b16 %v3389, %v3382
  %v3747 = vpack.c.b16 %v3390, %v3383
  %v3748 = vpack.c.b16 %v3391, %v3384
  %v3749 = vpack.c.b16 %v3392, %v3385
  %v3750 = vpack.c.b16 %v3400, %v3393
  %v3751 = vpack.c.b16 %v3401, %v3394
  %v3752 = vpack.c.b16 %v3402, %v3395
  %v3753 = vpack.c.b16 %v3403, %v3396
  %v3754 = vpack.c.b16 %v3404, %v3397
  %v3755 = vpack.c.b16 %v3405, %v3398
  %v3756 = vpack.c.b16 %v3406, %v3399
  %v3757 = vpack.c.b16 %v3414, %v3407
  %v3758 = vpack.c.b16 %v3415, %v3408
  %v3759 = vpack.c.b16 %v3416, %v3409
  %v3760 = vpack.c.b16 %v3417, %v3410
  %v3761 = vpack.c.b16 %v3418, %v3411
  %v3762 = vpack.c.b16 %v3419, %v3412
  %v3763 = vpack.c.b16 %v3420, %v3413
  %v3764 = vpack.c.b16 %v3428, %v3421
  %v3765 = vpack.c.b16 %v3429, %v3422
  %v3766 = vpack.c.b16 %v3430, %v3423
  %v3767 = vpack.c.b16 %v3431, %v3424
  %v3768 = vpack.c.b16 %v3432, %v3425
  %v3769 = vpack.c.b16 %v3433, %v3426
  %v3770 = vpack.c.b16 %v3434, %v3427
  %v3771 = vpack.c.b16 %v3442, %v3435
  %v3772 = vpack.c.b16 %v3443, %v3436
  %v3773 = vpack.c.b16 %v3444, %v3437
  %v3774 = vpack.c.b16 %v3445, %v3438
  %v3775 = vpack.c.b16 %v3446, %v3439
  %v3776 = vpack.c.b16 %v3447, %v3440
  %v3777 = vpack.c.b16 %v3448, %v3441
  %v3778 = vpack.c.b16 %v3456, %v3449
  %v3779 = vpack.c.b16 %v3457, %v3450
  %v3780 = vpack.c.b16 %v3458, %v3451
  %v3781 = vpack.c.b16 %v3459, %v3452
  %v3782 = vpack.c.b16 %v3460, %v3453
  %v3783 = vpack.c.b16 %v3461, %v3454
  %v3784 = vpack.c.b16 %v3462, %v3455
  %v3785 = vpack.c.b16 %v3470, %v3463
  %v3786 = vpack.c.b16 %v3471, %v3464
  %v3787 = vpack.c.b16 %v3472, %v3465
  %v3788 = vpack.c.b16 %v3473, %v3466
  %v3789 = vpack.c.b16 %v3474, %v3467
  %v3790 = vpack.c.b16 %v3475, %v3468
  %v3791 = vpack.c.b16 %v3476, %v3469
  %v3792 = vpack.c.b16 %v3484, %v3477
  %v3793 = vpack.c.b16 %v3485, %v3478
  %v3794 = vpack.c.b16 %v3486, %v3479
  %v3795 = vpack.c.b16 %v3487, %v3480
  %v3796 = vpack.c.b16 %v3488, %v3481
  %v3797 = vpack.c.b16 %v3489, %v3482
  %v3798 = vpack.c.b16 %v3490, %v3483
  %v3799 = vpack.c.b16 %v3498, %v3491
  %v3800 = vpack.c.b16 %v3499, %v3492
  %v3801 = vpack.c.b16 %v3500, %v3493
  %v3802 = vpack.c.b16 %v3501, %v3494
  %v3803 = vpack.c.b16 %v3502, %v3495
  %v3804 = vpack.c.b16 %v3503, %v3496
  %v3805 = vpack.c.b16 %v3504, %v3497
  %v3806 = vpack.c.b16 %v3512, %v3505
  %v3807 = vpack.c.b16 %v3513, %v3506
  %v3808 = vpack.c.b16 %v3514, %v3507
  %v3809 = vpack.c.b16 %v3515, %v3508
  %v3810 = vpack.c.b16 %v3516, %v3509
  %v3811 = vpack.c.b16 %v3517, %v3510
  %v3812 = vpack.c.b16 %v3518, %v3511
  %v3813 = vpack.c.b16 %v3526, %v3519
  %v3814 = vpack.c.b16 %v3527, %v3520
  %v3815 = vpack.c.b16 %v3528, %v3521
  %v3816 = vpack.c.b16 %v3529, %v3522
  %v3817 = vpack.c.b16 %v3530, %v3523
  %v3818 = vpack.c.b16 %v3531, %v3524
  %v3819 = vpack.c.b16 %v3532, %v3525
  %v3820 = vpack.c.b16 %v3540, %v3533
  %v3821 = vpack.c.b16 %v3541, %v3534
  %v3822 = vpack.c.b16 %v3542, %v3535
  %v3823 = vpack.c.b16 %v3543, %v3536
  %v3824 = vpack.c.b16 %v3544, %v3537
  %v3825 = vpack.c.b16 %v3545, %v3538
  %v3826 = vpack.c.b16 %v3546, %v3539
  %v3827 = vpack.c.b16 %v3554, %v3547
  %v3828 = vpack.c.b16 %v3555, %v3548
  %v3829 = vpack.c.b16 %v3556, %v3549
  %v3830 = vpack.c.b16 %v3557, %v3550
  %v3831 = vpack.c.b16 %v3558, %v3551
  %v3832 = vpack.c.b16 %v3559, %v3552
  %v3833 = vpack.c.b16 %v3560, %v3553
  %v3834 = vpack.c.b16 %v3568, %v3561
  %v3835 = vpack.c.b16 %v3569, %v3562
  %v3836 = vpack.c.b16 %v3570, %v3563
  %v3837 = vpack.c.b16 %v3571, %v3564
  %v3838 = vpack.c.b16 %v3572, %v3565
  %v3839 = vpack.c.b16 %v3573, %v3566
  %v3840 = vpack.c.b16 %v3574, %v3567
  %v3841 = vpack.c.b16 %v3582, %v3575
  %v3842 = vpack.c.b16 %v3583, %v3576
  %v3843 = vpack.c.b16 %v3584, %v3577
  %v3844 = vpack.c.b16 %v3585, %v3578
  %v3845 = vpack.c.b16 %v3586, %v3579
  %v3846 = vpack.c.b16 %v3587, %v3580
  %v3847 = vpack.c.b16 %v3588, %v3581
  %v3848 = vpack.c.b16 %v3596, %v3589
  %v3849 = vpack.c.b16 %v3597, %v3590
  %v3850 = vpack.c.b16 %v3598, %v3591
  %v3851 = vpack.c.b16 %v3599, %v3592
  %v3852 = vpack.c.b16 %v3600, %v3593
  %v3853 = vpack.c.b16 %v3601, %v3594
  %v3854 = vpack.c.b16 %v3602, %v3595
  %v3855 = vpack.c.b16 %v3610, %v3603
  %v3856 = vpack.c.b16 %v3611, %v3604
  %v3857 = vpack.c.b16 %v3612, %v3605
  %v3858 = vpack.c.b16 %v3613, %v3606
  %v3859 = vpack.c.b16 %v3614, %v3607
  %v3860 = vpack.c.b16 %v3615, %v3608
  %v3861 = vpack.c.b16 %v3616, %v3609
  %v3862 = vpack.c.b16 %v3624, %v3617
  %v3863 = vpack.c.b16 %v3625, %v3618
  %v3864 = vpack.c.b16 %v3626, %v3619
  %v3865 = vpack.c.b16 %v3627, %v3620
  %v3866 = vpack.c.b16 %v3628, %v3621
  %v3867 = vpack.c.b16 %v3629, %v3622
  %v3868 = vpack.c.b16 %v3630, %v3623
  %v3869 = vpack.c.b16 %v3638, %v3631
  %v3870 = vpack.c.b16 %v3639, %v3632
  %v3871 = vpack.c.b16 %v3640, %v3633
  %v3872 = vpack.c.b16 %v3641, %v3634
  %v3873 = vpack.c.b16 %v3642, %v3635
  %v3874 = vpack.c.b16 %v3643, %v3636
  %v3875 = vpack.c.b16 %v3644, %v3637
  %v3876 = vpack.c.b16 %v3652, %v3645
  %v3877 = vpack.c.b16 %v3653, %v3646
  %v3878 = vpack.c.b16 %v3654, %v3647
  %v3879 = vpack.c.b16 %v3655, %v3648
  %v3880 = vpack.c.b16 %v3656, %v3649
  %v3881 = vpack.c.b16 %v3657, %v3650
  %v3882 = vpack.c.b16 %v3658, %v3651
  %4107 = vmatprep.subr.bf16.mxu0 %v3709
  %4108 = vmatpush1.bf16.msra.mxu0 %v3708
  %4109 = vmatprep.subr.bf16.mxu0 %v3702
  %4110 = vmatpush1.bf16.msra.mxu0 %v3701
  %4111 = vmatprep.subr.bf16.mxu0 %v3695
  %4112 = vmatpush1.bf16.msra.mxu0 %v3694
  %4113 = vmatprep.subr.bf16.mxu0 %v3688
  %4114 = vmatpush1.bf16.msra.mxu0 %v3687
  %4115 = vmatprep.subr.bf16.mxu0 %v3681
  %4116 = vmatpush1.bf16.msra.mxu0 %v3680
  %4117 = vmatprep.subr.bf16.mxu0 %v3674
  %4118 = vmatpush1.bf16.msra.mxu0 %v3673
  %4119 = vmatprep.subr.bf16.mxu0 %v3667
  %4120 = vmatpush1.bf16.msra.mxu0 %v3666
  %4121 = vmatprep.subr.bf16.mxu0 %v3660
  %4122 = vmatpush1.bf16.msra.mxu0 %v3659
  %4123 = vmatprep.subr.bf16.mxu0 %v3765
  %4124 = vmatpush2.bf16.msra.mxu0 %v3764
  %4125 = vmatprep.subr.bf16.mxu0 %v3758
  %4126 = vmatpush2.bf16.msra.mxu0 %v3757
  %4127 = vmatprep.subr.bf16.mxu0 %v3751
  %4128 = vmatpush2.bf16.msra.mxu0 %v3750
  %4129 = vmatprep.subr.bf16.mxu0 %v3744
  %4130 = vmatpush2.bf16.msra.mxu0 %v3743
  %4131 = vmatprep.subr.bf16.mxu0 %v3737
  %4132 = vmatpush2.bf16.msra.mxu0 %v3736
  %4133 = vmatprep.subr.bf16.mxu0 %v3730
  %4134 = vmatpush2.bf16.msra.mxu0 %v3729
  %4135 = vmatprep.subr.bf16.mxu0 %v3723
  %4136 = vmatpush2.bf16.msra.mxu0 %v3722
  %4137 = vmatprep.subr.bf16.mxu0 %v3716
  %4138 = vmatpush2.bf16.msra.mxu0 %v3715
  %4139 = vmatprep.mubr.bf16.mxu0 %v2887
  %4140 = vmatmul.mubr.bf16.gmra.mxu0 %v2886
  %v4141 = vpop.f32.mrf.mxu0
  %v4142 = vadd.f32 %v2923, %v4141
  %v4143 = vpop.f32.mrf.mxu0
  %v4144 = vadd.f32 %v2927, %v4143
  %v4145 = vpop.f32.mrf.mxu0
  %v4146 = vadd.f32 %v2923, %v4145
  %v4147 = vpop.f32.mrf.mxu0
  %v4148 = vadd.f32 %v2927, %v4147
  %4149 = vmatprep.mubr.bf16.mxu0 %v2891
  %4150 = vmatmul.mubr.bf16.gmra.mxu0 %v2890
  %v4151 = vpop.f32.mrf.mxu0
  %v4152 = vadd.f32 %v2923, %v4151
  %v4153 = vpop.f32.mrf.mxu0
  %v4154 = vadd.f32 %v2927, %v4153
  %v4155 = vpop.f32.mrf.mxu0
  %v4156 = vadd.f32 %v2923, %v4155
  %v4157 = vpop.f32.mrf.mxu0
  %v4158 = vadd.f32 %v2927, %v4157
  %4159 = vmatprep.mubr.bf16.mxu0 %v2895
  %4160 = vmatmul.mubr.bf16.gmra.mxu0 %v2894
  %v4161 = vpop.f32.mrf.mxu0
  %v4162 = vadd.f32 %v2923, %v4161
  %v4163 = vpop.f32.mrf.mxu0
  %v4164 = vadd.f32 %v2927, %v4163
  %v4165 = vpop.f32.mrf.mxu0
  %v4166 = vadd.f32 %v2923, %v4165
  %v4167 = vpop.f32.mrf.mxu0
  %v4168 = vadd.f32 %v2927, %v4167
  %4169 = vmatprep.mubr.bf16.mxu0 %v2899
  %4170 = vmatmul.mubr.bf16.gmra.mxu0 %v2898
  %v4171 = vpop.f32.mrf.mxu0
  %v4172 = vadd.f32 %v2923, %v4171
  %v4173 = vpop.f32.mrf.mxu0
  %v4174 = vadd.f32 %v2927, %v4173
  %v4175 = vpop.f32.mrf.mxu0
  %v4176 = vadd.f32 %v2923, %v4175
  %v4177 = vpop.f32.mrf.mxu0
  %v4178 = vadd.f32 %v2927, %v4177
  %4179 = vmatprep.mubr.bf16.mxu0 %v2903
  %4180 = vmatmul.mubr.bf16.gmra.mxu0 %v2902
  %v4181 = vpop.f32.mrf.mxu0
  %v4182 = vadd.f32 %v2923, %v4181
  %v4183 = vpop.f32.mrf.mxu0
  %v4184 = vadd.f32 %v2927, %v4183
  %v4185 = vpop.f32.mrf.mxu0
  %v4186 = vadd.f32 %v2923, %v4185
  %v4187 = vpop.f32.mrf.mxu0
  %v4188 = vadd.f32 %v2927, %v4187
  %4189 = vmatprep.mubr.bf16.mxu0 %v2907
  %4190 = vmatmul.mubr.bf16.gmra.mxu0 %v2906
  %v4191 = vpop.f32.mrf.mxu0
  %v4192 = vadd.f32 %v2923, %v4191
  %v4193 = vpop.f32.mrf.mxu0
  %v4194 = vadd.f32 %v2927, %v4193
  %v4195 = vpop.f32.mrf.mxu0
  %v4196 = vadd.f32 %v2923, %v4195
  %v4197 = vpop.f32.mrf.mxu0
  %v4198 = vadd.f32 %v2927, %v4197
  %4199 = vmatprep.mubr.bf16.mxu0 %v2911
  %4200 = vmatmul.mubr.bf16.gmra.mxu0 %v2910
  %v4201 = vpop.f32.mrf.mxu0
  %v4202 = vadd.f32 %v2923, %v4201
  %v4203 = vpop.f32.mrf.mxu0
  %v4204 = vadd.f32 %v2927, %v4203
  %v4205 = vpop.f32.mrf.mxu0
  %v4206 = vadd.f32 %v2923, %v4205
  %v4207 = vpop.f32.mrf.mxu0
  %v4208 = vadd.f32 %v2927, %v4207
  %4209 = vmatprep.mubr.bf16.mxu0 %v2915
  %4210 = vmatmul.mubr.bf16.gmra.mxu0 %v2914
  %v4211 = vpop.f32.mrf.mxu0
  %v4212 = vadd.f32 %v2923, %v4211
  %v4213 = vpop.f32.mrf.mxu0
  %v4214 = vadd.f32 %v2927, %v4213
  %v4215 = vpop.f32.mrf.mxu0
  %v4216 = vadd.f32 %v2923, %v4215
  %v4217 = vpop.f32.mrf.mxu0
  %v4218 = vadd.f32 %v2927, %v4217
  %4219 = vdwg.mxu0
  %4220 = vmatprep.subr.bf16.mxu0 %v3821
  %4221 = vmatpush1.bf16.msra.mxu0 %v3820
  %4222 = vmatprep.subr.bf16.mxu0 %v3814
  %4223 = vmatpush1.bf16.msra.mxu0 %v3813
  %4224 = vmatprep.subr.bf16.mxu0 %v3807
  %4225 = vmatpush1.bf16.msra.mxu0 %v3806
  %4226 = vmatprep.subr.bf16.mxu0 %v3800
  %4227 = vmatpush1.bf16.msra.mxu0 %v3799
  %4228 = vmatprep.subr.bf16.mxu0 %v3793
  %4229 = vmatpush1.bf16.msra.mxu0 %v3792
  %4230 = vmatprep.subr.bf16.mxu0 %v3786
  %4231 = vmatpush1.bf16.msra.mxu0 %v3785
  %4232 = vmatprep.subr.bf16.mxu0 %v3779
  %4233 = vmatpush1.bf16.msra.mxu0 %v3778
  %4234 = vmatprep.subr.bf16.mxu0 %v3772
  %4235 = vmatpush1.bf16.msra.mxu0 %v3771
  %4236 = vmatprep.subr.bf16.mxu0 %v3877
  %4237 = vmatpush2.bf16.msra.mxu0 %v3876
  %4238 = vmatprep.subr.bf16.mxu0 %v3870
  %4239 = vmatpush2.bf16.msra.mxu0 %v3869
  %4240 = vmatprep.subr.bf16.mxu0 %v3863
  %4241 = vmatpush2.bf16.msra.mxu0 %v3862
  %4242 = vmatprep.subr.bf16.mxu0 %v3856
  %4243 = vmatpush2.bf16.msra.mxu0 %v3855
  %4244 = vmatprep.subr.bf16.mxu0 %v3849
  %4245 = vmatpush2.bf16.msra.mxu0 %v3848
  %4246 = vmatprep.subr.bf16.mxu0 %v3842
  %4247 = vmatpush2.bf16.msra.mxu0 %v3841
  %4248 = vmatprep.subr.bf16.mxu0 %v3835
  %4249 = vmatpush2.bf16.msra.mxu0 %v3834
  %4250 = vmatprep.subr.bf16.mxu0 %v3828
  %4251 = vmatpush2.bf16.msra.mxu0 %v3827
  %4252 = vmatprep.mubr.bf16.mxu0 %v2889
  %4253 = vmatmul.mubr.bf16.gmra.mxu0 %v2888
  %v4254 = vpop.f32.mrf.mxu0
  %v4255 = vadd.f32 %v4142, %v4254
  %v4256 = vpop.f32.mrf.mxu0
  %v4257 = vadd.f32 %v4144, %v4256
  %v4258 = vpop.f32.mrf.mxu0
  %v4259 = vadd.f32 %v4146, %v4258
  %v4260 = vpop.f32.mrf.mxu0
  %v4261 = vadd.f32 %v4148, %v4260
  %4262 = vmatprep.mubr.bf16.mxu0 %v2893
  %4263 = vmatmul.mubr.bf16.gmra.mxu0 %v2892
  %v4264 = vpop.f32.mrf.mxu0
  %v4265 = vadd.f32 %v4152, %v4264
  %v4266 = vpop.f32.mrf.mxu0
  %v4267 = vadd.f32 %v4154, %v4266
  %v4268 = vpop.f32.mrf.mxu0
  %v4269 = vadd.f32 %v4156, %v4268
  %v4270 = vpop.f32.mrf.mxu0
  %v4271 = vadd.f32 %v4158, %v4270
  %4272 = vmatprep.mubr.bf16.mxu0 %v2897
  %4273 = vmatmul.mubr.bf16.gmra.mxu0 %v2896
  %v4274 = vpop.f32.mrf.mxu0
  %v4275 = vadd.f32 %v4162, %v4274
  %v4276 = vpop.f32.mrf.mxu0
  %v4277 = vadd.f32 %v4164, %v4276
  %v4278 = vpop.f32.mrf.mxu0
  %v4279 = vadd.f32 %v4166, %v4278
  %v4280 = vpop.f32.mrf.mxu0
  %v4281 = vadd.f32 %v4168, %v4280
  %4282 = vmatprep.mubr.bf16.mxu0 %v2901
  %4283 = vmatmul.mubr.bf16.gmra.mxu0 %v2900
  %v4284 = vpop.f32.mrf.mxu0
  %v4285 = vadd.f32 %v4172, %v4284
  %v4286 = vpop.f32.mrf.mxu0
  %v4287 = vadd.f32 %v4174, %v4286
  %v4288 = vpop.f32.mrf.mxu0
  %v4289 = vadd.f32 %v4176, %v4288
  %v4290 = vpop.f32.mrf.mxu0
  %v4291 = vadd.f32 %v4178, %v4290
  %4292 = vmatprep.mubr.bf16.mxu0 %v2905
  %4293 = vmatmul.mubr.bf16.gmra.mxu0 %v2904
  %v4294 = vpop.f32.mrf.mxu0
  %v4295 = vadd.f32 %v4182, %v4294
  %v4296 = vpop.f32.mrf.mxu0
  %v4297 = vadd.f32 %v4184, %v4296
  %v4298 = vpop.f32.mrf.mxu0
  %v4299 = vadd.f32 %v4186, %v4298
  %v4300 = vpop.f32.mrf.mxu0
  %v4301 = vadd.f32 %v4188, %v4300
  %4302 = vmatprep.mubr.bf16.mxu0 %v2909
  %4303 = vmatmul.mubr.bf16.gmra.mxu0 %v2908
  %v4304 = vpop.f32.mrf.mxu0
  %v4305 = vadd.f32 %v4192, %v4304
  %v4306 = vpop.f32.mrf.mxu0
  %v4307 = vadd.f32 %v4194, %v4306
  %v4308 = vpop.f32.mrf.mxu0
  %v4309 = vadd.f32 %v4196, %v4308
  %v4310 = vpop.f32.mrf.mxu0
  %v4311 = vadd.f32 %v4198, %v4310
  %4312 = vmatprep.mubr.bf16.mxu0 %v2913
  %4313 = vmatmul.mubr.bf16.gmra.mxu0 %v2912
  %v4314 = vpop.f32.mrf.mxu0
  %v4315 = vadd.f32 %v4202, %v4314
  %v4316 = vpop.f32.mrf.mxu0
  %v4317 = vadd.f32 %v4204, %v4316
  %v4318 = vpop.f32.mrf.mxu0
  %v4319 = vadd.f32 %v4206, %v4318
  %v4320 = vpop.f32.mrf.mxu0
  %v4321 = vadd.f32 %v4208, %v4320
  %4322 = vmatprep.mubr.bf16.mxu0 %v2917
  %4323 = vmatmul.mubr.bf16.gmra.mxu0 %v2916
  %v4324 = vpop.f32.mrf.mxu0
  %v4325 = vadd.f32 %v4212, %v4324
  %v4326 = vpop.f32.mrf.mxu0
  %v4327 = vadd.f32 %v4214, %v4326
  %v4328 = vpop.f32.mrf.mxu0
  %v4329 = vadd.f32 %v4216, %v4328
  %v4330 = vpop.f32.mrf.mxu0
  %v4331 = vadd.f32 %v4218, %v4330
  %4332 = vdwg.mxu0
  %4333 = vmatprep.subr.bf16.mxu0 %v3711
  %4334 = vmatpush1.bf16.msra.mxu0 %v3710
  %4335 = vmatprep.subr.bf16.mxu0 %v3704
  %4336 = vmatpush1.bf16.msra.mxu0 %v3703
  %4337 = vmatprep.subr.bf16.mxu0 %v3697
  %4338 = vmatpush1.bf16.msra.mxu0 %v3696
  %4339 = vmatprep.subr.bf16.mxu0 %v3690
  %4340 = vmatpush1.bf16.msra.mxu0 %v3689
  %4341 = vmatprep.subr.bf16.mxu0 %v3683
  %4342 = vmatpush1.bf16.msra.mxu0 %v3682
  %4343 = vmatprep.subr.bf16.mxu0 %v3676
  %4344 = vmatpush1.bf16.msra.mxu0 %v3675
  %4345 = vmatprep.subr.bf16.mxu0 %v3669
  %4346 = vmatpush1.bf16.msra.mxu0 %v3668
  %4347 = vmatprep.subr.bf16.mxu0 %v3662
  %4348 = vmatpush1.bf16.msra.mxu0 %v3661
  %4349 = vmatprep.subr.bf16.mxu0 %v3767
  %4350 = vmatpush2.bf16.msra.mxu0 %v3766
  %4351 = vmatprep.subr.bf16.mxu0 %v3760
  %4352 = vmatpush2.bf16.msra.mxu0 %v3759
  %4353 = vmatprep.subr.bf16.mxu0 %v3753
  %4354 = vmatpush2.bf16.msra.mxu0 %v3752
  %4355 = vmatprep.subr.bf16.mxu0 %v3746
  %4356 = vmatpush2.bf16.msra.mxu0 %v3745
  %4357 = vmatprep.subr.bf16.mxu0 %v3739
  %4358 = vmatpush2.bf16.msra.mxu0 %v3738
  %4359 = vmatprep.subr.bf16.mxu0 %v3732
  %4360 = vmatpush2.bf16.msra.mxu0 %v3731
  %4361 = vmatprep.subr.bf16.mxu0 %v3725
  %4362 = vmatpush2.bf16.msra.mxu0 %v3724
  %4363 = vmatprep.subr.bf16.mxu0 %v3718
  %4364 = vmatpush2.bf16.msra.mxu0 %v3717
  %4365 = vmatprep.mubr.bf16.mxu0 %v2887
  %4366 = vmatmul.mubr.bf16.gmra.mxu0 %v2886
  %v4367 = vpop.f32.mrf.mxu0
  %v4368 = vadd.f32 %v2931, %v4367
  %v4369 = vpop.f32.mrf.mxu0
  %v4370 = vadd.f32 %v2935, %v4369
  %v4371 = vpop.f32.mrf.mxu0
  %v4372 = vadd.f32 %v2931, %v4371
  %v4373 = vpop.f32.mrf.mxu0
  %v4374 = vadd.f32 %v2935, %v4373
  %4375 = vmatprep.mubr.bf16.mxu0 %v2891
  %4376 = vmatmul.mubr.bf16.gmra.mxu0 %v2890
  %v4377 = vpop.f32.mrf.mxu0
  %v4378 = vadd.f32 %v2931, %v4377
  %v4379 = vpop.f32.mrf.mxu0
  %v4380 = vadd.f32 %v2935, %v4379
  %v4381 = vpop.f32.mrf.mxu0
  %v4382 = vadd.f32 %v2931, %v4381
  %v4383 = vpop.f32.mrf.mxu0
  %v4384 = vadd.f32 %v2935, %v4383
  %4385 = vmatprep.mubr.bf16.mxu0 %v2895
  %4386 = vmatmul.mubr.bf16.gmra.mxu0 %v2894
  %v4387 = vpop.f32.mrf.mxu0
  %v4388 = vadd.f32 %v2931, %v4387
  %v4389 = vpop.f32.mrf.mxu0
  %v4390 = vadd.f32 %v2935, %v4389
  %v4391 = vpop.f32.mrf.mxu0
  %v4392 = vadd.f32 %v2931, %v4391
  %v4393 = vpop.f32.mrf.mxu0
  %v4394 = vadd.f32 %v2935, %v4393
  %4395 = vmatprep.mubr.bf16.mxu0 %v2899
  %4396 = vmatmul.mubr.bf16.gmra.mxu0 %v2898
  %v4397 = vpop.f32.mrf.mxu0
  %v4398 = vadd.f32 %v2931, %v4397
  %v4399 = vpop.f32.mrf.mxu0
  %v4400 = vadd.f32 %v2935, %v4399
  %v4401 = vpop.f32.mrf.mxu0
  %v4402 = vadd.f32 %v2931, %v4401
  %v4403 = vpop.f32.mrf.mxu0
  %v4404 = vadd.f32 %v2935, %v4403
  %4405 = vmatprep.mubr.bf16.mxu0 %v2903
  %4406 = vmatmul.mubr.bf16.gmra.mxu0 %v2902
  %v4407 = vpop.f32.mrf.mxu0
  %v4408 = vadd.f32 %v2931, %v4407
  %v4409 = vpop.f32.mrf.mxu0
  %v4410 = vadd.f32 %v2935, %v4409
  %v4411 = vpop.f32.mrf.mxu0
  %v4412 = vadd.f32 %v2931, %v4411
  %v4413 = vpop.f32.mrf.mxu0
  %v4414 = vadd.f32 %v2935, %v4413
  %4415 = vmatprep.mubr.bf16.mxu0 %v2907
  %4416 = vmatmul.mubr.bf16.gmra.mxu0 %v2906
  %v4417 = vpop.f32.mrf.mxu0
  %v4418 = vadd.f32 %v2931, %v4417
  %v4419 = vpop.f32.mrf.mxu0
  %v4420 = vadd.f32 %v2935, %v4419
  %v4421 = vpop.f32.mrf.mxu0
  %v4422 = vadd.f32 %v2931, %v4421
  %v4423 = vpop.f32.mrf.mxu0
  %v4424 = vadd.f32 %v2935, %v4423
  %4425 = vmatprep.mubr.bf16.mxu0 %v2911
  %4426 = vmatmul.mubr.bf16.gmra.mxu0 %v2910
  %v4427 = vpop.f32.mrf.mxu0
  %v4428 = vadd.f32 %v2931, %v4427
  %v4429 = vpop.f32.mrf.mxu0
  %v4430 = vadd.f32 %v2935, %v4429
  %v4431 = vpop.f32.mrf.mxu0
  %v4432 = vadd.f32 %v2931, %v4431
  %v4433 = vpop.f32.mrf.mxu0
  %v4434 = vadd.f32 %v2935, %v4433
  %4435 = vmatprep.mubr.bf16.mxu0 %v2915
  %4436 = vmatmul.mubr.bf16.gmra.mxu0 %v2914
  %v4437 = vpop.f32.mrf.mxu0
  %v4438 = vadd.f32 %v2931, %v4437
  %v4439 = vpop.f32.mrf.mxu0
  %v4440 = vadd.f32 %v2935, %v4439
  %v4441 = vpop.f32.mrf.mxu0
  %v4442 = vadd.f32 %v2931, %v4441
  %v4443 = vpop.f32.mrf.mxu0
  %v4444 = vadd.f32 %v2935, %v4443
  %4445 = vdwg.mxu0
  %4446 = vmatprep.subr.bf16.mxu0 %v3823
  %4447 = vmatpush1.bf16.msra.mxu0 %v3822
  %4448 = vmatprep.subr.bf16.mxu0 %v3816
  %4449 = vmatpush1.bf16.msra.mxu0 %v3815
  %4450 = vmatprep.subr.bf16.mxu0 %v3809
  %4451 = vmatpush1.bf16.msra.mxu0 %v3808
  %4452 = vmatprep.subr.bf16.mxu0 %v3802
  %4453 = vmatpush1.bf16.msra.mxu0 %v3801
  %4454 = vmatprep.subr.bf16.mxu0 %v3795
  %4455 = vmatpush1.bf16.msra.mxu0 %v3794
  %4456 = vmatprep.subr.bf16.mxu0 %v3788
  %4457 = vmatpush1.bf16.msra.mxu0 %v3787
  %4458 = vmatprep.subr.bf16.mxu0 %v3781
  %4459 = vmatpush1.bf16.msra.mxu0 %v3780
  %4460 = vmatprep.subr.bf16.mxu0 %v3774
  %4461 = vmatpush1.bf16.msra.mxu0 %v3773
  %4462 = vmatprep.subr.bf16.mxu0 %v3879
  %4463 = vmatpush2.bf16.msra.mxu0 %v3878
  %4464 = vmatprep.subr.bf16.mxu0 %v3872
  %4465 = vmatpush2.bf16.msra.mxu0 %v3871
  %4466 = vmatprep.subr.bf16.mxu0 %v3865
  %4467 = vmatpush2.bf16.msra.mxu0 %v3864
  %4468 = vmatprep.subr.bf16.mxu0 %v3858
  %4469 = vmatpush2.bf16.msra.mxu0 %v3857
  %4470 = vmatprep.subr.bf16.mxu0 %v3851
  %4471 = vmatpush2.bf16.msra.mxu0 %v3850
  %4472 = vmatprep.subr.bf16.mxu0 %v3844
  %4473 = vmatpush2.bf16.msra.mxu0 %v3843
  %4474 = vmatprep.subr.bf16.mxu0 %v3837
  %4475 = vmatpush2.bf16.msra.mxu0 %v3836
  %4476 = vmatprep.subr.bf16.mxu0 %v3830
  %4477 = vmatpush2.bf16.msra.mxu0 %v3829
  %4478 = vmatprep.mubr.bf16.mxu0 %v2889
  %4479 = vmatmul.mubr.bf16.gmra.mxu0 %v2888
  %v4480 = vpop.f32.mrf.mxu0
  %v4481 = vadd.f32 %v4368, %v4480
  %v4482 = vpop.f32.mrf.mxu0
  %v4483 = vadd.f32 %v4370, %v4482
  %v4484 = vpop.f32.mrf.mxu0
  %v4485 = vadd.f32 %v4372, %v4484
  %v4486 = vpop.f32.mrf.mxu0
  %v4487 = vadd.f32 %v4374, %v4486
  %4488 = vmatprep.mubr.bf16.mxu0 %v2893
  %4489 = vmatmul.mubr.bf16.gmra.mxu0 %v2892
  %v4490 = vpop.f32.mrf.mxu0
  %v4491 = vadd.f32 %v4378, %v4490
  %v4492 = vpop.f32.mrf.mxu0
  %v4493 = vadd.f32 %v4380, %v4492
  %v4494 = vpop.f32.mrf.mxu0
  %v4495 = vadd.f32 %v4382, %v4494
  %v4496 = vpop.f32.mrf.mxu0
  %v4497 = vadd.f32 %v4384, %v4496
  %4498 = vmatprep.mubr.bf16.mxu0 %v2897
  %4499 = vmatmul.mubr.bf16.gmra.mxu0 %v2896
  %v4500 = vpop.f32.mrf.mxu0
  %v4501 = vadd.f32 %v4388, %v4500
  %v4502 = vpop.f32.mrf.mxu0
  %v4503 = vadd.f32 %v4390, %v4502
  %v4504 = vpop.f32.mrf.mxu0
  %v4505 = vadd.f32 %v4392, %v4504
  %v4506 = vpop.f32.mrf.mxu0
  %v4507 = vadd.f32 %v4394, %v4506
  %4508 = vmatprep.mubr.bf16.mxu0 %v2901
  %4509 = vmatmul.mubr.bf16.gmra.mxu0 %v2900
  %v4510 = vpop.f32.mrf.mxu0
  %v4511 = vadd.f32 %v4398, %v4510
  %v4512 = vpop.f32.mrf.mxu0
  %v4513 = vadd.f32 %v4400, %v4512
  %v4514 = vpop.f32.mrf.mxu0
  %v4515 = vadd.f32 %v4402, %v4514
  %v4516 = vpop.f32.mrf.mxu0
  %v4517 = vadd.f32 %v4404, %v4516
  %4518 = vmatprep.mubr.bf16.mxu0 %v2905
  %4519 = vmatmul.mubr.bf16.gmra.mxu0 %v2904
  %v4520 = vpop.f32.mrf.mxu0
  %v4521 = vadd.f32 %v4408, %v4520
  %v4522 = vpop.f32.mrf.mxu0
  %v4523 = vadd.f32 %v4410, %v4522
  %v4524 = vpop.f32.mrf.mxu0
  %v4525 = vadd.f32 %v4412, %v4524
  %v4526 = vpop.f32.mrf.mxu0
  %v4527 = vadd.f32 %v4414, %v4526
  %4528 = vmatprep.mubr.bf16.mxu0 %v2909
  %4529 = vmatmul.mubr.bf16.gmra.mxu0 %v2908
  %v4530 = vpop.f32.mrf.mxu0
  %v4531 = vadd.f32 %v4418, %v4530
  %v4532 = vpop.f32.mrf.mxu0
  %v4533 = vadd.f32 %v4420, %v4532
  %v4534 = vpop.f32.mrf.mxu0
  %v4535 = vadd.f32 %v4422, %v4534
  %v4536 = vpop.f32.mrf.mxu0
  %v4537 = vadd.f32 %v4424, %v4536
  %4538 = vmatprep.mubr.bf16.mxu0 %v2913
  %4539 = vmatmul.mubr.bf16.gmra.mxu0 %v2912
  %v4540 = vpop.f32.mrf.mxu0
  %v4541 = vadd.f32 %v4428, %v4540
  %v4542 = vpop.f32.mrf.mxu0
  %v4543 = vadd.f32 %v4430, %v4542
  %v4544 = vpop.f32.mrf.mxu0
  %v4545 = vadd.f32 %v4432, %v4544
  %v4546 = vpop.f32.mrf.mxu0
  %v4547 = vadd.f32 %v4434, %v4546
  %4548 = vmatprep.mubr.bf16.mxu0 %v2917
  %4549 = vmatmul.mubr.bf16.gmra.mxu0 %v2916
  %v4550 = vpop.f32.mrf.mxu0
  %v4551 = vadd.f32 %v4438, %v4550
  %v4552 = vpop.f32.mrf.mxu0
  %v4553 = vadd.f32 %v4440, %v4552
  %v4554 = vpop.f32.mrf.mxu0
  %v4555 = vadd.f32 %v4442, %v4554
  %v4556 = vpop.f32.mrf.mxu0
  %v4557 = vadd.f32 %v4444, %v4556
  %4558 = vdwg.mxu0
  %4559 = vmatprep.subr.bf16.mxu0 %v3713
  %4560 = vmatpush1.bf16.msra.mxu0 %v3712
  %4561 = vmatprep.subr.bf16.mxu0 %v3706
  %4562 = vmatpush1.bf16.msra.mxu0 %v3705
  %4563 = vmatprep.subr.bf16.mxu0 %v3699
  %4564 = vmatpush1.bf16.msra.mxu0 %v3698
  %4565 = vmatprep.subr.bf16.mxu0 %v3692
  %4566 = vmatpush1.bf16.msra.mxu0 %v3691
  %4567 = vmatprep.subr.bf16.mxu0 %v3685
  %4568 = vmatpush1.bf16.msra.mxu0 %v3684
  %4569 = vmatprep.subr.bf16.mxu0 %v3678
  %4570 = vmatpush1.bf16.msra.mxu0 %v3677
  %4571 = vmatprep.subr.bf16.mxu0 %v3671
  %4572 = vmatpush1.bf16.msra.mxu0 %v3670
  %4573 = vmatprep.subr.bf16.mxu0 %v3664
  %4574 = vmatpush1.bf16.msra.mxu0 %v3663
  %4575 = vmatprep.subr.bf16.mxu0 %v3769
  %4576 = vmatpush2.bf16.msra.mxu0 %v3768
  %4577 = vmatprep.subr.bf16.mxu0 %v3762
  %4578 = vmatpush2.bf16.msra.mxu0 %v3761
  %4579 = vmatprep.subr.bf16.mxu0 %v3755
  %4580 = vmatpush2.bf16.msra.mxu0 %v3754
  %4581 = vmatprep.subr.bf16.mxu0 %v3748
  %4582 = vmatpush2.bf16.msra.mxu0 %v3747
  %4583 = vmatprep.subr.bf16.mxu0 %v3741
  %4584 = vmatpush2.bf16.msra.mxu0 %v3740
  %4585 = vmatprep.subr.bf16.mxu0 %v3734
  %4586 = vmatpush2.bf16.msra.mxu0 %v3733
  %4587 = vmatprep.subr.bf16.mxu0 %v3727
  %4588 = vmatpush2.bf16.msra.mxu0 %v3726
  %4589 = vmatprep.subr.bf16.mxu0 %v3720
  %4590 = vmatpush2.bf16.msra.mxu0 %v3719
  %4591 = vmatprep.mubr.bf16.mxu0 %v2887
  %4592 = vmatmul.mubr.bf16.gmra.mxu0 %v2886
  %v4593 = vpop.f32.mrf.mxu0
  %v4594 = vadd.f32 %v2939, %v4593
  %v4595 = vpop.f32.mrf.mxu0
  %v4596 = vadd.f32 %v2943, %v4595
  %v4597 = vpop.f32.mrf.mxu0
  %v4598 = vadd.f32 %v2939, %v4597
  %v4599 = vpop.f32.mrf.mxu0
  %v4600 = vadd.f32 %v2943, %v4599
  %4601 = vmatprep.mubr.bf16.mxu0 %v2891
  %4602 = vmatmul.mubr.bf16.gmra.mxu0 %v2890
  %v4603 = vpop.f32.mrf.mxu0
  %v4604 = vadd.f32 %v2939, %v4603
  %v4605 = vpop.f32.mrf.mxu0
  %v4606 = vadd.f32 %v2943, %v4605
  %v4607 = vpop.f32.mrf.mxu0
  %v4608 = vadd.f32 %v2939, %v4607
  %v4609 = vpop.f32.mrf.mxu0
  %v4610 = vadd.f32 %v2943, %v4609
  %4611 = vmatprep.mubr.bf16.mxu0 %v2895
  %4612 = vmatmul.mubr.bf16.gmra.mxu0 %v2894
  %v4613 = vpop.f32.mrf.mxu0
  %v4614 = vadd.f32 %v2939, %v4613
  %v4615 = vpop.f32.mrf.mxu0
  %v4616 = vadd.f32 %v2943, %v4615
  %v4617 = vpop.f32.mrf.mxu0
  %v4618 = vadd.f32 %v2939, %v4617
  %v4619 = vpop.f32.mrf.mxu0
  %v4620 = vadd.f32 %v2943, %v4619
  %4621 = vmatprep.mubr.bf16.mxu0 %v2899
  %4622 = vmatmul.mubr.bf16.gmra.mxu0 %v2898
  %v4623 = vpop.f32.mrf.mxu0
  %v4624 = vadd.f32 %v2939, %v4623
  %v4625 = vpop.f32.mrf.mxu0
  %v4626 = vadd.f32 %v2943, %v4625
  %v4627 = vpop.f32.mrf.mxu0
  %v4628 = vadd.f32 %v2939, %v4627
  %v4629 = vpop.f32.mrf.mxu0
  %v4630 = vadd.f32 %v2943, %v4629
  %4631 = vmatprep.mubr.bf16.mxu0 %v2903
  %4632 = vmatmul.mubr.bf16.gmra.mxu0 %v2902
  %v4633 = vpop.f32.mrf.mxu0
  %v4634 = vadd.f32 %v2939, %v4633
  %v4635 = vpop.f32.mrf.mxu0
  %v4636 = vadd.f32 %v2943, %v4635
  %v4637 = vpop.f32.mrf.mxu0
  %v4638 = vadd.f32 %v2939, %v4637
  %v4639 = vpop.f32.mrf.mxu0
  %v4640 = vadd.f32 %v2943, %v4639
  %4641 = vmatprep.mubr.bf16.mxu0 %v2907
  %4642 = vmatmul.mubr.bf16.gmra.mxu0 %v2906
  %v4643 = vpop.f32.mrf.mxu0
  %v4644 = vadd.f32 %v2939, %v4643
  %v4645 = vpop.f32.mrf.mxu0
  %v4646 = vadd.f32 %v2943, %v4645
  %v4647 = vpop.f32.mrf.mxu0
  %v4648 = vadd.f32 %v2939, %v4647
  %v4649 = vpop.f32.mrf.mxu0
  %v4650 = vadd.f32 %v2943, %v4649
  %4651 = vmatprep.mubr.bf16.mxu0 %v2911
  %4652 = vmatmul.mubr.bf16.gmra.mxu0 %v2910
  %v4653 = vpop.f32.mrf.mxu0
  %v4654 = vadd.f32 %v2939, %v4653
  %v4655 = vpop.f32.mrf.mxu0
  %v4656 = vadd.f32 %v2943, %v4655
  %v4657 = vpop.f32.mrf.mxu0
  %v4658 = vadd.f32 %v2939, %v4657
  %v4659 = vpop.f32.mrf.mxu0
  %v4660 = vadd.f32 %v2943, %v4659
  %4661 = vmatprep.mubr.bf16.mxu0 %v2915
  %4662 = vmatmul.mubr.bf16.gmra.mxu0 %v2914
  %v4663 = vpop.f32.mrf.mxu0
  %v4664 = vadd.f32 %v2939, %v4663
  %v4665 = vpop.f32.mrf.mxu0
  %v4666 = vadd.f32 %v2943, %v4665
  %v4667 = vpop.f32.mrf.mxu0
  %v4668 = vadd.f32 %v2939, %v4667
  %v4669 = vpop.f32.mrf.mxu0
  %v4670 = vadd.f32 %v2943, %v4669
  %4671 = vdwg.mxu0
  %4672 = vmatprep.subr.bf16.mxu0 %v3825
  %4673 = vmatpush1.bf16.msra.mxu0 %v3824
  %4674 = vmatprep.subr.bf16.mxu0 %v3818
  %4675 = vmatpush1.bf16.msra.mxu0 %v3817
  %4676 = vmatprep.subr.bf16.mxu0 %v3811
  %4677 = vmatpush1.bf16.msra.mxu0 %v3810
  %4678 = vmatprep.subr.bf16.mxu0 %v3804
  %4679 = vmatpush1.bf16.msra.mxu0 %v3803
  %4680 = vmatprep.subr.bf16.mxu0 %v3797
  %4681 = vmatpush1.bf16.msra.mxu0 %v3796
  %4682 = vmatprep.subr.bf16.mxu0 %v3790
  %4683 = vmatpush1.bf16.msra.mxu0 %v3789
  %4684 = vmatprep.subr.bf16.mxu0 %v3783
  %4685 = vmatpush1.bf16.msra.mxu0 %v3782
  %4686 = vmatprep.subr.bf16.mxu0 %v3776
  %4687 = vmatpush1.bf16.msra.mxu0 %v3775
  %4688 = vmatprep.subr.bf16.mxu0 %v3881
  %4689 = vmatpush2.bf16.msra.mxu0 %v3880
  %4690 = vmatprep.subr.bf16.mxu0 %v3874
  %4691 = vmatpush2.bf16.msra.mxu0 %v3873
  %4692 = vmatprep.subr.bf16.mxu0 %v3867
  %4693 = vmatpush2.bf16.msra.mxu0 %v3866
  %4694 = vmatprep.subr.bf16.mxu0 %v3860
  %4695 = vmatpush2.bf16.msra.mxu0 %v3859
  %4696 = vmatprep.subr.bf16.mxu0 %v3853
  %4697 = vmatpush2.bf16.msra.mxu0 %v3852
  %4698 = vmatprep.subr.bf16.mxu0 %v3846
  %4699 = vmatpush2.bf16.msra.mxu0 %v3845
  %4700 = vmatprep.subr.bf16.mxu0 %v3839
  %4701 = vmatpush2.bf16.msra.mxu0 %v3838
  %4702 = vmatprep.subr.bf16.mxu0 %v3832
  %4703 = vmatpush2.bf16.msra.mxu0 %v3831
  %4704 = vmatprep.mubr.bf16.mxu0 %v2889
  %4705 = vmatmul.mubr.bf16.gmra.mxu0 %v2888
  %v4706 = vpop.f32.mrf.mxu0
  %v4707 = vadd.f32 %v4594, %v4706
  %v4708 = vpop.f32.mrf.mxu0
  %v4709 = vadd.f32 %v4596, %v4708
  %v4710 = vpop.f32.mrf.mxu0
  %v4711 = vadd.f32 %v4598, %v4710
  %v4712 = vpop.f32.mrf.mxu0
  %v4713 = vadd.f32 %v4600, %v4712
  %4714 = vmatprep.mubr.bf16.mxu0 %v2893
  %4715 = vmatmul.mubr.bf16.gmra.mxu0 %v2892
  %v4716 = vpop.f32.mrf.mxu0
  %v4717 = vadd.f32 %v4604, %v4716
  %v4718 = vpop.f32.mrf.mxu0
  %v4719 = vadd.f32 %v4606, %v4718
  %v4720 = vpop.f32.mrf.mxu0
  %v4721 = vadd.f32 %v4608, %v4720
  %v4722 = vpop.f32.mrf.mxu0
  %v4723 = vadd.f32 %v4610, %v4722
  %4724 = vmatprep.mubr.bf16.mxu0 %v2897
  %4725 = vmatmul.mubr.bf16.gmra.mxu0 %v2896
  %v4726 = vpop.f32.mrf.mxu0
  %v4727 = vadd.f32 %v4614, %v4726
  %v4728 = vpop.f32.mrf.mxu0
  %v4729 = vadd.f32 %v4616, %v4728
  %v4730 = vpop.f32.mrf.mxu0
  %v4731 = vadd.f32 %v4618, %v4730
  %v4732 = vpop.f32.mrf.mxu0
  %v4733 = vadd.f32 %v4620, %v4732
  %4734 = vmatprep.mubr.bf16.mxu0 %v2901
  %4735 = vmatmul.mubr.bf16.gmra.mxu0 %v2900
  %v4736 = vpop.f32.mrf.mxu0
  %v4737 = vadd.f32 %v4624, %v4736
  %v4738 = vpop.f32.mrf.mxu0
  %v4739 = vadd.f32 %v4626, %v4738
  %v4740 = vpop.f32.mrf.mxu0
  %v4741 = vadd.f32 %v4628, %v4740
  %v4742 = vpop.f32.mrf.mxu0
  %v4743 = vadd.f32 %v4630, %v4742
  %4744 = vmatprep.mubr.bf16.mxu0 %v2905
  %4745 = vmatmul.mubr.bf16.gmra.mxu0 %v2904
  %v4746 = vpop.f32.mrf.mxu0
  %v4747 = vadd.f32 %v4634, %v4746
  %v4748 = vpop.f32.mrf.mxu0
  %v4749 = vadd.f32 %v4636, %v4748
  %v4750 = vpop.f32.mrf.mxu0
  %v4751 = vadd.f32 %v4638, %v4750
  %v4752 = vpop.f32.mrf.mxu0
  %v4753 = vadd.f32 %v4640, %v4752
  %4754 = vmatprep.mubr.bf16.mxu0 %v2909
  %4755 = vmatmul.mubr.bf16.gmra.mxu0 %v2908
  %v4756 = vpop.f32.mrf.mxu0
  %v4757 = vadd.f32 %v4644, %v4756
  %v4758 = vpop.f32.mrf.mxu0
  %v4759 = vadd.f32 %v4646, %v4758
  %v4760 = vpop.f32.mrf.mxu0
  %v4761 = vadd.f32 %v4648, %v4760
  %v4762 = vpop.f32.mrf.mxu0
  %v4763 = vadd.f32 %v4650, %v4762
  %4764 = vmatprep.mubr.bf16.mxu0 %v2913
  %4765 = vmatmul.mubr.bf16.gmra.mxu0 %v2912
  %v4766 = vpop.f32.mrf.mxu0
  %v4767 = vadd.f32 %v4654, %v4766
  %v4768 = vpop.f32.mrf.mxu0
  %v4769 = vadd.f32 %v4656, %v4768
  %v4770 = vpop.f32.mrf.mxu0
  %v4771 = vadd.f32 %v4658, %v4770
  %v4772 = vpop.f32.mrf.mxu0
  %v4773 = vadd.f32 %v4660, %v4772
  %4774 = vmatprep.mubr.bf16.mxu0 %v2917
  %4775 = vmatmul.mubr.bf16.gmra.mxu0 %v2916
  %v4776 = vpop.f32.mrf.mxu0
  %v4777 = vadd.f32 %v4664, %v4776
  %v4778 = vpop.f32.mrf.mxu0
  %v4779 = vadd.f32 %v4666, %v4778
  %v4780 = vpop.f32.mrf.mxu0
  %v4781 = vadd.f32 %v4668, %v4780
  %v4782 = vpop.f32.mrf.mxu0
  %v4783 = vadd.f32 %v4670, %v4782
  %4784 = vdwg.mxu0
  %4785 = vmatprep.subr.bf16.mxu0 0
  %4786 = vmatpush1.bf16.msra.mxu0 %v3714
  %4787 = vmatprep.subr.bf16.mxu0 0
  %4788 = vmatpush1.bf16.msra.mxu0 %v3707
  %4789 = vmatprep.subr.bf16.mxu0 0
  %4790 = vmatpush1.bf16.msra.mxu0 %v3700
  %4791 = vmatprep.subr.bf16.mxu0 0
  %4792 = vmatpush1.bf16.msra.mxu0 %v3693
  %4793 = vmatprep.subr.bf16.mxu0 0
  %4794 = vmatpush1.bf16.msra.mxu0 %v3686
  %4795 = vmatprep.subr.bf16.mxu0 0
  %4796 = vmatpush1.bf16.msra.mxu0 %v3679
  %4797 = vmatprep.subr.bf16.mxu0 0
  %4798 = vmatpush1.bf16.msra.mxu0 %v3672
  %4799 = vmatprep.subr.bf16.mxu0 0
  %4800 = vmatpush1.bf16.msra.mxu0 %v3665
  %4801 = vmatprep.subr.bf16.mxu0 0
  %4802 = vmatpush2.bf16.msra.mxu0 %v3770
  %4803 = vmatprep.subr.bf16.mxu0 0
  %4804 = vmatpush2.bf16.msra.mxu0 %v3763
  %4805 = vmatprep.subr.bf16.mxu0 0
  %4806 = vmatpush2.bf16.msra.mxu0 %v3756
  %4807 = vmatprep.subr.bf16.mxu0 0
  %4808 = vmatpush2.bf16.msra.mxu0 %v3749
  %4809 = vmatprep.subr.bf16.mxu0 0
  %4810 = vmatpush2.bf16.msra.mxu0 %v3742
  %4811 = vmatprep.subr.bf16.mxu0 0
  %4812 = vmatpush2.bf16.msra.mxu0 %v3735
  %4813 = vmatprep.subr.bf16.mxu0 0
  %4814 = vmatpush2.bf16.msra.mxu0 %v3728
  %4815 = vmatprep.subr.bf16.mxu0 0
  %4816 = vmatpush2.bf16.msra.mxu0 %v3721
  %4817 = vmatprep.mubr.bf16.mxu0 %v2887
  %4818 = vmatmul.mubr.bf16.gmra.mxu0 %v2886
  %v4819 = vpop.f32.mrf.mxu0
  %v4820 = vadd.f32 %v2947, %v4819
  %v4821 = vpop.f32.mrf.mxu0
  %v4822 = vpop.f32.mrf.mxu0
  %v4823 = vadd.f32 %v2947, %v4822
  %v4824 = vpop.f32.mrf.mxu0
  %4825 = vmatprep.mubr.bf16.mxu0 %v2891
  %4826 = vmatmul.mubr.bf16.gmra.mxu0 %v2890
  %v4827 = vpop.f32.mrf.mxu0
  %v4828 = vadd.f32 %v2947, %v4827
  %v4829 = vpop.f32.mrf.mxu0
  %v4830 = vpop.f32.mrf.mxu0
  %v4831 = vadd.f32 %v2947, %v4830
  %v4832 = vpop.f32.mrf.mxu0
  %4833 = vmatprep.mubr.bf16.mxu0 %v2895
  %4834 = vmatmul.mubr.bf16.gmra.mxu0 %v2894
  %v4835 = vpop.f32.mrf.mxu0
  %v4836 = vadd.f32 %v2947, %v4835
  %v4837 = vpop.f32.mrf.mxu0
  %v4838 = vpop.f32.mrf.mxu0
  %v4839 = vadd.f32 %v2947, %v4838
  %v4840 = vpop.f32.mrf.mxu0
  %4841 = vmatprep.mubr.bf16.mxu0 %v2899
  %4842 = vmatmul.mubr.bf16.gmra.mxu0 %v2898
  %v4843 = vpop.f32.mrf.mxu0
  %v4844 = vadd.f32 %v2947, %v4843
  %v4845 = vpop.f32.mrf.mxu0
  %v4846 = vpop.f32.mrf.mxu0
  %v4847 = vadd.f32 %v2947, %v4846
  %v4848 = vpop.f32.mrf.mxu0
  %4849 = vmatprep.mubr.bf16.mxu0 %v2903
  %4850 = vmatmul.mubr.bf16.gmra.mxu0 %v2902
  %v4851 = vpop.f32.mrf.mxu0
  %v4852 = vadd.f32 %v2947, %v4851
  %v4853 = vpop.f32.mrf.mxu0
  %v4854 = vpop.f32.mrf.mxu0
  %v4855 = vadd.f32 %v2947, %v4854
  %v4856 = vpop.f32.mrf.mxu0
  %4857 = vmatprep.mubr.bf16.mxu0 %v2907
  %4858 = vmatmul.mubr.bf16.gmra.mxu0 %v2906
  %v4859 = vpop.f32.mrf.mxu0
  %v4860 = vadd.f32 %v2947, %v4859
  %v4861 = vpop.f32.mrf.mxu0
  %v4862 = vpop.f32.mrf.mxu0
  %v4863 = vadd.f32 %v2947, %v4862
  %v4864 = vpop.f32.mrf.mxu0
  %4865 = vmatprep.mubr.bf16.mxu0 %v2911
  %4866 = vmatmul.mubr.bf16.gmra.mxu0 %v2910
  %v4867 = vpop.f32.mrf.mxu0
  %v4868 = vadd.f32 %v2947, %v4867
  %v4869 = vpop.f32.mrf.mxu0
  %v4870 = vpop.f32.mrf.mxu0
  %v4871 = vadd.f32 %v2947, %v4870
  %v4872 = vpop.f32.mrf.mxu0
  %4873 = vmatprep.mubr.bf16.mxu0 %v2915
  %4874 = vmatmul.mubr.bf16.gmra.mxu0 %v2914
  %v4875 = vpop.f32.mrf.mxu0
  %v4876 = vadd.f32 %v2947, %v4875
  %v4877 = vpop.f32.mrf.mxu0
  %v4878 = vpop.f32.mrf.mxu0
  %v4879 = vadd.f32 %v2947, %v4878
  %v4880 = vpop.f32.mrf.mxu0
  %4881 = vdwg.mxu0
  %4882 = vmatprep.subr.bf16.mxu0 0
  %4883 = vmatpush1.bf16.msra.mxu0 %v3826
  %4884 = vmatprep.subr.bf16.mxu0 0
  %4885 = vmatpush1.bf16.msra.mxu0 %v3819
  %4886 = vmatprep.subr.bf16.mxu0 0
  %4887 = vmatpush1.bf16.msra.mxu0 %v3812
  %4888 = vmatprep.subr.bf16.mxu0 0
  %4889 = vmatpush1.bf16.msra.mxu0 %v3805
  %4890 = vmatprep.subr.bf16.mxu0 0
  %4891 = vmatpush1.bf16.msra.mxu0 %v3798
  %4892 = vmatprep.subr.bf16.mxu0 0
  %4893 = vmatpush1.bf16.msra.mxu0 %v3791
  %4894 = vmatprep.subr.bf16.mxu0 0
  %4895 = vmatpush1.bf16.msra.mxu0 %v3784
  %4896 = vmatprep.subr.bf16.mxu0 0
  %4897 = vmatpush1.bf16.msra.mxu0 %v3777
  %4898 = vmatprep.subr.bf16.mxu0 0
  %4899 = vmatpush2.bf16.msra.mxu0 %v3882
  %4900 = vmatprep.subr.bf16.mxu0 0
  %4901 = vmatpush2.bf16.msra.mxu0 %v3875
  %4902 = vmatprep.subr.bf16.mxu0 0
  %4903 = vmatpush2.bf16.msra.mxu0 %v3868
  %4904 = vmatprep.subr.bf16.mxu0 0
  %4905 = vmatpush2.bf16.msra.mxu0 %v3861
  %4906 = vmatprep.subr.bf16.mxu0 0
  %4907 = vmatpush2.bf16.msra.mxu0 %v3854
  %4908 = vmatprep.subr.bf16.mxu0 0
  %4909 = vmatpush2.bf16.msra.mxu0 %v3847
  %4910 = vmatprep.subr.bf16.mxu0 0
  %4911 = vmatpush2.bf16.msra.mxu0 %v3840
  %4912 = vmatprep.subr.bf16.mxu0 0
  %4913 = vmatpush2.bf16.msra.mxu0 %v3833
  %4914 = vmatprep.mubr.bf16.mxu0 %v2889
  %4915 = vmatmul.mubr.bf16.gmra.mxu0 %v2888
  %v4916 = vpop.f32.mrf.mxu0
  %v4917 = vadd.f32 %v4820, %v4916
  %v4918 = vpop.f32.mrf.mxu0
  %v4919 = vpop.f32.mrf.mxu0
  %v4920 = vadd.f32 %v4823, %v4919
  %v4921 = vpop.f32.mrf.mxu0
  %4922 = vmatprep.mubr.bf16.mxu0 %v2893
  %4923 = vmatmul.mubr.bf16.gmra.mxu0 %v2892
  %v4924 = vpop.f32.mrf.mxu0
  %v4925 = vadd.f32 %v4828, %v4924
  %v4926 = vpop.f32.mrf.mxu0
  %v4927 = vpop.f32.mrf.mxu0
  %v4928 = vadd.f32 %v4831, %v4927
  %v4929 = vpop.f32.mrf.mxu0
  %4930 = vmatprep.mubr.bf16.mxu0 %v2897
  %4931 = vmatmul.mubr.bf16.gmra.mxu0 %v2896
  %v4932 = vpop.f32.mrf.mxu0
  %v4933 = vadd.f32 %v4836, %v4932
  %v4934 = vpop.f32.mrf.mxu0
  %v4935 = vpop.f32.mrf.mxu0
  %v4936 = vadd.f32 %v4839, %v4935
  %v4937 = vpop.f32.mrf.mxu0
  %4938 = vmatprep.mubr.bf16.mxu0 %v2901
  %4939 = vmatmul.mubr.bf16.gmra.mxu0 %v2900
  %v4940 = vpop.f32.mrf.mxu0
  %v4941 = vadd.f32 %v4844, %v4940
  %v4942 = vpop.f32.mrf.mxu0
  %v4943 = vpop.f32.mrf.mxu0
  %v4944 = vadd.f32 %v4847, %v4943
  %v4945 = vpop.f32.mrf.mxu0
  %4946 = vmatprep.mubr.bf16.mxu0 %v2905
  %4947 = vmatmul.mubr.bf16.gmra.mxu0 %v2904
  %v4948 = vpop.f32.mrf.mxu0
  %v4949 = vadd.f32 %v4852, %v4948
  %v4950 = vpop.f32.mrf.mxu0
  %v4951 = vpop.f32.mrf.mxu0
  %v4952 = vadd.f32 %v4855, %v4951
  %v4953 = vpop.f32.mrf.mxu0
  %4954 = vmatprep.mubr.bf16.mxu0 %v2909
  %4955 = vmatmul.mubr.bf16.gmra.mxu0 %v2908
  %v4956 = vpop.f32.mrf.mxu0
  %v4957 = vadd.f32 %v4860, %v4956
  %v4958 = vpop.f32.mrf.mxu0
  %v4959 = vpop.f32.mrf.mxu0
  %v4960 = vadd.f32 %v4863, %v4959
  %v4961 = vpop.f32.mrf.mxu0
  %4962 = vmatprep.mubr.bf16.mxu0 %v2913
  %4963 = vmatmul.mubr.bf16.gmra.mxu0 %v2912
  %v4964 = vpop.f32.mrf.mxu0
  %v4965 = vadd.f32 %v4868, %v4964
  %v4966 = vpop.f32.mrf.mxu0
  %v4967 = vpop.f32.mrf.mxu0
  %v4968 = vadd.f32 %v4871, %v4967
  %v4969 = vpop.f32.mrf.mxu0
  %4970 = vmatprep.mubr.bf16.mxu0 %v2917
  %4971 = vmatmul.mubr.bf16.gmra.mxu0 %v2916
  %v4972 = vpop.f32.mrf.mxu0
  %v4973 = vadd.f32 %v4876, %v4972
  %v4974 = vpop.f32.mrf.mxu0
  %v4975 = vpop.f32.mrf.mxu0
  %v4976 = vadd.f32 %v4879, %v4975
  %v4977 = vpop.f32.mrf.mxu0
  %4978 = vdwg.mxu0
  %4979 = vst [vmem:[%s9] sm:$0xff] %v4255
  %4980 = vst [vmem:[%s9 + $0x8] sm:$0xff] %v4257
  %4981 = vst [vmem:[%s9 + $0x10] sm:$0xff] %v4481
  %4982 = vst [vmem:[%s9 + $0x18] sm:$0xff] %v4483
  %4983 = vst [vmem:[%s9 + $0x20] sm:$0xff] %v4707
  %4984 = vst [vmem:[%s9 + $0x28] sm:$0xff] %v4709
  %vm4985 = vcmask 130048
  %4986 = vst.msk [vmem:[%s9 + $0x30] sm:$0xff] %vm4985, %v4917
  %4987 = vst [vmem:[%s9 + $0x38] sm:$0xff] %v4259
  %4988 = vst [vmem:[%s9 + $0x40] sm:$0xff] %v4261
  %4989 = vst [vmem:[%s9 + $0x48] sm:$0xff] %v4485
  %4990 = vst [vmem:[%s9 + $0x50] sm:$0xff] %v4487
  %4991 = vst [vmem:[%s9 + $0x58] sm:$0xff] %v4711
  %4992 = vst [vmem:[%s9 + $0x60] sm:$0xff] %v4713
  %4993 = vst.msk [vmem:[%s9 + $0x68] sm:$0xff] %vm4985, %v4920
  %4994 = vst [vmem:[%s9 + $0x70] sm:$0xff] %v4265
  %4995 = vst [vmem:[%s9 + $0x78] sm:$0xff] %v4267
  %4996 = vst [vmem:[%s9 + $0x80] sm:$0xff] %v4491
  %4997 = vst [vmem:[%s9 + $0x88] sm:$0xff] %v4493
  %4998 = vst [vmem:[%s9 + $0x90] sm:$0xff] %v4717
  %4999 = vst [vmem:[%s9 + $0x98] sm:$0xff] %v4719
  %5000 = vst.msk [vmem:[%s9 + $0xa0] sm:$0xff] %vm4985, %v4925
  %5001 = vst [vmem:[%s9 + $0xa8] sm:$0xff] %v4269
  %5002 = vst [vmem:[%s9 + $0xb0] sm:$0xff] %v4271
  %5003 = vst [vmem:[%s9 + $0xb8] sm:$0xff] %v4495
  %5004 = vst [vmem:[%s9 + $0xc0] sm:$0xff] %v4497
  %5005 = vst [vmem:[%s9 + $0xc8] sm:$0xff] %v4721
  %5006 = vst [vmem:[%s9 + $0xd0] sm:$0xff] %v4723
  %5007 = vst.msk [vmem:[%s9 + $0xd8] sm:$0xff] %vm4985, %v4928
  %5008 = vst [vmem:[%s9 + $0xe0] sm:$0xff] %v4275
  %5009 = vst [vmem:[%s9 + $0xe8] sm:$0xff] %v4277
  %5010 = vst [vmem:[%s9 + $0xf0] sm:$0xff] %v4501
  %5011 = vst [vmem:[%s9 + $0xf8] sm:$0xff] %v4503
  %5012 = vst [vmem:[%s9 + $0x100] sm:$0xff] %v4727
  %5013 = vst [vmem:[%s9 + $0x108] sm:$0xff] %v4729
  %5014 = vst.msk [vmem:[%s9 + $0x110] sm:$0xff] %vm4985, %v4933
  %5015 = vst [vmem:[%s9 + $0x118] sm:$0xff] %v4279
  %5016 = vst [vmem:[%s9 + $0x120] sm:$0xff] %v4281
  %5017 = vst [vmem:[%s9 + $0x128] sm:$0xff] %v4505
  %5018 = vst [vmem:[%s9 + $0x130] sm:$0xff] %v4507
  %5019 = vst [vmem:[%s9 + $0x138] sm:$0xff] %v4731
  %5020 = vst [vmem:[%s9 + $0x140] sm:$0xff] %v4733
  %5021 = vst.msk [vmem:[%s9 + $0x148] sm:$0xff] %vm4985, %v4936
  %5022 = vst [vmem:[%s9 + $0x150] sm:$0xff] %v4285
  %5023 = vst [vmem:[%s9 + $0x158] sm:$0xff] %v4287
  %5024 = vst [vmem:[%s9 + $0x160] sm:$0xff] %v4511
  %5025 = vst [vmem:[%s9 + $0x168] sm:$0xff] %v4513
  %5026 = vst [vmem:[%s9 + $0x170] sm:$0xff] %v4737
  %5027 = vst [vmem:[%s9 + $0x178] sm:$0xff] %v4739
  %5028 = vst.msk [vmem:[%s9 + $0x180] sm:$0xff] %vm4985, %v4941
  %5029 = vst [vmem:[%s9 + $0x188] sm:$0xff] %v4289
  %5030 = vst [vmem:[%s9 + $0x190] sm:$0xff] %v4291
  %5031 = vst [vmem:[%s9 + $0x198] sm:$0xff] %v4515
  %5032 = vst [vmem:[%s9 + $0x1a0] sm:$0xff] %v4517
  %5033 = vst [vmem:[%s9 + $0x1a8] sm:$0xff] %v4741
  %5034 = vst [vmem:[%s9 + $0x1b0] sm:$0xff] %v4743
  %5035 = vst.msk [vmem:[%s9 + $0x1b8] sm:$0xff] %vm4985, %v4944
  %5036 = vst [vmem:[%s9 + $0x1c0] sm:$0xff] %v4295
  %5037 = vst [vmem:[%s9 + $0x1c8] sm:$0xff] %v4297
  %5038 = vst [vmem:[%s9 + $0x1d0] sm:$0xff] %v4521
  %5039 = vst [vmem:[%s9 + $0x1d8] sm:$0xff] %v4523
  %5040 = vst [vmem:[%s9 + $0x1e0] sm:$0xff] %v4747
  %5041 = vst [vmem:[%s9 + $0x1e8] sm:$0xff] %v4749
  %5042 = vst.msk [vmem:[%s9 + $0x1f0] sm:$0xff] %vm4985, %v4949
  %5043 = vst [vmem:[%s9 + $0x1f8] sm:$0xff] %v4299
  %5044 = vst [vmem:[%s9 + $0x200] sm:$0xff] %v4301
  %5045 = vst [vmem:[%s9 + $0x208] sm:$0xff] %v4525
  %5046 = vst [vmem:[%s9 + $0x210] sm:$0xff] %v4527
  %5047 = vst [vmem:[%s9 + $0x218] sm:$0xff] %v4751
  %5048 = vst [vmem:[%s9 + $0x220] sm:$0xff] %v4753
  %5049 = vst.msk [vmem:[%s9 + $0x228] sm:$0xff] %vm4985, %v4952
  %5050 = vst [vmem:[%s9 + $0x230] sm:$0xff] %v4305
  %5051 = vst [vmem:[%s9 + $0x238] sm:$0xff] %v4307
  %5052 = vst [vmem:[%s9 + $0x240] sm:$0xff] %v4531
  %5053 = vst [vmem:[%s9 + $0x248] sm:$0xff] %v4533
  %5054 = vst [vmem:[%s9 + $0x250] sm:$0xff] %v4757
  %5055 = vst [vmem:[%s9 + $0x258] sm:$0xff] %v4759
  %5056 = vst.msk [vmem:[%s9 + $0x260] sm:$0xff] %vm4985, %v4957
  %5057 = vst [vmem:[%s9 + $0x268] sm:$0xff] %v4309
  %5058 = vst [vmem:[%s9 + $0x270] sm:$0xff] %v4311
  %5059 = vst [vmem:[%s9 + $0x278] sm:$0xff] %v4535
  %5060 = vst [vmem:[%s9 + $0x280] sm:$0xff] %v4537
  %5061 = vst [vmem:[%s9 + $0x288] sm:$0xff] %v4761
  %5062 = vst [vmem:[%s9 + $0x290] sm:$0xff] %v4763
  %5063 = vst.msk [vmem:[%s9 + $0x298] sm:$0xff] %vm4985, %v4960
  %5064 = vst [vmem:[%s9 + $0x2a0] sm:$0xff] %v4315
  %5065 = vst [vmem:[%s9 + $0x2a8] sm:$0xff] %v4317
  %5066 = vst [vmem:[%s9 + $0x2b0] sm:$0xff] %v4541
  %5067 = vst [vmem:[%s9 + $0x2b8] sm:$0xff] %v4543
  %5068 = vst [vmem:[%s9 + $0x2c0] sm:$0xff] %v4767
  %5069 = vst [vmem:[%s9 + $0x2c8] sm:$0xff] %v4769
  %5070 = vst.msk [vmem:[%s9 + $0x2d0] sm:$0xff] %vm4985, %v4965
  %5071 = vst [vmem:[%s9 + $0x2d8] sm:$0xff] %v4319
  %5072 = vst [vmem:[%s9 + $0x2e0] sm:$0xff] %v4321
  %5073 = vst [vmem:[%s9 + $0x2e8] sm:$0xff] %v4545
  %5074 = vst [vmem:[%s9 + $0x2f0] sm:$0xff] %v4547
  %5075 = vst [vmem:[%s9 + $0x2f8] sm:$0xff] %v4771
  %5076 = vst [vmem:[%s9 + $0x300] sm:$0xff] %v4773
  %5077 = vst.msk [vmem:[%s9 + $0x308] sm:$0xff] %vm4985, %v4968
  %5078 = vst [vmem:[%s9 + $0x310] sm:$0xff] %v4325
  %5079 = vst [vmem:[%s9 + $0x318] sm:$0xff] %v4327
  %5080 = vst [vmem:[%s9 + $0x320] sm:$0xff] %v4551
  %5081 = vst [vmem:[%s9 + $0x328] sm:$0xff] %v4553
  %5082 = vst [vmem:[%s9 + $0x330] sm:$0xff] %v4777
  %5083 = vst [vmem:[%s9 + $0x338] sm:$0xff] %v4779
  %5084 = vst.msk [vmem:[%s9 + $0x340] sm:$0xff] %vm4985, %v4973
  %5085 = vst [vmem:[%s9 + $0x348] sm:$0xff] %v4329
  %5086 = vst [vmem:[%s9 + $0x350] sm:$0xff] %v4331
  %5087 = vst [vmem:[%s9 + $0x358] sm:$0xff] %v4555
  %5088 = vst [vmem:[%s9 + $0x360] sm:$0xff] %v4557
  %5089 = vst [vmem:[%s9 + $0x368] sm:$0xff] %v4781
  %5090 = vst [vmem:[%s9 + $0x370] sm:$0xff] %v4783
  %5091 = vst.msk [vmem:[%s9 + $0x378] sm:$0xff] %vm4985, %v4976
  // Predicated region
  $region38: #{decoder_forward.1} parent=0 // pred_check
    _
  $region39: #{decoder_forward.1} parent=0 // pred_check_branch
    %5093 = sbr.rel (0) target = $region41
  $region40: #{decoder_forward.1} parent=0 // pred_region
    _
  $region41: #{decoder_forward.1} parent=0 // pred_fallthru
    _
  // Predicated region
  $region42: #{decoder_forward.1} parent=0 // pred_check
    _
  $region43: #{decoder_forward.1} parent=0 // pred_check_branch
    %5095 = sbr.rel (0) target = $region45
  $region44: #{decoder_forward.1} parent=0 // pred_region
    _
  $region45: #{decoder_forward.1} parent=0 // pred_fallthru
    _

</llo_original>
